<compile_context>
chip_gen: v7x
topology: tpu7x:2x2x1
jax: 0.10.0
libtpu: 0.0.40
codegen_flags: <defaults>
</compile_context>

<pallas_src>
import math
import jax
import jax.numpy as jnp
from jax import lax
from jax.experimental import pallas as pl
from jax.experimental.pallas import tpu as pltpu

HIDDEN_SIZE = 128
INPUT_SIZE = 28
NUM_CLASSES = 10
NUM_LAYERS = 2          # kernel hard-wires the 2-layer recurrence (matches module)
C_PAD = 128             # lane-dense padded class dim
TB = 128                # batch tile: fills the MXU M dimension


def rnn_kernel(z0_ref, whh0_ref, wih1_ref, whh1_ref, b1_ref,
               wfc_ref, bfc_ref, out_ref):
    # z0_ref : (T, TB, H)  time-major, lane-dense layer-0 pre-activation
    #          (x_t @ Wih0^T + b_ih0 + b_hh0), computed in the wrapper.
    # whh0   : (H, H) = Whh0^T      wih1: (H, H) = Wih1^T   whh1: (H, H) = Whh1^T
    # b1     : (1, H) = b_ih1 + b_hh1
    # wfc    : (H, C_PAD)           bfc : (1, C_PAD)
    # out_ref: (TB, C_PAD)
    T, TBk, H = z0_ref.shape

    def step(t, carry):
        h0, h1 = carry
        # Weight refs are read at the point of use (VMEM-resident, 3 vld
        # slots/cycle) so only the (TB, H) carries live across the unroll.
        h0 = jnp.tanh(z0_ref[t] +
                      jnp.dot(h0, whh0_ref[...],
                              preferred_element_type=jnp.float32))
        # Layer-1 pre-activation as two accumulated K=128 dots (no concat copy
        # on the serial chain); h1 on the RHS is still h1(t-1) as required.
        h1 = jnp.tanh(jnp.dot(h0, wih1_ref[...],
                              preferred_element_type=jnp.float32) +
                      jnp.dot(h1, whh1_ref[...],
                              preferred_element_type=jnp.float32) +
                      b1_ref[...])
        return h0, h1

    h0 = jnp.zeros((TBk, H), jnp.float32)
    h1 = jnp.zeros((TBk, H), jnp.float32)
    h0, h1 = lax.fori_loop(0, T, step, (h0, h1), unroll=True)

    # Final FC on the last hidden state of the top layer (lane-dense output).
    out_ref[...] = (jnp.dot(h1, wfc_ref[...],
                            preferred_element_type=jnp.float32) + bfc_ref[...])


def rnn_forward(x_btI, params):
    """x_btI: (B, T, I) float32, batch_first like the PyTorch module."""
    B, T, I = x_btI.shape
    wih0_t, b0, whh0_t, wih1_t, whh1_t, b1, wfc_p, bfc_p = params
    H = whh0_t.shape[0]

    # Pad batch to a tile multiple.  (On v7x, real batches should make
    # Bp // TB even so both TensorCores get tiles.)
    Bp = ((B + TB - 1) // TB) * TB

    # Layer-0 input projection hoisted out of the kernel: one big K=28 matmul
    # in XLA; the kernel then only sees lane-dense (..., 128) operands.
    z0 = (x_btI.reshape(B * T, I) @ wih0_t + b0).reshape(B, T, H)
    z0 = jnp.transpose(z0, (1, 0, 2))                       # (T, B, H)
    if Bp != B:
        z0 = jnp.pad(z0, ((0, 0), (0, Bp - B), (0, 0)))

    out = pl.pallas_call(
        rnn_kernel,
        out_shape=jax.ShapeDtypeStruct((Bp, C_PAD), jnp.float32),
        grid_spec=pltpu.PrefetchScalarGridSpec(
            num_scalar_prefetch=0,
            grid=(Bp // TB,),
            in_specs=[
                pl.BlockSpec((T, TB, H), lambda i: (0, i, 0)),   # z0 batch tile
                pl.BlockSpec((H, H), lambda i: (0, 0)),          # whh0^T
                pl.BlockSpec((H, H), lambda i: (0, 0)),          # wih1^T
                pl.BlockSpec((H, H), lambda i: (0, 0)),          # whh1^T
                pl.BlockSpec((1, H), lambda i: (0, 0)),          # b1
                pl.BlockSpec((H, C_PAD), lambda i: (0, 0)),      # wfc (padded)
                pl.BlockSpec((1, C_PAD), lambda i: (0, 0)),      # bfc (padded)
            ],
            out_specs=pl.BlockSpec((TB, C_PAD), lambda i: (i, 0)),
        ),
        compiler_params=pltpu.CompilerParams(
            dimension_semantics=("parallel",)),
    )(z0, whh0_t, wih1_t, whh1_t, b1, wfc_p, bfc_p)

    return out[:B, :NUM_CLASSES]


def init_params(key):
    """Deterministic init matching PyTorch nn.RNN / nn.Linear parameter shapes."""
    H, I, C = HIDDEN_SIZE, INPUT_SIZE, NUM_CLASSES
    k = 1.0 / math.sqrt(H)
    keys = jax.random.split(key, 10)

    def u(kk, shape):
        return jax.random.uniform(kk, shape, jnp.float32, minval=-k, maxval=k)

    # layer 0
    w_ih0 = u(keys[0], (H, I))
    w_hh0 = u(keys[1], (H, H))
    b_ih0 = u(keys[2], (H,))
    b_hh0 = u(keys[3], (H,))
    # layer 1
    w_ih1 = u(keys[4], (H, H))
    w_hh1 = u(keys[5], (H, H))
    b_ih1 = u(keys[6], (H,))
    b_hh1 = u(keys[7], (H,))
    # fc
    w_fc = u(keys[8], (C, H))
    b_fc = u(keys[9], (C,))

    # Pack for the kernel: pre-transposed, bias pairs folded, FC padded to
    # 128 lanes (lane-dense output stores).
    wfc_p = jnp.zeros((H, C_PAD), jnp.float32).at[:, :C].set(w_fc.T)
    bfc_p = jnp.zeros((1, C_PAD), jnp.float32).at[0, :C].set(b_fc)
    params = (
        w_ih0.T,                                        # (I, H)  used in wrapper
        (b_ih0 + b_hh0).reshape(1, H),                  # (1, H)  folded layer-0 bias
        w_hh0.T,                                        # (H, H)
        w_ih1.T,                                        # (H, H)
        w_hh1.T,                                        # (H, H)
        (b_ih1 + b_hh1).reshape(1, H),                  # (1, H)  folded layer-1 bias
        wfc_p,                                          # (H, C_PAD)
        bfc_p,                                          # (1, C_PAD)
    )
    raw = (w_ih0, w_hh0, b_ih0, b_hh0, w_ih1, w_hh1, b_ih1, b_hh1, w_fc, b_fc)
    return params, raw


def reference_forward(x_btI, raw):
    """Pure-JAX reference replicating torch.nn.RNN (tanh, 2 layers) + Linear."""
    (w_ih0, w_hh0, b_ih0, b_hh0, w_ih1, w_hh1, b_ih1, b_hh1, w_fc, b_fc) = raw
    B, T, _ = x_btI.shape
    h0 = jnp.zeros((B, HIDDEN_SIZE), jnp.float32)
    h1 = jnp.zeros((B, HIDDEN_SIZE), jnp.float32)
    for t in range(T):
        x_t = x_btI[:, t, :]
        h0 = jnp.tanh(x_t @ w_ih0.T + b_ih0 + h0 @ w_hh0.T + b_hh0)
        h1 = jnp.tanh(h0 @ w_ih1.T + b_ih1 + h1 @ w_hh1.T + b_hh1)
    return h1 @ w_fc.T + b_fc


if __name__ == "__main__":
    key = jax.random.PRNGKey(0)
    kx, kp = jax.random.split(key)

    B, T = 2, 8
    x = jax.random.normal(kx, (B, T, INPUT_SIZE), jnp.float32)

    params, raw = init_params(kp)

    out = rnn_forward(x, params)
    out = jax.block_until_ready(out)

    ref = reference_forward(x, raw)
    assert out.shape == (B, NUM_CLASSES)
    assert jnp.allclose(out, ref, atol=1e-5, rtol=1e-5), "mismatch vs reference"

    print("KERNEL_OK")
</pallas_src>

<mosaic_0001>
module attributes {stable_mosaic.version = 11 : i64} {
  func.func @rnn_kernel(%arg0: i32, %arg1: memref<8x128x128xf32, #tpu.memory_space<vmem>>, %arg2: memref<128x128xf32, #tpu.memory_space<vmem>>, %arg3: memref<128x128xf32, #tpu.memory_space<vmem>>, %arg4: memref<128x128xf32, #tpu.memory_space<vmem>>, %arg5: memref<1x128xf32, #tpu.memory_space<vmem>>, %arg6: memref<128x128xf32, #tpu.memory_space<vmem>>, %arg7: memref<1x128xf32, #tpu.memory_space<vmem>>, %arg8: memref<128x128xf32, #tpu.memory_space<vmem>>) attributes {dimension_semantics = [#tpu.dimension_semantics<parallel>], iteration_bounds = array<i64: 1>, scalar_prefetch = 0 : i64, scratch_operands = 0 : i64, tpu.core_type = #tpu.core_type<tc>, window_params = [{transform_indices = @transform_0, window_bounds = array<i64: 8, 128, 128>}, {pipeline_mode = #tpu.pipeline_mode<synchronous>, transform_indices = @transform_1, window_bounds = array<i64: 128, 128>}, {pipeline_mode = #tpu.pipeline_mode<synchronous>, transform_indices = @transform_2, window_bounds = array<i64: 128, 128>}, {pipeline_mode = #tpu.pipeline_mode<synchronous>, transform_indices = @transform_3, window_bounds = array<i64: 128, 128>}, {pipeline_mode = #tpu.pipeline_mode<synchronous>, transform_indices = @transform_4, window_bounds = array<i64: 1, 128>}, {pipeline_mode = #tpu.pipeline_mode<synchronous>, transform_indices = @transform_5, window_bounds = array<i64: 128, 128>}, {pipeline_mode = #tpu.pipeline_mode<synchronous>, transform_indices = @transform_6, window_bounds = array<i64: 1, 128>}, {transform_indices = @transform_7, window_bounds = array<i64: 128, 128>}]} {
    %cst = arith.constant 0.000000e+00 : f32
    %0 = vector.broadcast %cst : f32 to vector<128x128xf32>
    %cst_0 = arith.constant 0.000000e+00 : f32
    %1 = vector.broadcast %cst_0 : f32 to vector<128x128xf32>
    %c0_i32 = arith.constant 0 : i32
    %2 = arith.index_cast %c0_i32 : i32 to index
    %c0 = arith.constant 0 : index
    %c0_1 = arith.constant 0 : index
    %3 = vector.load %arg1[%2, %c0, %c0_1] : memref<8x128x128xf32, #tpu.memory_space<vmem>>, vector<1x128x128xf32>
    %4 = vector.shape_cast %3 : vector<1x128x128xf32> to vector<128x128xf32>
    %c0_2 = arith.constant 0 : index
    %c0_3 = arith.constant 0 : index
    %5 = vector.load %arg2[%c0_2, %c0_3] : memref<128x128xf32, #tpu.memory_space<vmem>>, vector<128x128xf32>
    %cst_4 = arith.constant dense<0.000000e+00> : vector<128x128xf32>
    %6 = tpu.matmul %0, %5, %cst_4 {dimension_numbers = #tpu.dot_dimension_numbers<[1], [0], [0], [1], [0, 0, 1, 1], [], []>} : vector<128x128xf32>, vector<128x128xf32>, vector<128x128xf32> -> vector<128x128xf32>
    %7 = arith.addf %4, %6 : vector<128x128xf32>
    %8 = math.tanh %7 : vector<128x128xf32>
    %c0_5 = arith.constant 0 : index
    %c0_6 = arith.constant 0 : index
    %9 = vector.load %arg3[%c0_5, %c0_6] : memref<128x128xf32, #tpu.memory_space<vmem>>, vector<128x128xf32>
    %cst_7 = arith.constant dense<0.000000e+00> : vector<128x128xf32>
    %10 = tpu.matmul %8, %9, %cst_7 {dimension_numbers = #tpu.dot_dimension_numbers<[1], [0], [0], [1], [0, 0, 1, 1], [], []>} : vector<128x128xf32>, vector<128x128xf32>, vector<128x128xf32> -> vector<128x128xf32>
    %c0_8 = arith.constant 0 : index
    %c0_9 = arith.constant 0 : index
    %11 = vector.load %arg4[%c0_8, %c0_9] : memref<128x128xf32, #tpu.memory_space<vmem>>, vector<128x128xf32>
    %cst_10 = arith.constant dense<0.000000e+00> : vector<128x128xf32>
    %12 = tpu.matmul %1, %11, %cst_10 {dimension_numbers = #tpu.dot_dimension_numbers<[1], [0], [0], [1], [0, 0, 1, 1], [], []>} : vector<128x128xf32>, vector<128x128xf32>, vector<128x128xf32> -> vector<128x128xf32>
    %13 = arith.addf %10, %12 : vector<128x128xf32>
    %c0_11 = arith.constant 0 : index
    %c0_12 = arith.constant 0 : index
    %14 = vector.load %arg5[%c0_11, %c0_12] : memref<1x128xf32, #tpu.memory_space<vmem>>, vector<1x128xf32>
    %15 = vector.broadcast %14 : vector<1x128xf32> to vector<128x128xf32>
    %16 = arith.addf %13, %15 : vector<128x128xf32>
    %17 = math.tanh %16 : vector<128x128xf32>
    %c1_i32 = arith.constant 1 : i32
    %18 = arith.index_cast %c1_i32 : i32 to index
    %c0_13 = arith.constant 0 : index
    %c0_14 = arith.constant 0 : index
    %19 = vector.load %arg1[%18, %c0_13, %c0_14] : memref<8x128x128xf32, #tpu.memory_space<vmem>>, vector<1x128x128xf32>
    %20 = vector.shape_cast %19 : vector<1x128x128xf32> to vector<128x128xf32>
    %c0_15 = arith.constant 0 : index
    %c0_16 = arith.constant 0 : index
    %21 = vector.load %arg2[%c0_15, %c0_16] : memref<128x128xf32, #tpu.memory_space<vmem>>, vector<128x128xf32>
    %cst_17 = arith.constant dense<0.000000e+00> : vector<128x128xf32>
    %22 = tpu.matmul %8, %21, %cst_17 {dimension_numbers = #tpu.dot_dimension_numbers<[1], [0], [0], [1], [0, 0, 1, 1], [], []>} : vector<128x128xf32>, vector<128x128xf32>, vector<128x128xf32> -> vector<128x128xf32>
    %23 = arith.addf %20, %22 : vector<128x128xf32>
    %24 = math.tanh %23 : vector<128x128xf32>
    %c0_18 = arith.constant 0 : index
    %c0_19 = arith.constant 0 : index
    %25 = vector.load %arg3[%c0_18, %c0_19] : memref<128x128xf32, #tpu.memory_space<vmem>>, vector<128x128xf32>
    %cst_20 = arith.constant dense<0.000000e+00> : vector<128x128xf32>
    %26 = tpu.matmul %24, %25, %cst_20 {dimension_numbers = #tpu.dot_dimension_numbers<[1], [0], [0], [1], [0, 0, 1, 1], [], []>} : vector<128x128xf32>, vector<128x128xf32>, vector<128x128xf32> -> vector<128x128xf32>
    %c0_21 = arith.constant 0 : index
    %c0_22 = arith.constant 0 : index
    %27 = vector.load %arg4[%c0_21, %c0_22] : memref<128x128xf32, #tpu.memory_space<vmem>>, vector<128x128xf32>
    %cst_23 = arith.constant dense<0.000000e+00> : vector<128x128xf32>
    %28 = tpu.matmul %17, %27, %cst_23 {dimension_numbers = #tpu.dot_dimension_numbers<[1], [0], [0], [1], [0, 0, 1, 1], [], []>} : vector<128x128xf32>, vector<128x128xf32>, vector<128x128xf32> -> vector<128x128xf32>
    %29 = arith.addf %26, %28 : vector<128x128xf32>
    %c0_24 = arith.constant 0 : index
    %c0_25 = arith.constant 0 : index
    %30 = vector.load %arg5[%c0_24, %c0_25] : memref<1x128xf32, #tpu.memory_space<vmem>>, vector<1x128xf32>
    %31 = vector.broadcast %30 : vector<1x128xf32> to vector<128x128xf32>
    %32 = arith.addf %29, %31 : vector<128x128xf32>
    %33 = math.tanh %32 : vector<128x128xf32>
    %c2_i32 = arith.constant 2 : i32
    %34 = arith.index_cast %c2_i32 : i32 to index
    %c0_26 = arith.constant 0 : index
    %c0_27 = arith.constant 0 : index
    %35 = vector.load %arg1[%34, %c0_26, %c0_27] : memref<8x128x128xf32, #tpu.memory_space<vmem>>, vector<1x128x128xf32>
    %36 = vector.shape_cast %35 : vector<1x128x128xf32> to vector<128x128xf32>
    %c0_28 = arith.constant 0 : index
    %c0_29 = arith.constant 0 : index
    %37 = vector.load %arg2[%c0_28, %c0_29] : memref<128x128xf32, #tpu.memory_space<vmem>>, vector<128x128xf32>
    %cst_30 = arith.constant dense<0.000000e+00> : vector<128x128xf32>
    %38 = tpu.matmul %24, %37, %cst_30 {dimension_numbers = #tpu.dot_dimension_numbers<[1], [0], [0], [1], [0, 0, 1, 1], [], []>} : vector<128x128xf32>, vector<128x128xf32>, vector<128x128xf32> -> vector<128x128xf32>
    %39 = arith.addf %36, %38 : vector<128x128xf32>
    %40 = math.tanh %39 : vector<128x128xf32>
    %c0_31 = arith.constant 0 : index
    %c0_32 = arith.constant 0 : index
    %41 = vector.load %arg3[%c0_31, %c0_32] : memref<128x128xf32, #tpu.memory_space<vmem>>, vector<128x128xf32>
    %cst_33 = arith.constant dense<0.000000e+00> : vector<128x128xf32>
    %42 = tpu.matmul %40, %41, %cst_33 {dimension_numbers = #tpu.dot_dimension_numbers<[1], [0], [0], [1], [0, 0, 1, 1], [], []>} : vector<128x128xf32>, vector<128x128xf32>, vector<128x128xf32> -> vector<128x128xf32>
    %c0_34 = arith.constant 0 : index
    %c0_35 = arith.constant 0 : index
    %43 = vector.load %arg4[%c0_34, %c0_35] : memref<128x128xf32, #tpu.memory_space<vmem>>, vector<128x128xf32>
    %cst_36 = arith.constant dense<0.000000e+00> : vector<128x128xf32>
    %44 = tpu.matmul %33, %43, %cst_36 {dimension_numbers = #tpu.dot_dimension_numbers<[1], [0], [0], [1], [0, 0, 1, 1], [], []>} : vector<128x128xf32>, vector<128x128xf32>, vector<128x128xf32> -> vector<128x128xf32>
    %45 = arith.addf %42, %44 : vector<128x128xf32>
    %c0_37 = arith.constant 0 : index
    %c0_38 = arith.constant 0 : index
    %46 = vector.load %arg5[%c0_37, %c0_38] : memref<1x128xf32, #tpu.memory_space<vmem>>, vector<1x128xf32>
    %47 = vector.broadcast %46 : vector<1x128xf32> to vector<128x128xf32>
    %48 = arith.addf %45, %47 : vector<128x128xf32>
    %49 = math.tanh %48 : vector<128x128xf32>
    %c3_i32 = arith.constant 3 : i32
    %50 = arith.index_cast %c3_i32 : i32 to index
    %c0_39 = arith.constant 0 : index
    %c0_40 = arith.constant 0 : index
    %51 = vector.load %arg1[%50, %c0_39, %c0_40] : memref<8x128x128xf32, #tpu.memory_space<vmem>>, vector<1x128x128xf32>
    %52 = vector.shape_cast %51 : vector<1x128x128xf32> to vector<128x128xf32>
    %c0_41 = arith.constant 0 : index
    %c0_42 = arith.constant 0 : index
    %53 = vector.load %arg2[%c0_41, %c0_42] : memref<128x128xf32, #tpu.memory_space<vmem>>, vector<128x128xf32>
    %cst_43 = arith.constant dense<0.000000e+00> : vector<128x128xf32>
    %54 = tpu.matmul %40, %53, %cst_43 {dimension_numbers = #tpu.dot_dimension_numbers<[1], [0], [0], [1], [0, 0, 1, 1], [], []>} : vector<128x128xf32>, vector<128x128xf32>, vector<128x128xf32> -> vector<128x128xf32>
    %55 = arith.addf %52, %54 : vector<128x128xf32>
    %56 = math.tanh %55 : vector<128x128xf32>
    %c0_44 = arith.constant 0 : index
    %c0_45 = arith.constant 0 : index
    %57 = vector.load %arg3[%c0_44, %c0_45] : memref<128x128xf32, #tpu.memory_space<vmem>>, vector<128x128xf32>
    %cst_46 = arith.constant dense<0.000000e+00> : vector<128x128xf32>
    %58 = tpu.matmul %56, %57, %cst_46 {dimension_numbers = #tpu.dot_dimension_numbers<[1], [0], [0], [1], [0, 0, 1, 1], [], []>} : vector<128x128xf32>, vector<128x128xf32>, vector<128x128xf32> -> vector<128x128xf32>
    %c0_47 = arith.constant 0 : index
    %c0_48 = arith.constant 0 : index
    %59 = vector.load %arg4[%c0_47, %c0_48] : memref<128x128xf32, #tpu.memory_space<vmem>>, vector<128x128xf32>
    %cst_49 = arith.constant dense<0.000000e+00> : vector<128x128xf32>
    %60 = tpu.matmul %49, %59, %cst_49 {dimension_numbers = #tpu.dot_dimension_numbers<[1], [0], [0], [1], [0, 0, 1, 1], [], []>} : vector<128x128xf32>, vector<128x128xf32>, vector<128x128xf32> -> vector<128x128xf32>
    %61 = arith.addf %58, %60 : vector<128x128xf32>
    %c0_50 = arith.constant 0 : index
    %c0_51 = arith.constant 0 : index
    %62 = vector.load %arg5[%c0_50, %c0_51] : memref<1x128xf32, #tpu.memory_space<vmem>>, vector<1x128xf32>
    %63 = vector.broadcast %62 : vector<1x128xf32> to vector<128x128xf32>
    %64 = arith.addf %61, %63 : vector<128x128xf32>
    %65 = math.tanh %64 : vector<128x128xf32>
    %c4_i32 = arith.constant 4 : i32
    %66 = arith.index_cast %c4_i32 : i32 to index
    %c0_52 = arith.constant 0 : index
    %c0_53 = arith.constant 0 : index
    %67 = vector.load %arg1[%66, %c0_52, %c0_53] : memref<8x128x128xf32, #tpu.memory_space<vmem>>, vector<1x128x128xf32>
    %68 = vector.shape_cast %67 : vector<1x128x128xf32> to vector<128x128xf32>
    %c0_54 = arith.constant 0 : index
    %c0_55 = arith.constant 0 : index
    %69 = vector.load %arg2[%c0_54, %c0_55] : memref<128x128xf32, #tpu.memory_space<vmem>>, vector<128x128xf32>
    %cst_56 = arith.constant dense<0.000000e+00> : vector<128x128xf32>
    %70 = tpu.matmul %56, %69, %cst_56 {dimension_numbers = #tpu.dot_dimension_numbers<[1], [0], [0], [1], [0, 0, 1, 1], [], []>} : vector<128x128xf32>, vector<128x128xf32>, vector<128x128xf32> -> vector<128x128xf32>
    %71 = arith.addf %68, %70 : vector<128x128xf32>
    %72 = math.tanh %71 : vector<128x128xf32>
    %c0_57 = arith.constant 0 : index
    %c0_58 = arith.constant 0 : index
    %73 = vector.load %arg3[%c0_57, %c0_58] : memref<128x128xf32, #tpu.memory_space<vmem>>, vector<128x128xf32>
    %cst_59 = arith.constant dense<0.000000e+00> : vector<128x128xf32>
    %74 = tpu.matmul %72, %73, %cst_59 {dimension_numbers = #tpu.dot_dimension_numbers<[1], [0], [0], [1], [0, 0, 1, 1], [], []>} : vector<128x128xf32>, vector<128x128xf32>, vector<128x128xf32> -> vector<128x128xf32>
    %c0_60 = arith.constant 0 : index
    %c0_61 = arith.constant 0 : index
    %75 = vector.load %arg4[%c0_60, %c0_61] : memref<128x128xf32, #tpu.memory_space<vmem>>, vector<128x128xf32>
    %cst_62 = arith.constant dense<0.000000e+00> : vector<128x128xf32>
    %76 = tpu.matmul %65, %75, %cst_62 {dimension_numbers = #tpu.dot_dimension_numbers<[1], [0], [0], [1], [0, 0, 1, 1], [], []>} : vector<128x128xf32>, vector<128x128xf32>, vector<128x128xf32> -> vector<128x128xf32>
    %77 = arith.addf %74, %76 : vector<128x128xf32>
    %c0_63 = arith.constant 0 : index
    %c0_64 = arith.constant 0 : index
    %78 = vector.load %arg5[%c0_63, %c0_64] : memref<1x128xf32, #tpu.memory_space<vmem>>, vector<1x128xf32>
    %79 = vector.broadcast %78 : vector<1x128xf32> to vector<128x128xf32>
    %80 = arith.addf %77, %79 : vector<128x128xf32>
    %81 = math.tanh %80 : vector<128x128xf32>
    %c5_i32 = arith.constant 5 : i32
    %82 = arith.index_cast %c5_i32 : i32 to index
    %c0_65 = arith.constant 0 : index
    %c0_66 = arith.constant 0 : index
    %83 = vector.load %arg1[%82, %c0_65, %c0_66] : memref<8x128x128xf32, #tpu.memory_space<vmem>>, vector<1x128x128xf32>
    %84 = vector.shape_cast %83 : vector<1x128x128xf32> to vector<128x128xf32>
    %c0_67 = arith.constant 0 : index
    %c0_68 = arith.constant 0 : index
    %85 = vector.load %arg2[%c0_67, %c0_68] : memref<128x128xf32, #tpu.memory_space<vmem>>, vector<128x128xf32>
    %cst_69 = arith.constant dense<0.000000e+00> : vector<128x128xf32>
    %86 = tpu.matmul %72, %85, %cst_69 {dimension_numbers = #tpu.dot_dimension_numbers<[1], [0], [0], [1], [0, 0, 1, 1], [], []>} : vector<128x128xf32>, vector<128x128xf32>, vector<128x128xf32> -> vector<128x128xf32>
    %87 = arith.addf %84, %86 : vector<128x128xf32>
    %88 = math.tanh %87 : vector<128x128xf32>
    %c0_70 = arith.constant 0 : index
    %c0_71 = arith.constant 0 : index
    %89 = vector.load %arg3[%c0_70, %c0_71] : memref<128x128xf32, #tpu.memory_space<vmem>>, vector<128x128xf32>
    %cst_72 = arith.constant dense<0.000000e+00> : vector<128x128xf32>
    %90 = tpu.matmul %88, %89, %cst_72 {dimension_numbers = #tpu.dot_dimension_numbers<[1], [0], [0], [1], [0, 0, 1, 1], [], []>} : vector<128x128xf32>, vector<128x128xf32>, vector<128x128xf32> -> vector<128x128xf32>
    %c0_73 = arith.constant 0 : index
    %c0_74 = arith.constant 0 : index
    %91 = vector.load %arg4[%c0_73, %c0_74] : memref<128x128xf32, #tpu.memory_space<vmem>>, vector<128x128xf32>
    %cst_75 = arith.constant dense<0.000000e+00> : vector<128x128xf32>
    %92 = tpu.matmul %81, %91, %cst_75 {dimension_numbers = #tpu.dot_dimension_numbers<[1], [0], [0], [1], [0, 0, 1, 1], [], []>} : vector<128x128xf32>, vector<128x128xf32>, vector<128x128xf32> -> vector<128x128xf32>
    %93 = arith.addf %90, %92 : vector<128x128xf32>
    %c0_76 = arith.constant 0 : index
    %c0_77 = arith.constant 0 : index
    %94 = vector.load %arg5[%c0_76, %c0_77] : memref<1x128xf32, #tpu.memory_space<vmem>>, vector<1x128xf32>
    %95 = vector.broadcast %94 : vector<1x128xf32> to vector<128x128xf32>
    %96 = arith.addf %93, %95 : vector<128x128xf32>
    %97 = math.tanh %96 : vector<128x128xf32>
    %c6_i32 = arith.constant 6 : i32
    %98 = arith.index_cast %c6_i32 : i32 to index
    %c0_78 = arith.constant 0 : index
    %c0_79 = arith.constant 0 : index
    %99 = vector.load %arg1[%98, %c0_78, %c0_79] : memref<8x128x128xf32, #tpu.memory_space<vmem>>, vector<1x128x128xf32>
    %100 = vector.shape_cast %99 : vector<1x128x128xf32> to vector<128x128xf32>
    %c0_80 = arith.constant 0 : index
    %c0_81 = arith.constant 0 : index
    %101 = vector.load %arg2[%c0_80, %c0_81] : memref<128x128xf32, #tpu.memory_space<vmem>>, vector<128x128xf32>
    %cst_82 = arith.constant dense<0.000000e+00> : vector<128x128xf32>
    %102 = tpu.matmul %88, %101, %cst_82 {dimension_numbers = #tpu.dot_dimension_numbers<[1], [0], [0], [1], [0, 0, 1, 1], [], []>} : vector<128x128xf32>, vector<128x128xf32>, vector<128x128xf32> -> vector<128x128xf32>
    %103 = arith.addf %100, %102 : vector<128x128xf32>
    %104 = math.tanh %103 : vector<128x128xf32>
    %c0_83 = arith.constant 0 : index
    %c0_84 = arith.constant 0 : index
    %105 = vector.load %arg3[%c0_83, %c0_84] : memref<128x128xf32, #tpu.memory_space<vmem>>, vector<128x128xf32>
    %cst_85 = arith.constant dense<0.000000e+00> : vector<128x128xf32>
    %106 = tpu.matmul %104, %105, %cst_85 {dimension_numbers = #tpu.dot_dimension_numbers<[1], [0], [0], [1], [0, 0, 1, 1], [], []>} : vector<128x128xf32>, vector<128x128xf32>, vector<128x128xf32> -> vector<128x128xf32>
    %c0_86 = arith.constant 0 : index
    %c0_87 = arith.constant 0 : index
    %107 = vector.load %arg4[%c0_86, %c0_87] : memref<128x128xf32, #tpu.memory_space<vmem>>, vector<128x128xf32>
    %cst_88 = arith.constant dense<0.000000e+00> : vector<128x128xf32>
    %108 = tpu.matmul %97, %107, %cst_88 {dimension_numbers = #tpu.dot_dimension_numbers<[1], [0], [0], [1], [0, 0, 1, 1], [], []>} : vector<128x128xf32>, vector<128x128xf32>, vector<128x128xf32> -> vector<128x128xf32>
    %109 = arith.addf %106, %108 : vector<128x128xf32>
    %c0_89 = arith.constant 0 : index
    %c0_90 = arith.constant 0 : index
    %110 = vector.load %arg5[%c0_89, %c0_90] : memref<1x128xf32, #tpu.memory_space<vmem>>, vector<1x128xf32>
    %111 = vector.broadcast %110 : vector<1x128xf32> to vector<128x128xf32>
    %112 = arith.addf %109, %111 : vector<128x128xf32>
    %113 = math.tanh %112 : vector<128x128xf32>
    %c7_i32 = arith.constant 7 : i32
    %114 = arith.index_cast %c7_i32 : i32 to index
    %c0_91 = arith.constant 0 : index
    %c0_92 = arith.constant 0 : index
    %115 = vector.load %arg1[%114, %c0_91, %c0_92] : memref<8x128x128xf32, #tpu.memory_space<vmem>>, vector<1x128x128xf32>
    %116 = vector.shape_cast %115 : vector<1x128x128xf32> to vector<128x128xf32>
    %c0_93 = arith.constant 0 : index
    %c0_94 = arith.constant 0 : index
    %117 = vector.load %arg2[%c0_93, %c0_94] : memref<128x128xf32, #tpu.memory_space<vmem>>, vector<128x128xf32>
    %cst_95 = arith.constant dense<0.000000e+00> : vector<128x128xf32>
    %118 = tpu.matmul %104, %117, %cst_95 {dimension_numbers = #tpu.dot_dimension_numbers<[1], [0], [0], [1], [0, 0, 1, 1], [], []>} : vector<128x128xf32>, vector<128x128xf32>, vector<128x128xf32> -> vector<128x128xf32>
    %119 = arith.addf %116, %118 : vector<128x128xf32>
    %120 = math.tanh %119 : vector<128x128xf32>
    %c0_96 = arith.constant 0 : index
    %c0_97 = arith.constant 0 : index
    %121 = vector.load %arg3[%c0_96, %c0_97] : memref<128x128xf32, #tpu.memory_space<vmem>>, vector<128x128xf32>
    %cst_98 = arith.constant dense<0.000000e+00> : vector<128x128xf32>
    %122 = tpu.matmul %120, %121, %cst_98 {dimension_numbers = #tpu.dot_dimension_numbers<[1], [0], [0], [1], [0, 0, 1, 1], [], []>} : vector<128x128xf32>, vector<128x128xf32>, vector<128x128xf32> -> vector<128x128xf32>
    %c0_99 = arith.constant 0 : index
    %c0_100 = arith.constant 0 : index
    %123 = vector.load %arg4[%c0_99, %c0_100] : memref<128x128xf32, #tpu.memory_space<vmem>>, vector<128x128xf32>
    %cst_101 = arith.constant dense<0.000000e+00> : vector<128x128xf32>
    %124 = tpu.matmul %113, %123, %cst_101 {dimension_numbers = #tpu.dot_dimension_numbers<[1], [0], [0], [1], [0, 0, 1, 1], [], []>} : vector<128x128xf32>, vector<128x128xf32>, vector<128x128xf32> -> vector<128x128xf32>
    %125 = arith.addf %122, %124 : vector<128x128xf32>
    %c0_102 = arith.constant 0 : index
    %c0_103 = arith.constant 0 : index
    %126 = vector.load %arg5[%c0_102, %c0_103] : memref<1x128xf32, #tpu.memory_space<vmem>>, vector<1x128xf32>
    %127 = vector.broadcast %126 : vector<1x128xf32> to vector<128x128xf32>
    %128 = arith.addf %125, %127 : vector<128x128xf32>
    %129 = math.tanh %128 : vector<128x128xf32>
    %c8_i32 = arith.constant 8 : i32
    %c0_104 = arith.constant 0 : index
    %c0_105 = arith.constant 0 : index
    %130 = vector.load %arg6[%c0_104, %c0_105] : memref<128x128xf32, #tpu.memory_space<vmem>>, vector<128x128xf32>
    %cst_106 = arith.constant dense<0.000000e+00> : vector<128x128xf32>
    %131 = tpu.matmul %129, %130, %cst_106 {dimension_numbers = #tpu.dot_dimension_numbers<[1], [0], [0], [1], [0, 0, 1, 1], [], []>} : vector<128x128xf32>, vector<128x128xf32>, vector<128x128xf32> -> vector<128x128xf32>
    %c0_107 = arith.constant 0 : index
    %c0_108 = arith.constant 0 : index
    %132 = vector.load %arg7[%c0_107, %c0_108] : memref<1x128xf32, #tpu.memory_space<vmem>>, vector<1x128xf32>
    %133 = vector.broadcast %132 : vector<1x128xf32> to vector<128x128xf32>
    %134 = arith.addf %131, %133 : vector<128x128xf32>
    %c0_109 = arith.constant 0 : index
    %c0_110 = arith.constant 0 : index
    %135 = vector.load %arg8[%c0_109, %c0_110] : memref<128x128xf32, #tpu.memory_space<vmem>>, vector<128x128xf32>
    tpu.vector_store %arg8[%c0_109, %c0_110], %134 {strides = array<i32>} : memref<128x128xf32, #tpu.memory_space<vmem>>, vector<128x128xf32>,
    return
  }
  func.func @transform_0(%arg0: i32) -> (i32, i32, i32) {
    %c0_i32 = arith.constant 0 : i32
    %c0_i32_0 = arith.constant 0 : i32
    %c0_i32_1 = arith.constant 0 : i32
    return %c0_i32, %arg0, %c0_i32_0 : i32, i32, i32
  }
  func.func @transform_1(%arg0: i32) -> (i32, i32) {
    %c0_i32 = arith.constant 0 : i32
    %c0_i32_0 = arith.constant 0 : i32
    %c0_i32_1 = arith.constant 0 : i32
    return %c0_i32, %c0_i32_0 : i32, i32
  }
  func.func @transform_2(%arg0: i32) -> (i32, i32) {
    %c0_i32 = arith.constant 0 : i32
    %c0_i32_0 = arith.constant 0 : i32
    %c0_i32_1 = arith.constant 0 : i32
    return %c0_i32, %c0_i32_0 : i32, i32
  }
  func.func @transform_3(%arg0: i32) -> (i32, i32) {
    %c0_i32 = arith.constant 0 : i32
    %c0_i32_0 = arith.constant 0 : i32
    %c0_i32_1 = arith.constant 0 : i32
    return %c0_i32, %c0_i32_0 : i32, i32
  }
  func.func @transform_4(%arg0: i32) -> (i32, i32) {
    %c0_i32 = arith.constant 0 : i32
    %c0_i32_0 = arith.constant 0 : i32
    %c0_i32_1 = arith.constant 0 : i32
    return %c0_i32, %c0_i32_0 : i32, i32
  }
  func.func @transform_5(%arg0: i32) -> (i32, i32) {
    %c0_i32 = arith.constant 0 : i32
    %c0_i32_0 = arith.constant 0 : i32
    %c0_i32_1 = arith.constant 0 : i32
    return %c0_i32, %c0_i32_0 : i32, i32
  }
  func.func @transform_6(%arg0: i32) -> (i32, i32) {
    %c0_i32 = arith.constant 0 : i32
    %c0_i32_0 = arith.constant 0 : i32
    %c0_i32_1 = arith.constant 0 : i32
    return %c0_i32, %c0_i32_0 : i32, i32
  }
  func.func @transform_7(%arg0: i32) -> (i32, i32) {
    %c0_i32 = arith.constant 0 : i32
    %c0_i32_0 = arith.constant 0 : i32
    return %arg0, %c0_i32 : i32, i32
  }
}

</mosaic_0001>

<llo_original>
// kernel: tpu_custom_call.1
$region0: #{tpu_custom_call.1}
  #allocation0 [shape = 'u32[]', space=smem, size = 0x4, offset = 0x4, fixed_abs, tag = 'smem constant byte address 0x4 - core index']
  #allocation1 [shape = 'u32[144,128]{1,0:T(1,128)}', space=vmem, size = 0x12000, scoped, tag = 'internal scratch']
  %s0 = inlined_call_operand.hbm [shape: f32[8,128,128], index: 0, kind: input, shape index: {}]
  %s1 = inlined_call_operand.hbm [shape: f32[128,128], index: 1, kind: input, shape index: {}]
  %s2 = inlined_call_operand.hbm [shape: f32[128,128], index: 2, kind: input, shape index: {}]
  %s3 = inlined_call_operand.hbm [shape: f32[128,128], index: 3, kind: input, shape index: {}]
  %s4 = inlined_call_operand.vmem [shape: f32[1,128], index: 4, kind: input, shape index: {}]
  %s5 = inlined_call_operand.hbm [shape: f32[128,128], index: 5, kind: input, shape index: {}]
  %s6 = inlined_call_operand.vmem [shape: f32[1,128], index: 6, kind: input, shape index: {}]
  %s7 = inlined_call_operand.hbm [shape: f32[128,128], index: 7, kind: output, shape index: {}]
  %s8 = sld [smem:[#allocation0]]
  $region58: #{tpu_custom_call.1} parent=0
    _
  %s10 = ssub.s32 1, %s8
  %s11 = scalar_select 0, %s10, %s8
  $region1: #{tpu_custom_call.1} parent=0
    #allocation2 [shape = 'u8[524288]{0}', space=vmem, size = 0x80000, scoped, tag = 'input window, operand 0, single buffered']
    #allocation3 [shape = 's32[1]{0}', space=sflag, size = 0x4, scoped, tag = 'scoped memory for tpu_custom_call.1']
    #allocation4 [shape = 's32[1]{0}', space=sflag, size = 0x4, scoped, tag = 'scoped memory for tpu_custom_call.1']
    #allocation5 [shape = 'u8[65536]{0}', space=vmem, size = 0x10000, scoped, tag = 'input window, operand 1, single buffered']
    #allocation6 [shape = 's32[1]{0}', space=sflag, size = 0x4, scoped, tag = 'scoped memory for tpu_custom_call.1']
    #allocation7 [shape = 'u8[65536]{0}', space=vmem, size = 0x10000, scoped, tag = 'input window, operand 2, single buffered']
    #allocation8 [shape = 'u8[65536]{0}', space=vmem, size = 0x10000, scoped, tag = 'input window, operand 3, single buffered']
    #allocation9 [shape = 's32[1]{0}', space=sflag, size = 0x4, scoped, tag = 'scoped memory for tpu_custom_call.1']
    #allocation10 [shape = 'u8[65536]{0}', space=vmem, size = 0x10000, scoped, tag = 'input window, operand 5, single buffered']
    #allocation11 [shape = 'u8[65536]{0}', space=vmem, size = 0x10000, scoped, tag = 'output window, operand 0, single buffered']
    %12 = vsyncpa [#allocation3], 0
    %13 = vsyncpa [#allocation6], 0
    %14 = vsyncpa [#allocation9], 0
    %15 = vsyncpa [#allocation4], 0
    // Predicated region
    $region2: #{tpu_custom_call.1} parent=1 // pred_check
      _
    $region3: #{tpu_custom_call.1} parent=1 // pred_check_branch
      %17 = sbr.rel (0) target = $region5
    $region4: #{tpu_custom_call.1} parent=1 // pred_region
      %s19 = ssub.s32 16384, 16384
      %20 = vsyncadd [#allocation3], %s19
      %s21 = sshll.u32 [#allocation2], 4
      %s22 = int_to_ptr.vmem [resolvable:$true] %s21
      %27 = dma.hbm_to_vmem [thread:$0]  %s0, 16384, %s22, [#allocation3], 128, 128, 8
    $region5: #{tpu_custom_call.1} parent=1 // pred_fallthru
      _
    // Predicated region
    $region6: #{tpu_custom_call.1} parent=1 // pred_check
      _
    $region7: #{tpu_custom_call.1} parent=1 // pred_check_branch
      %29 = sbr.rel (0) target = $region9
    $region8: #{tpu_custom_call.1} parent=1 // pred_region
      %s31 = ssub.s32 2048, 2048
      %32 = vsyncadd [#allocation6], %s31
      %s33 = sshll.u32 [#allocation5], 4
      %s34 = int_to_ptr.vmem [resolvable:$true] %s33
      %39 = dma.hbm_to_vmem [thread:$0]  %s1, 2048, %s34, [#allocation6], 128, 128, 8
    $region9: #{tpu_custom_call.1} parent=1 // pred_fallthru
      _
    // Predicated region
    $region10: #{tpu_custom_call.1} parent=1 // pred_check
      _
    $region11: #{tpu_custom_call.1} parent=1 // pred_check_branch
      %41 = sbr.rel (0) target = $region13
    $region12: #{tpu_custom_call.1} parent=1 // pred_region
      %s43 = ssub.s32 2048, 2048
      %44 = vsyncadd [#allocation6], %s43
      %s45 = sshll.u32 [#allocation7], 4
      %s46 = int_to_ptr.vmem [resolvable:$true] %s45
      %51 = dma.hbm_to_vmem [thread:$0]  %s2, 2048, %s46, [#allocation6], 128, 128, 8
    $region13: #{tpu_custom_call.1} parent=1 // pred_fallthru
      _
    // Predicated region
    $region14: #{tpu_custom_call.1} parent=1 // pred_check
      _
    $region15: #{tpu_custom_call.1} parent=1 // pred_check_branch
      %53 = sbr.rel (0) target = $region17
    $region16: #{tpu_custom_call.1} parent=1 // pred_region
      %s55 = ssub.s32 2048, 2048
      %56 = vsyncadd [#allocation9], %s55
      %s57 = sshll.u32 [#allocation8], 4
      %s58 = int_to_ptr.vmem [resolvable:$true] %s57
      %63 = dma.hbm_to_vmem [thread:$0]  %s3, 2048, %s58, [#allocation9], 128, 128, 8
    $region17: #{tpu_custom_call.1} parent=1 // pred_fallthru
      _
    // Predicated region
    $region18: #{tpu_custom_call.1} parent=1 // pred_check
      _
    $region19: #{tpu_custom_call.1} parent=1 // pred_check_branch
      %65 = sbr.rel (0) target = $region21
    $region20: #{tpu_custom_call.1} parent=1 // pred_region
      _
    $region21: #{tpu_custom_call.1} parent=1 // pred_fallthru
      _
    // Predicated region
    $region22: #{tpu_custom_call.1} parent=1 // pred_check
      _
    $region23: #{tpu_custom_call.1} parent=1 // pred_check_branch
      %67 = sbr.rel (0) target = $region25
    $region24: #{tpu_custom_call.1} parent=1 // pred_region
      %s69 = ssub.s32 2048, 2048
      %70 = vsyncadd [#allocation9], %s69
      %s71 = sshll.u32 [#allocation10], 4
      %s72 = int_to_ptr.vmem [resolvable:$true] %s71
      %77 = dma.hbm_to_vmem [thread:$0]  %s5, 2048, %s72, [#allocation9], 128, 128, 8
    $region25: #{tpu_custom_call.1} parent=1 // pred_fallthru
      _
    // Predicated region
    $region26: #{tpu_custom_call.1} parent=1 // pred_check
      _
    $region27: #{tpu_custom_call.1} parent=1 // pred_check_branch
      %79 = sbr.rel (0) target = $region29
    $region28: #{tpu_custom_call.1} parent=1 // pred_region
      _
    $region29: #{tpu_custom_call.1} parent=1 // pred_fallthru
      _
    // Predicated region
    $region30: #{tpu_custom_call.1} parent=1 // pred_check
      _
    $region31: #{tpu_custom_call.1} parent=1 // pred_check_branch
      %81 = sbr.rel (0) target = $region33
    $region32: #{tpu_custom_call.1} parent=1 // pred_region
      %82 = dma.done [#allocation3], 16384
    $region33: #{tpu_custom_call.1} parent=1 // pred_fallthru
      _
    // Predicated region
    $region34: #{tpu_custom_call.1} parent=1 // pred_check
      _
    $region35: #{tpu_custom_call.1} parent=1 // pred_check_branch
      %84 = sbr.rel (0) target = $region37
    $region36: #{tpu_custom_call.1} parent=1 // pred_region
      %85 = dma.done [#allocation6], 2048
    $region37: #{tpu_custom_call.1} parent=1 // pred_fallthru
      _
    // Predicated region
    $region38: #{tpu_custom_call.1} parent=1 // pred_check
      _
    $region39: #{tpu_custom_call.1} parent=1 // pred_check_branch
      %87 = sbr.rel (0) target = $region41
    $region40: #{tpu_custom_call.1} parent=1 // pred_region
      %88 = dma.done [#allocation6], 2048
    $region41: #{tpu_custom_call.1} parent=1 // pred_fallthru
      _
    // Predicated region
    $region42: #{tpu_custom_call.1} parent=1 // pred_check
      _
    $region43: #{tpu_custom_call.1} parent=1 // pred_check_branch
      %90 = sbr.rel (0) target = $region45
    $region44: #{tpu_custom_call.1} parent=1 // pred_region
      %91 = dma.done [#allocation9], 2048
    $region45: #{tpu_custom_call.1} parent=1 // pred_fallthru
      _
    // Predicated region
    $region46: #{tpu_custom_call.1} parent=1 // pred_check
      _
    $region47: #{tpu_custom_call.1} parent=1 // pred_check_branch
      %93 = sbr.rel (0) target = $region49
    $region48: #{tpu_custom_call.1} parent=1 // pred_region
      %94 = dma.done [#allocation9], 2048
    $region49: #{tpu_custom_call.1} parent=1 // pred_fallthru
      _
    %v95 = vld [vmem:[#allocation2] sm:$0xff]
    %v96 = vld [vmem:[#allocation2 + $0x8] sm:$0xff]
    %v97 = vld [vmem:[#allocation2 + $0x10] sm:$0xff]
    %v98 = vld [vmem:[#allocation2 + $0x18] sm:$0xff]
    %v99 = vld [vmem:[#allocation2 + $0x20] sm:$0xff]
    %v100 = vld [vmem:[#allocation2 + $0x28] sm:$0xff]
    %v101 = vld [vmem:[#allocation2 + $0x30] sm:$0xff]
    %v102 = vld [vmem:[#allocation2 + $0x38] sm:$0xff]
    %v103 = vld [vmem:[#allocation2 + $0x40] sm:$0xff]
    %v104 = vld [vmem:[#allocation2 + $0x48] sm:$0xff]
    %v105 = vld [vmem:[#allocation2 + $0x50] sm:$0xff]
    %v106 = vld [vmem:[#allocation2 + $0x58] sm:$0xff]
    %v107 = vld [vmem:[#allocation2 + $0x60] sm:$0xff]
    %v108 = vld [vmem:[#allocation2 + $0x68] sm:$0xff]
    %v109 = vld [vmem:[#allocation2 + $0x70] sm:$0xff]
    %v110 = vld [vmem:[#allocation2 + $0x78] sm:$0xff]
    %v111 = vld [vmem:[#allocation5] sm:$0xff]
    %v112 = vld [vmem:[#allocation5 + $0x8] sm:$0xff]
    %v113 = vld [vmem:[#allocation5 + $0x10] sm:$0xff]
    %v114 = vld [vmem:[#allocation5 + $0x18] sm:$0xff]
    %v115 = vld [vmem:[#allocation5 + $0x20] sm:$0xff]
    %v116 = vld [vmem:[#allocation5 + $0x28] sm:$0xff]
    %v117 = vld [vmem:[#allocation5 + $0x30] sm:$0xff]
    %v118 = vld [vmem:[#allocation5 + $0x38] sm:$0xff]
    %v119 = vld [vmem:[#allocation5 + $0x40] sm:$0xff]
    %v120 = vld [vmem:[#allocation5 + $0x48] sm:$0xff]
    %v121 = vld [vmem:[#allocation5 + $0x50] sm:$0xff]
    %v122 = vld [vmem:[#allocation5 + $0x58] sm:$0xff]
    %v123 = vld [vmem:[#allocation5 + $0x60] sm:$0xff]
    %v124 = vld [vmem:[#allocation5 + $0x68] sm:$0xff]
    %v125 = vld [vmem:[#allocation5 + $0x70] sm:$0xff]
    %v126 = vld [vmem:[#allocation5 + $0x78] sm:$0xff]
    %127 = vmatprep.subr.mxu0 0.0
    %128 = vmatpush1.msra.mxu0 %v111
    %129 = vmatprep.subr.mxu0 0.0
    %130 = vmatpush1.msra.mxu0 %v112
    %131 = vmatprep.subr.mxu0 0.0
    %132 = vmatpush1.msra.mxu0 %v113
    %133 = vmatprep.subr.mxu0 0.0
    %134 = vmatpush1.msra.mxu0 %v114
    %135 = vmatprep.subr.mxu0 0.0
    %136 = vmatpush1.msra.mxu0 %v115
    %137 = vmatprep.subr.mxu0 0.0
    %138 = vmatpush1.msra.mxu0 %v116
    %139 = vmatprep.subr.mxu0 0.0
    %140 = vmatpush1.msra.mxu0 %v117
    %141 = vmatprep.subr.mxu0 0.0
    %142 = vmatpush1.msra.mxu0 %v118
    %143 = vmatprep.subr.mxu0 0.0
    %144 = vmatpush1.msra.mxu0 %v119
    %145 = vmatprep.subr.mxu0 0.0
    %146 = vmatpush1.msra.mxu0 %v120
    %147 = vmatprep.subr.mxu0 0.0
    %148 = vmatpush1.msra.mxu0 %v121
    %149 = vmatprep.subr.mxu0 0.0
    %150 = vmatpush1.msra.mxu0 %v122
    %151 = vmatprep.subr.mxu0 0.0
    %152 = vmatpush1.msra.mxu0 %v123
    %153 = vmatprep.subr.mxu0 0.0
    %154 = vmatpush1.msra.mxu0 %v124
    %155 = vmatprep.subr.mxu0 0.0
    %156 = vmatpush1.msra.mxu0 %v125
    %157 = vmatprep.subr.mxu0 0.0
    %158 = vmatpush1.msra.mxu0 %v126
    %159 = vmatprep.subr.mxu0 0.0
    %160 = vmatpush1.msra.mxu0 0.0
    %161 = vmatprep.subr.mxu0 0.0
    %162 = vmatpush1.msra.mxu0 0.0
    %163 = vmatprep.subr.mxu0 0.0
    %164 = vmatpush1.msra.mxu0 0.0
    %165 = vmatprep.subr.mxu0 0.0
    %166 = vmatpush1.msra.mxu0 0.0
    %167 = vmatprep.subr.mxu0 0.0
    %168 = vmatpush1.msra.mxu0 0.0
    %169 = vmatprep.subr.mxu0 0.0
    %170 = vmatpush1.msra.mxu0 0.0
    %171 = vmatprep.subr.mxu0 0.0
    %172 = vmatpush1.msra.mxu0 0.0
    %173 = vmatprep.subr.mxu0 0.0
    %174 = vmatpush1.msra.mxu0 0.0
    %175 = vmatprep.subr.mxu0 0.0
    %176 = vmatpush1.msra.mxu0 0.0
    %177 = vmatprep.subr.mxu0 0.0
    %178 = vmatpush1.msra.mxu0 0.0
    %179 = vmatprep.subr.mxu0 0.0
    %180 = vmatpush1.msra.mxu0 0.0
    %181 = vmatprep.subr.mxu0 0.0
    %182 = vmatpush1.msra.mxu0 0.0
    %183 = vmatprep.subr.mxu0 0.0
    %184 = vmatpush1.msra.mxu0 0.0
    %185 = vmatprep.subr.mxu0 0.0
    %186 = vmatpush1.msra.mxu0 0.0
    %187 = vmatprep.subr.mxu0 0.0
    %188 = vmatpush1.msra.mxu0 0.0
    %189 = vmatprep.subr.mxu0 0.0
    %190 = vmatpush1.msra.mxu0 0.0
    %191 = vmatprep.mubr.f32.mxu0 0.0
    %192 = vmatmul.mubr.f32.gmra.mrb[0].mxu0 0.0
    %v193 = vpop.f32.mrb[0].mxu0
    %v194 = vadd.f32 0.0, %v193
    %v195 = vpop.f32.mrb[0].mxu0
    %196 = vmatprep.mubr.f32.mxu0 0.0
    %197 = vmatmul.mubr.f32.gmra.mrb[0].mxu0 0.0
    %v198 = vpop.f32.mrb[0].mxu0
    %v199 = vadd.f32 0.0, %v198
    %v200 = vpop.f32.mrb[0].mxu0
    %201 = vmatprep.mubr.f32.mxu0 0.0
    %202 = vmatmul.mubr.f32.gmra.mrb[0].mxu0 0.0
    %v203 = vpop.f32.mrb[0].mxu0
    %v204 = vadd.f32 0.0, %v203
    %v205 = vpop.f32.mrb[0].mxu0
    %206 = vmatprep.mubr.f32.mxu0 0.0
    %207 = vmatmul.mubr.f32.gmra.mrb[0].mxu0 0.0
    %v208 = vpop.f32.mrb[0].mxu0
    %v209 = vadd.f32 0.0, %v208
    %v210 = vpop.f32.mrb[0].mxu0
    %211 = vmatprep.mubr.f32.mxu0 0.0
    %212 = vmatmul.mubr.f32.gmra.mrb[0].mxu0 0.0
    %v213 = vpop.f32.mrb[0].mxu0
    %v214 = vadd.f32 0.0, %v213
    %v215 = vpop.f32.mrb[0].mxu0
    %216 = vmatprep.mubr.f32.mxu0 0.0
    %217 = vmatmul.mubr.f32.gmra.mrb[0].mxu0 0.0
    %v218 = vpop.f32.mrb[0].mxu0
    %v219 = vadd.f32 0.0, %v218
    %v220 = vpop.f32.mrb[0].mxu0
    %221 = vmatprep.mubr.f32.mxu0 0.0
    %222 = vmatmul.mubr.f32.gmra.mrb[0].mxu0 0.0
    %v223 = vpop.f32.mrb[0].mxu0
    %v224 = vadd.f32 0.0, %v223
    %v225 = vpop.f32.mrb[0].mxu0
    %226 = vmatprep.mubr.f32.mxu0 0.0
    %227 = vmatmul.mubr.f32.gmra.mrb[0].mxu0 0.0
    %v228 = vpop.f32.mrb[0].mxu0
    %v229 = vadd.f32 0.0, %v228
    %v230 = vpop.f32.mrb[0].mxu0
    %231 = vmatprep.mubr.f32.mxu0 0.0
    %232 = vmatmul.mubr.f32.gmra.mrb[0].mxu0 0.0
    %v233 = vpop.f32.mrb[0].mxu0
    %v234 = vadd.f32 0.0, %v233
    %v235 = vpop.f32.mrb[0].mxu0
    %236 = vmatprep.mubr.f32.mxu0 0.0
    %237 = vmatmul.mubr.f32.gmra.mrb[0].mxu0 0.0
    %v238 = vpop.f32.mrb[0].mxu0
    %v239 = vadd.f32 0.0, %v238
    %v240 = vpop.f32.mrb[0].mxu0
    %241 = vmatprep.mubr.f32.mxu0 0.0
    %242 = vmatmul.mubr.f32.gmra.mrb[0].mxu0 0.0
    %v243 = vpop.f32.mrb[0].mxu0
    %v244 = vadd.f32 0.0, %v243
    %v245 = vpop.f32.mrb[0].mxu0
    %246 = vmatprep.mubr.f32.mxu0 0.0
    %247 = vmatmul.mubr.f32.gmra.mrb[0].mxu0 0.0
    %v248 = vpop.f32.mrb[0].mxu0
    %v249 = vadd.f32 0.0, %v248
    %v250 = vpop.f32.mrb[0].mxu0
    %251 = vmatprep.mubr.f32.mxu0 0.0
    %252 = vmatmul.mubr.f32.gmra.mrb[0].mxu0 0.0
    %v253 = vpop.f32.mrb[0].mxu0
    %v254 = vadd.f32 0.0, %v253
    %v255 = vpop.f32.mrb[0].mxu0
    %256 = vmatprep.mubr.f32.mxu0 0.0
    %257 = vmatmul.mubr.f32.gmra.mrb[0].mxu0 0.0
    %v258 = vpop.f32.mrb[0].mxu0
    %v259 = vadd.f32 0.0, %v258
    %v260 = vpop.f32.mrb[0].mxu0
    %261 = vmatprep.mubr.f32.mxu0 0.0
    %262 = vmatmul.mubr.f32.gmra.mrb[0].mxu0 0.0
    %v263 = vpop.f32.mrb[0].mxu0
    %v264 = vadd.f32 0.0, %v263
    %v265 = vpop.f32.mrb[0].mxu0
    %266 = vmatprep.mubr.f32.mxu0 0.0
    %267 = vmatmul.mubr.f32.gmra.mrb[0].mxu0 0.0
    %v268 = vpop.f32.mrb[0].mxu0
    %v269 = vadd.f32 0.0, %v268
    %v270 = vpop.f32.mrb[0].mxu0
    %271 = vdwg.mxu0
    %v272 = vadd.f32 %v95, %v194
    %v273 = vadd.f32 %v96, %v199
    %v274 = vadd.f32 %v97, %v204
    %v275 = vadd.f32 %v98, %v209
    %v276 = vadd.f32 %v99, %v214
    %v277 = vadd.f32 %v100, %v219
    %v278 = vadd.f32 %v101, %v224
    %v279 = vadd.f32 %v102, %v229
    %v280 = vadd.f32 %v103, %v234
    %v281 = vadd.f32 %v104, %v239
    %v282 = vadd.f32 %v105, %v244
    %v283 = vadd.f32 %v106, %v249
    %v284 = vadd.f32 %v107, %v254
    %v285 = vadd.f32 %v108, %v259
    %v286 = vadd.f32 %v109, %v264
    %v287 = vadd.f32 %v110, %v269
    %v288 = vtanh.pop %v272
    %v289 = vtanh.pop %v273
    %v290 = vtanh.pop %v274
    %v291 = vtanh.pop %v275
    %v292 = vtanh.pop %v276
    %v293 = vtanh.pop %v277
    %v294 = vtanh.pop %v278
    %v295 = vtanh.pop %v279
    %v296 = vtanh.pop %v280
    %v297 = vtanh.pop %v281
    %v298 = vtanh.pop %v282
    %v299 = vtanh.pop %v283
    %v300 = vtanh.pop %v284
    %v301 = vtanh.pop %v285
    %v302 = vtanh.pop %v286
    %v303 = vtanh.pop %v287
    %v304 = vld [vmem:[#allocation7] sm:$0xff]
    %v305 = vld [vmem:[#allocation7 + $0x8] sm:$0xff]
    %v306 = vld [vmem:[#allocation7 + $0x10] sm:$0xff]
    %v307 = vld [vmem:[#allocation7 + $0x18] sm:$0xff]
    %v308 = vld [vmem:[#allocation7 + $0x20] sm:$0xff]
    %v309 = vld [vmem:[#allocation7 + $0x28] sm:$0xff]
    %v310 = vld [vmem:[#allocation7 + $0x30] sm:$0xff]
    %v311 = vld [vmem:[#allocation7 + $0x38] sm:$0xff]
    %v312 = vld [vmem:[#allocation7 + $0x40] sm:$0xff]
    %v313 = vld [vmem:[#allocation7 + $0x48] sm:$0xff]
    %v314 = vld [vmem:[#allocation7 + $0x50] sm:$0xff]
    %v315 = vld [vmem:[#allocation7 + $0x58] sm:$0xff]
    %v316 = vld [vmem:[#allocation7 + $0x60] sm:$0xff]
    %v317 = vld [vmem:[#allocation7 + $0x68] sm:$0xff]
    %v318 = vld [vmem:[#allocation7 + $0x70] sm:$0xff]
    %v319 = vld [vmem:[#allocation7 + $0x78] sm:$0xff]
    %v320 = vld [vmem:[#allocation8] sm:$0xff]
    %v321 = vld [vmem:[#allocation8 + $0x8] sm:$0xff]
    %v322 = vld [vmem:[#allocation8 + $0x10] sm:$0xff]
    %v323 = vld [vmem:[#allocation8 + $0x18] sm:$0xff]
    %v324 = vld [vmem:[#allocation8 + $0x20] sm:$0xff]
    %v325 = vld [vmem:[#allocation8 + $0x28] sm:$0xff]
    %v326 = vld [vmem:[#allocation8 + $0x30] sm:$0xff]
    %v327 = vld [vmem:[#allocation8 + $0x38] sm:$0xff]
    %v328 = vld [vmem:[#allocation8 + $0x40] sm:$0xff]
    %v329 = vld [vmem:[#allocation8 + $0x48] sm:$0xff]
    %v330 = vld [vmem:[#allocation8 + $0x50] sm:$0xff]
    %v331 = vld [vmem:[#allocation8 + $0x58] sm:$0xff]
    %v332 = vld [vmem:[#allocation8 + $0x60] sm:$0xff]
    %v333 = vld [vmem:[#allocation8 + $0x68] sm:$0xff]
    %v334 = vld [vmem:[#allocation8 + $0x70] sm:$0xff]
    %v335 = vld [vmem:[#allocation8 + $0x78] sm:$0xff]
    %336 = vmatprep.subr.mxu0 0.0
    %337 = vmatpush1.msra.mxu0 %v320
    %338 = vmatprep.subr.mxu0 0.0
    %339 = vmatpush1.msra.mxu0 %v321
    %340 = vmatprep.subr.mxu0 0.0
    %341 = vmatpush1.msra.mxu0 %v322
    %342 = vmatprep.subr.mxu0 0.0
    %343 = vmatpush1.msra.mxu0 %v323
    %344 = vmatprep.subr.mxu0 0.0
    %345 = vmatpush1.msra.mxu0 %v324
    %346 = vmatprep.subr.mxu0 0.0
    %347 = vmatpush1.msra.mxu0 %v325
    %348 = vmatprep.subr.mxu0 0.0
    %349 = vmatpush1.msra.mxu0 %v326
    %350 = vmatprep.subr.mxu0 0.0
    %351 = vmatpush1.msra.mxu0 %v327
    %352 = vmatprep.subr.mxu0 0.0
    %353 = vmatpush1.msra.mxu0 %v328
    %354 = vmatprep.subr.mxu0 0.0
    %355 = vmatpush1.msra.mxu0 %v329
    %356 = vmatprep.subr.mxu0 0.0
    %357 = vmatpush1.msra.mxu0 %v330
    %358 = vmatprep.subr.mxu0 0.0
    %359 = vmatpush1.msra.mxu0 %v331
    %360 = vmatprep.subr.mxu0 0.0
    %361 = vmatpush1.msra.mxu0 %v332
    %362 = vmatprep.subr.mxu0 0.0
    %363 = vmatpush1.msra.mxu0 %v333
    %364 = vmatprep.subr.mxu0 0.0
    %365 = vmatpush1.msra.mxu0 %v334
    %366 = vmatprep.subr.mxu0 0.0
    %367 = vmatpush1.msra.mxu0 %v335
    %368 = vmatprep.subr.mxu0 0.0
    %369 = vmatpush1.msra.mxu0 0.0
    %370 = vmatprep.subr.mxu0 0.0
    %371 = vmatpush1.msra.mxu0 0.0
    %372 = vmatprep.subr.mxu0 0.0
    %373 = vmatpush1.msra.mxu0 0.0
    %374 = vmatprep.subr.mxu0 0.0
    %375 = vmatpush1.msra.mxu0 0.0
    %376 = vmatprep.subr.mxu0 0.0
    %377 = vmatpush1.msra.mxu0 0.0
    %378 = vmatprep.subr.mxu0 0.0
    %379 = vmatpush1.msra.mxu0 0.0
    %380 = vmatprep.subr.mxu0 0.0
    %381 = vmatpush1.msra.mxu0 0.0
    %382 = vmatprep.subr.mxu0 0.0
    %383 = vmatpush1.msra.mxu0 0.0
    %384 = vmatprep.subr.mxu0 0.0
    %385 = vmatpush1.msra.mxu0 0.0
    %386 = vmatprep.subr.mxu0 0.0
    %387 = vmatpush1.msra.mxu0 0.0
    %388 = vmatprep.subr.mxu0 0.0
    %389 = vmatpush1.msra.mxu0 0.0
    %390 = vmatprep.subr.mxu0 0.0
    %391 = vmatpush1.msra.mxu0 0.0
    %392 = vmatprep.subr.mxu0 0.0
    %393 = vmatpush1.msra.mxu0 0.0
    %394 = vmatprep.subr.mxu0 0.0
    %395 = vmatpush1.msra.mxu0 0.0
    %396 = vmatprep.subr.mxu0 0.0
    %397 = vmatpush1.msra.mxu0 0.0
    %398 = vmatprep.subr.mxu0 0.0
    %399 = vmatpush1.msra.mxu0 0.0
    %400 = vmatprep.mubr.f32.mxu0 0.0
    %401 = vmatmul.mubr.f32.gmra.mrb[0].mxu0 0.0
    %v402 = vpop.f32.mrb[0].mxu0
    %v403 = vadd.f32 0.0, %v402
    %v404 = vpop.f32.mrb[0].mxu0
    %405 = vmatprep.mubr.f32.mxu0 0.0
    %406 = vmatmul.mubr.f32.gmra.mrb[0].mxu0 0.0
    %v407 = vpop.f32.mrb[0].mxu0
    %v408 = vadd.f32 0.0, %v407
    %v409 = vpop.f32.mrb[0].mxu0
    %410 = vmatprep.mubr.f32.mxu0 0.0
    %411 = vmatmul.mubr.f32.gmra.mrb[0].mxu0 0.0
    %v412 = vpop.f32.mrb[0].mxu0
    %v413 = vadd.f32 0.0, %v412
    %v414 = vpop.f32.mrb[0].mxu0
    %415 = vmatprep.mubr.f32.mxu0 0.0
    %416 = vmatmul.mubr.f32.gmra.mrb[0].mxu0 0.0
    %v417 = vpop.f32.mrb[0].mxu0
    %v418 = vadd.f32 0.0, %v417
    %v419 = vpop.f32.mrb[0].mxu0
    %420 = vmatprep.mubr.f32.mxu0 0.0
    %421 = vmatmul.mubr.f32.gmra.mrb[0].mxu0 0.0
    %v422 = vpop.f32.mrb[0].mxu0
    %v423 = vadd.f32 0.0, %v422
    %v424 = vpop.f32.mrb[0].mxu0
    %425 = vmatprep.mubr.f32.mxu0 0.0
    %426 = vmatmul.mubr.f32.gmra.mrb[0].mxu0 0.0
    %v427 = vpop.f32.mrb[0].mxu0
    %v428 = vadd.f32 0.0, %v427
    %v429 = vpop.f32.mrb[0].mxu0
    %430 = vmatprep.mubr.f32.mxu0 0.0
    %431 = vmatmul.mubr.f32.gmra.mrb[0].mxu0 0.0
    %v432 = vpop.f32.mrb[0].mxu0
    %v433 = vadd.f32 0.0, %v432
    %v434 = vpop.f32.mrb[0].mxu0
    %435 = vmatprep.mubr.f32.mxu0 0.0
    %436 = vmatmul.mubr.f32.gmra.mrb[0].mxu0 0.0
    %v437 = vpop.f32.mrb[0].mxu0
    %v438 = vadd.f32 0.0, %v437
    %v439 = vpop.f32.mrb[0].mxu0
    %440 = vmatprep.mubr.f32.mxu0 0.0
    %441 = vmatmul.mubr.f32.gmra.mrb[0].mxu0 0.0
    %v442 = vpop.f32.mrb[0].mxu0
    %v443 = vadd.f32 0.0, %v442
    %v444 = vpop.f32.mrb[0].mxu0
    %445 = vmatprep.mubr.f32.mxu0 0.0
    %446 = vmatmul.mubr.f32.gmra.mrb[0].mxu0 0.0
    %v447 = vpop.f32.mrb[0].mxu0
    %v448 = vadd.f32 0.0, %v447
    %v449 = vpop.f32.mrb[0].mxu0
    %450 = vmatprep.mubr.f32.mxu0 0.0
    %451 = vmatmul.mubr.f32.gmra.mrb[0].mxu0 0.0
    %v452 = vpop.f32.mrb[0].mxu0
    %v453 = vadd.f32 0.0, %v452
    %v454 = vpop.f32.mrb[0].mxu0
    %455 = vmatprep.mubr.f32.mxu0 0.0
    %456 = vmatmul.mubr.f32.gmra.mrb[0].mxu0 0.0
    %v457 = vpop.f32.mrb[0].mxu0
    %v458 = vadd.f32 0.0, %v457
    %v459 = vpop.f32.mrb[0].mxu0
    %460 = vmatprep.mubr.f32.mxu0 0.0
    %461 = vmatmul.mubr.f32.gmra.mrb[0].mxu0 0.0
    %v462 = vpop.f32.mrb[0].mxu0
    %v463 = vadd.f32 0.0, %v462
    %v464 = vpop.f32.mrb[0].mxu0
    %465 = vmatprep.mubr.f32.mxu0 0.0
    %466 = vmatmul.mubr.f32.gmra.mrb[0].mxu0 0.0
    %v467 = vpop.f32.mrb[0].mxu0
    %v468 = vadd.f32 0.0, %v467
    %v469 = vpop.f32.mrb[0].mxu0
    %470 = vmatprep.mubr.f32.mxu0 0.0
    %471 = vmatmul.mubr.f32.gmra.mrb[0].mxu0 0.0
    %v472 = vpop.f32.mrb[0].mxu0
    %v473 = vadd.f32 0.0, %v472
    %v474 = vpop.f32.mrb[0].mxu0
    %475 = vmatprep.mubr.f32.mxu0 0.0
    %476 = vmatmul.mubr.f32.gmra.mrb[0].mxu0 0.0
    %v477 = vpop.f32.mrb[0].mxu0
    %v478 = vadd.f32 0.0, %v477
    %v479 = vpop.f32.mrb[0].mxu0
    %480 = vdwg.mxu0
    %481 = vmatprep.subr.mxu0 0.0
    %482 = vmatpush1.msra.mxu0 %v304
    %483 = vmatprep.subr.mxu0 0.0
    %484 = vmatpush1.msra.mxu0 %v305
    %485 = vmatprep.subr.mxu0 0.0
    %486 = vmatpush1.msra.mxu0 %v306
    %487 = vmatprep.subr.mxu0 0.0
    %488 = vmatpush1.msra.mxu0 %v307
    %489 = vmatprep.subr.mxu0 0.0
    %490 = vmatpush1.msra.mxu0 %v308
    %491 = vmatprep.subr.mxu0 0.0
    %492 = vmatpush1.msra.mxu0 %v309
    %493 = vmatprep.subr.mxu0 0.0
    %494 = vmatpush1.msra.mxu0 %v310
    %495 = vmatprep.subr.mxu0 0.0
    %496 = vmatpush1.msra.mxu0 %v311
    %497 = vmatprep.subr.mxu0 0.0
    %498 = vmatpush1.msra.mxu0 %v312
    %499 = vmatprep.subr.mxu0 0.0
    %500 = vmatpush1.msra.mxu0 %v313
    %501 = vmatprep.subr.mxu0 0.0
    %502 = vmatpush1.msra.mxu0 %v314
    %503 = vmatprep.subr.mxu0 0.0
    %504 = vmatpush1.msra.mxu0 %v315
    %505 = vmatprep.subr.mxu0 0.0
    %506 = vmatpush1.msra.mxu0 %v316
    %507 = vmatprep.subr.mxu0 0.0
    %508 = vmatpush1.msra.mxu0 %v317
    %509 = vmatprep.subr.mxu0 0.0
    %510 = vmatpush1.msra.mxu0 %v318
    %511 = vmatprep.subr.mxu0 0.0
    %512 = vmatpush1.msra.mxu0 %v319
    %513 = vmatprep.subr.mxu0 0.0
    %514 = vmatpush1.msra.mxu0 0.0
    %515 = vmatprep.subr.mxu0 0.0
    %516 = vmatpush1.msra.mxu0 0.0
    %517 = vmatprep.subr.mxu0 0.0
    %518 = vmatpush1.msra.mxu0 0.0
    %519 = vmatprep.subr.mxu0 0.0
    %520 = vmatpush1.msra.mxu0 0.0
    %521 = vmatprep.subr.mxu0 0.0
    %522 = vmatpush1.msra.mxu0 0.0
    %523 = vmatprep.subr.mxu0 0.0
    %524 = vmatpush1.msra.mxu0 0.0
    %525 = vmatprep.subr.mxu0 0.0
    %526 = vmatpush1.msra.mxu0 0.0
    %527 = vmatprep.subr.mxu0 0.0
    %528 = vmatpush1.msra.mxu0 0.0
    %529 = vmatprep.subr.mxu0 0.0
    %530 = vmatpush1.msra.mxu0 0.0
    %531 = vmatprep.subr.mxu0 0.0
    %532 = vmatpush1.msra.mxu0 0.0
    %533 = vmatprep.subr.mxu0 0.0
    %534 = vmatpush1.msra.mxu0 0.0
    %535 = vmatprep.subr.mxu0 0.0
    %536 = vmatpush1.msra.mxu0 0.0
    %537 = vmatprep.subr.mxu0 0.0
    %538 = vmatpush1.msra.mxu0 0.0
    %539 = vmatprep.subr.mxu0 0.0
    %540 = vmatpush1.msra.mxu0 0.0
    %541 = vmatprep.subr.mxu0 0.0
    %542 = vmatpush1.msra.mxu0 0.0
    %543 = vmatprep.subr.mxu0 0.0
    %544 = vmatpush1.msra.mxu0 0.0
    %545 = vmatprep.mubr.f32.mxu0 0.0
    %546 = vmatmul.mubr.f32.gmra.mrb[0].mxu0 %v288
    %v547 = vpop.f32.mrb[0].mxu0
    %v548 = vadd.f32 %v403, %v547
    %v549 = vpop.f32.mrb[0].mxu0
    %550 = vmatprep.mubr.f32.mxu0 0.0
    %551 = vmatmul.mubr.f32.gmra.mrb[0].mxu0 %v289
    %v552 = vpop.f32.mrb[0].mxu0
    %v553 = vadd.f32 %v408, %v552
    %v554 = vpop.f32.mrb[0].mxu0
    %555 = vmatprep.mubr.f32.mxu0 0.0
    %556 = vmatmul.mubr.f32.gmra.mrb[0].mxu0 %v290
    %v557 = vpop.f32.mrb[0].mxu0
    %v558 = vadd.f32 %v413, %v557
    %v559 = vpop.f32.mrb[0].mxu0
    %560 = vmatprep.mubr.f32.mxu0 0.0
    %561 = vmatmul.mubr.f32.gmra.mrb[0].mxu0 %v291
    %v562 = vpop.f32.mrb[0].mxu0
    %v563 = vadd.f32 %v418, %v562
    %v564 = vpop.f32.mrb[0].mxu0
    %565 = vmatprep.mubr.f32.mxu0 0.0
    %566 = vmatmul.mubr.f32.gmra.mrb[0].mxu0 %v292
    %v567 = vpop.f32.mrb[0].mxu0
    %v568 = vadd.f32 %v423, %v567
    %v569 = vpop.f32.mrb[0].mxu0
    %570 = vmatprep.mubr.f32.mxu0 0.0
    %571 = vmatmul.mubr.f32.gmra.mrb[0].mxu0 %v293
    %v572 = vpop.f32.mrb[0].mxu0
    %v573 = vadd.f32 %v428, %v572
    %v574 = vpop.f32.mrb[0].mxu0
    %575 = vmatprep.mubr.f32.mxu0 0.0
    %576 = vmatmul.mubr.f32.gmra.mrb[0].mxu0 %v294
    %v577 = vpop.f32.mrb[0].mxu0
    %v578 = vadd.f32 %v433, %v577
    %v579 = vpop.f32.mrb[0].mxu0
    %580 = vmatprep.mubr.f32.mxu0 0.0
    %581 = vmatmul.mubr.f32.gmra.mrb[0].mxu0 %v295
    %v582 = vpop.f32.mrb[0].mxu0
    %v583 = vadd.f32 %v438, %v582
    %v584 = vpop.f32.mrb[0].mxu0
    %585 = vmatprep.mubr.f32.mxu0 0.0
    %586 = vmatmul.mubr.f32.gmra.mrb[0].mxu0 %v296
    %v587 = vpop.f32.mrb[0].mxu0
    %v588 = vadd.f32 %v443, %v587
    %v589 = vpop.f32.mrb[0].mxu0
    %590 = vmatprep.mubr.f32.mxu0 0.0
    %591 = vmatmul.mubr.f32.gmra.mrb[0].mxu0 %v297
    %v592 = vpop.f32.mrb[0].mxu0
    %v593 = vadd.f32 %v448, %v592
    %v594 = vpop.f32.mrb[0].mxu0
    %595 = vmatprep.mubr.f32.mxu0 0.0
    %596 = vmatmul.mubr.f32.gmra.mrb[0].mxu0 %v298
    %v597 = vpop.f32.mrb[0].mxu0
    %v598 = vadd.f32 %v453, %v597
    %v599 = vpop.f32.mrb[0].mxu0
    %600 = vmatprep.mubr.f32.mxu0 0.0
    %601 = vmatmul.mubr.f32.gmra.mrb[0].mxu0 %v299
    %v602 = vpop.f32.mrb[0].mxu0
    %v603 = vadd.f32 %v458, %v602
    %v604 = vpop.f32.mrb[0].mxu0
    %605 = vmatprep.mubr.f32.mxu0 0.0
    %606 = vmatmul.mubr.f32.gmra.mrb[0].mxu0 %v300
    %v607 = vpop.f32.mrb[0].mxu0
    %v608 = vadd.f32 %v463, %v607
    %v609 = vpop.f32.mrb[0].mxu0
    %610 = vmatprep.mubr.f32.mxu0 0.0
    %611 = vmatmul.mubr.f32.gmra.mrb[0].mxu0 %v301
    %v612 = vpop.f32.mrb[0].mxu0
    %v613 = vadd.f32 %v468, %v612
    %v614 = vpop.f32.mrb[0].mxu0
    %615 = vmatprep.mubr.f32.mxu0 0.0
    %616 = vmatmul.mubr.f32.gmra.mrb[0].mxu0 %v302
    %v617 = vpop.f32.mrb[0].mxu0
    %v618 = vadd.f32 %v473, %v617
    %v619 = vpop.f32.mrb[0].mxu0
    %620 = vmatprep.mubr.f32.mxu0 0.0
    %621 = vmatmul.mubr.f32.gmra.mrb[0].mxu0 %v303
    %v622 = vpop.f32.mrb[0].mxu0
    %v623 = vadd.f32 %v478, %v622
    %v624 = vpop.f32.mrb[0].mxu0
    %625 = vdwg.mxu0
    %v626 = vld [vmem:[%s4] sm:$0x1]
    %v628 = vlaneseq
    %v629 = vshrl.u32 %v628, 7
    %v630 = vsub.s32 0, %v629
    %v631 = vrot.slane %v626, %v630
    %v633 = vadd.f32 %v548, %v631
    %v634 = vadd.f32 %v553, %v631
    %v635 = vadd.f32 %v558, %v631
    %v636 = vadd.f32 %v563, %v631
    %v637 = vadd.f32 %v568, %v631
    %v638 = vadd.f32 %v573, %v631
    %v639 = vadd.f32 %v578, %v631
    %v640 = vadd.f32 %v583, %v631
    %v641 = vadd.f32 %v588, %v631
    %v642 = vadd.f32 %v593, %v631
    %v643 = vadd.f32 %v598, %v631
    %v644 = vadd.f32 %v603, %v631
    %v645 = vadd.f32 %v608, %v631
    %v646 = vadd.f32 %v613, %v631
    %v647 = vadd.f32 %v618, %v631
    %v648 = vadd.f32 %v623, %v631
    %v649 = vtanh.pop %v633
    %v650 = vtanh.pop %v634
    %v651 = vtanh.pop %v635
    %v652 = vtanh.pop %v636
    %v653 = vtanh.pop %v637
    %v654 = vtanh.pop %v638
    %v655 = vtanh.pop %v639
    %v656 = vtanh.pop %v640
    %v657 = vtanh.pop %v641
    %v658 = vtanh.pop %v642
    %v659 = vtanh.pop %v643
    %v660 = vtanh.pop %v644
    %v661 = vtanh.pop %v645
    %v662 = vtanh.pop %v646
    %v663 = vtanh.pop %v647
    %v664 = vtanh.pop %v648
    %s665 = scalar_lea.vmem [#allocation2], 128
    %v666 = vld [vmem:[%s665] sm:$0xff]
    %v667 = vld [vmem:[%s665 + $0x8] sm:$0xff]
    %v668 = vld [vmem:[%s665 + $0x10] sm:$0xff]
    %v669 = vld [vmem:[%s665 + $0x18] sm:$0xff]
    %v670 = vld [vmem:[%s665 + $0x20] sm:$0xff]
    %v671 = vld [vmem:[%s665 + $0x28] sm:$0xff]
    %v672 = vld [vmem:[%s665 + $0x30] sm:$0xff]
    %v673 = vld [vmem:[%s665 + $0x38] sm:$0xff]
    %v674 = vld [vmem:[%s665 + $0x40] sm:$0xff]
    %v675 = vld [vmem:[%s665 + $0x48] sm:$0xff]
    %v676 = vld [vmem:[%s665 + $0x50] sm:$0xff]
    %v677 = vld [vmem:[%s665 + $0x58] sm:$0xff]
    %v678 = vld [vmem:[%s665 + $0x60] sm:$0xff]
    %v679 = vld [vmem:[%s665 + $0x68] sm:$0xff]
    %v680 = vld [vmem:[%s665 + $0x70] sm:$0xff]
    %v681 = vld [vmem:[%s665 + $0x78] sm:$0xff]
    %682 = vmatprep.subr.mxu0 0.0
    %683 = vmatpush1.msra.mxu0 %v111
    %684 = vmatprep.subr.mxu0 0.0
    %685 = vmatpush1.msra.mxu0 %v112
    %686 = vmatprep.subr.mxu0 0.0
    %687 = vmatpush1.msra.mxu0 %v113
    %688 = vmatprep.subr.mxu0 0.0
    %689 = vmatpush1.msra.mxu0 %v114
    %690 = vmatprep.subr.mxu0 0.0
    %691 = vmatpush1.msra.mxu0 %v115
    %692 = vmatprep.subr.mxu0 0.0
    %693 = vmatpush1.msra.mxu0 %v116
    %694 = vmatprep.subr.mxu0 0.0
    %695 = vmatpush1.msra.mxu0 %v117
    %696 = vmatprep.subr.mxu0 0.0
    %697 = vmatpush1.msra.mxu0 %v118
    %698 = vmatprep.subr.mxu0 0.0
    %699 = vmatpush1.msra.mxu0 %v119
    %700 = vmatprep.subr.mxu0 0.0
    %701 = vmatpush1.msra.mxu0 %v120
    %702 = vmatprep.subr.mxu0 0.0
    %703 = vmatpush1.msra.mxu0 %v121
    %704 = vmatprep.subr.mxu0 0.0
    %705 = vmatpush1.msra.mxu0 %v122
    %706 = vmatprep.subr.mxu0 0.0
    %707 = vmatpush1.msra.mxu0 %v123
    %708 = vmatprep.subr.mxu0 0.0
    %709 = vmatpush1.msra.mxu0 %v124
    %710 = vmatprep.subr.mxu0 0.0
    %711 = vmatpush1.msra.mxu0 %v125
    %712 = vmatprep.subr.mxu0 0.0
    %713 = vmatpush1.msra.mxu0 %v126
    %714 = vmatprep.subr.mxu0 0.0
    %715 = vmatpush1.msra.mxu0 0.0
    %716 = vmatprep.subr.mxu0 0.0
    %717 = vmatpush1.msra.mxu0 0.0
    %718 = vmatprep.subr.mxu0 0.0
    %719 = vmatpush1.msra.mxu0 0.0
    %720 = vmatprep.subr.mxu0 0.0
    %721 = vmatpush1.msra.mxu0 0.0
    %722 = vmatprep.subr.mxu0 0.0
    %723 = vmatpush1.msra.mxu0 0.0
    %724 = vmatprep.subr.mxu0 0.0
    %725 = vmatpush1.msra.mxu0 0.0
    %726 = vmatprep.subr.mxu0 0.0
    %727 = vmatpush1.msra.mxu0 0.0
    %728 = vmatprep.subr.mxu0 0.0
    %729 = vmatpush1.msra.mxu0 0.0
    %730 = vmatprep.subr.mxu0 0.0
    %731 = vmatpush1.msra.mxu0 0.0
    %732 = vmatprep.subr.mxu0 0.0
    %733 = vmatpush1.msra.mxu0 0.0
    %734 = vmatprep.subr.mxu0 0.0
    %735 = vmatpush1.msra.mxu0 0.0
    %736 = vmatprep.subr.mxu0 0.0
    %737 = vmatpush1.msra.mxu0 0.0
    %738 = vmatprep.subr.mxu0 0.0
    %739 = vmatpush1.msra.mxu0 0.0
    %740 = vmatprep.subr.mxu0 0.0
    %741 = vmatpush1.msra.mxu0 0.0
    %742 = vmatprep.subr.mxu0 0.0
    %743 = vmatpush1.msra.mxu0 0.0
    %744 = vmatprep.subr.mxu0 0.0
    %745 = vmatpush1.msra.mxu0 0.0
    %746 = vmatprep.mubr.f32.mxu0 0.0
    %747 = vmatmul.mubr.f32.gmra.mrb[0].mxu0 %v288
    %v748 = vpop.f32.mrb[0].mxu0
    %v749 = vadd.f32 0.0, %v748
    %v750 = vpop.f32.mrb[0].mxu0
    %751 = vmatprep.mubr.f32.mxu0 0.0
    %752 = vmatmul.mubr.f32.gmra.mrb[0].mxu0 %v289
    %v753 = vpop.f32.mrb[0].mxu0
    %v754 = vadd.f32 0.0, %v753
    %v755 = vpop.f32.mrb[0].mxu0
    %756 = vmatprep.mubr.f32.mxu0 0.0
    %757 = vmatmul.mubr.f32.gmra.mrb[0].mxu0 %v290
    %v758 = vpop.f32.mrb[0].mxu0
    %v759 = vadd.f32 0.0, %v758
    %v760 = vpop.f32.mrb[0].mxu0
    %761 = vmatprep.mubr.f32.mxu0 0.0
    %762 = vmatmul.mubr.f32.gmra.mrb[0].mxu0 %v291
    %v763 = vpop.f32.mrb[0].mxu0
    %v764 = vadd.f32 0.0, %v763
    %v765 = vpop.f32.mrb[0].mxu0
    %766 = vmatprep.mubr.f32.mxu0 0.0
    %767 = vmatmul.mubr.f32.gmra.mrb[0].mxu0 %v292
    %v768 = vpop.f32.mrb[0].mxu0
    %v769 = vadd.f32 0.0, %v768
    %v770 = vpop.f32.mrb[0].mxu0
    %771 = vmatprep.mubr.f32.mxu0 0.0
    %772 = vmatmul.mubr.f32.gmra.mrb[0].mxu0 %v293
    %v773 = vpop.f32.mrb[0].mxu0
    %v774 = vadd.f32 0.0, %v773
    %v775 = vpop.f32.mrb[0].mxu0
    %776 = vmatprep.mubr.f32.mxu0 0.0
    %777 = vmatmul.mubr.f32.gmra.mrb[0].mxu0 %v294
    %v778 = vpop.f32.mrb[0].mxu0
    %v779 = vadd.f32 0.0, %v778
    %v780 = vpop.f32.mrb[0].mxu0
    %781 = vmatprep.mubr.f32.mxu0 0.0
    %782 = vmatmul.mubr.f32.gmra.mrb[0].mxu0 %v295
    %v783 = vpop.f32.mrb[0].mxu0
    %v784 = vadd.f32 0.0, %v783
    %v785 = vpop.f32.mrb[0].mxu0
    %786 = vmatprep.mubr.f32.mxu0 0.0
    %787 = vmatmul.mubr.f32.gmra.mrb[0].mxu0 %v296
    %v788 = vpop.f32.mrb[0].mxu0
    %v789 = vadd.f32 0.0, %v788
    %v790 = vpop.f32.mrb[0].mxu0
    %791 = vmatprep.mubr.f32.mxu0 0.0
    %792 = vmatmul.mubr.f32.gmra.mrb[0].mxu0 %v297
    %v793 = vpop.f32.mrb[0].mxu0
    %v794 = vadd.f32 0.0, %v793
    %v795 = vpop.f32.mrb[0].mxu0
    %796 = vmatprep.mubr.f32.mxu0 0.0
    %797 = vmatmul.mubr.f32.gmra.mrb[0].mxu0 %v298
    %v798 = vpop.f32.mrb[0].mxu0
    %v799 = vadd.f32 0.0, %v798
    %v800 = vpop.f32.mrb[0].mxu0
    %801 = vmatprep.mubr.f32.mxu0 0.0
    %802 = vmatmul.mubr.f32.gmra.mrb[0].mxu0 %v299
    %v803 = vpop.f32.mrb[0].mxu0
    %v804 = vadd.f32 0.0, %v803
    %v805 = vpop.f32.mrb[0].mxu0
    %806 = vmatprep.mubr.f32.mxu0 0.0
    %807 = vmatmul.mubr.f32.gmra.mrb[0].mxu0 %v300
    %v808 = vpop.f32.mrb[0].mxu0
    %v809 = vadd.f32 0.0, %v808
    %v810 = vpop.f32.mrb[0].mxu0
    %811 = vmatprep.mubr.f32.mxu0 0.0
    %812 = vmatmul.mubr.f32.gmra.mrb[0].mxu0 %v301
    %v813 = vpop.f32.mrb[0].mxu0
    %v814 = vadd.f32 0.0, %v813
    %v815 = vpop.f32.mrb[0].mxu0
    %816 = vmatprep.mubr.f32.mxu0 0.0
    %817 = vmatmul.mubr.f32.gmra.mrb[0].mxu0 %v302
    %v818 = vpop.f32.mrb[0].mxu0
    %v819 = vadd.f32 0.0, %v818
    %v820 = vpop.f32.mrb[0].mxu0
    %821 = vmatprep.mubr.f32.mxu0 0.0
    %822 = vmatmul.mubr.f32.gmra.mrb[0].mxu0 %v303
    %v823 = vpop.f32.mrb[0].mxu0
    %v824 = vadd.f32 0.0, %v823
    %v825 = vpop.f32.mrb[0].mxu0
    %826 = vdwg.mxu0
    %v827 = vadd.f32 %v666, %v749
    %v828 = vadd.f32 %v667, %v754
    %v829 = vadd.f32 %v668, %v759
    %v830 = vadd.f32 %v669, %v764
    %v831 = vadd.f32 %v670, %v769
    %v832 = vadd.f32 %v671, %v774
    %v833 = vadd.f32 %v672, %v779
    %v834 = vadd.f32 %v673, %v784
    %v835 = vadd.f32 %v674, %v789
    %v836 = vadd.f32 %v675, %v794
    %v837 = vadd.f32 %v676, %v799
    %v838 = vadd.f32 %v677, %v804
    %v839 = vadd.f32 %v678, %v809
    %v840 = vadd.f32 %v679, %v814
    %v841 = vadd.f32 %v680, %v819
    %v842 = vadd.f32 %v681, %v824
    %v843 = vtanh.pop %v827
    %v844 = vtanh.pop %v828
    %v845 = vtanh.pop %v829
    %v846 = vtanh.pop %v830
    %v847 = vtanh.pop %v831
    %v848 = vtanh.pop %v832
    %v849 = vtanh.pop %v833
    %v850 = vtanh.pop %v834
    %v851 = vtanh.pop %v835
    %v852 = vtanh.pop %v836
    %v853 = vtanh.pop %v837
    %v854 = vtanh.pop %v838
    %v855 = vtanh.pop %v839
    %v856 = vtanh.pop %v840
    %v857 = vtanh.pop %v841
    %v858 = vtanh.pop %v842
    %859 = vmatprep.subr.mxu0 0.0
    %860 = vmatpush1.msra.mxu0 %v320
    %861 = vmatprep.subr.mxu0 0.0
    %862 = vmatpush1.msra.mxu0 %v321
    %863 = vmatprep.subr.mxu0 0.0
    %864 = vmatpush1.msra.mxu0 %v322
    %865 = vmatprep.subr.mxu0 0.0
    %866 = vmatpush1.msra.mxu0 %v323
    %867 = vmatprep.subr.mxu0 0.0
    %868 = vmatpush1.msra.mxu0 %v324
    %869 = vmatprep.subr.mxu0 0.0
    %870 = vmatpush1.msra.mxu0 %v325
    %871 = vmatprep.subr.mxu0 0.0
    %872 = vmatpush1.msra.mxu0 %v326
    %873 = vmatprep.subr.mxu0 0.0
    %874 = vmatpush1.msra.mxu0 %v327
    %875 = vmatprep.subr.mxu0 0.0
    %876 = vmatpush1.msra.mxu0 %v328
    %877 = vmatprep.subr.mxu0 0.0
    %878 = vmatpush1.msra.mxu0 %v329
    %879 = vmatprep.subr.mxu0 0.0
    %880 = vmatpush1.msra.mxu0 %v330
    %881 = vmatprep.subr.mxu0 0.0
    %882 = vmatpush1.msra.mxu0 %v331
    %883 = vmatprep.subr.mxu0 0.0
    %884 = vmatpush1.msra.mxu0 %v332
    %885 = vmatprep.subr.mxu0 0.0
    %886 = vmatpush1.msra.mxu0 %v333
    %887 = vmatprep.subr.mxu0 0.0
    %888 = vmatpush1.msra.mxu0 %v334
    %889 = vmatprep.subr.mxu0 0.0
    %890 = vmatpush1.msra.mxu0 %v335
    %891 = vmatprep.subr.mxu0 0.0
    %892 = vmatpush1.msra.mxu0 0.0
    %893 = vmatprep.subr.mxu0 0.0
    %894 = vmatpush1.msra.mxu0 0.0
    %895 = vmatprep.subr.mxu0 0.0
    %896 = vmatpush1.msra.mxu0 0.0
    %897 = vmatprep.subr.mxu0 0.0
    %898 = vmatpush1.msra.mxu0 0.0
    %899 = vmatprep.subr.mxu0 0.0
    %900 = vmatpush1.msra.mxu0 0.0
    %901 = vmatprep.subr.mxu0 0.0
    %902 = vmatpush1.msra.mxu0 0.0
    %903 = vmatprep.subr.mxu0 0.0
    %904 = vmatpush1.msra.mxu0 0.0
    %905 = vmatprep.subr.mxu0 0.0
    %906 = vmatpush1.msra.mxu0 0.0
    %907 = vmatprep.subr.mxu0 0.0
    %908 = vmatpush1.msra.mxu0 0.0
    %909 = vmatprep.subr.mxu0 0.0
    %910 = vmatpush1.msra.mxu0 0.0
    %911 = vmatprep.subr.mxu0 0.0
    %912 = vmatpush1.msra.mxu0 0.0
    %913 = vmatprep.subr.mxu0 0.0
    %914 = vmatpush1.msra.mxu0 0.0
    %915 = vmatprep.subr.mxu0 0.0
    %916 = vmatpush1.msra.mxu0 0.0
    %917 = vmatprep.subr.mxu0 0.0
    %918 = vmatpush1.msra.mxu0 0.0
    %919 = vmatprep.subr.mxu0 0.0
    %920 = vmatpush1.msra.mxu0 0.0
    %921 = vmatprep.subr.mxu0 0.0
    %922 = vmatpush1.msra.mxu0 0.0
    %923 = vmatprep.mubr.f32.mxu0 0.0
    %924 = vmatmul.mubr.f32.gmra.mrb[0].mxu0 %v649
    %v925 = vpop.f32.mrb[0].mxu0
    %v926 = vadd.f32 0.0, %v925
    %v927 = vpop.f32.mrb[0].mxu0
    %928 = vmatprep.mubr.f32.mxu0 0.0
    %929 = vmatmul.mubr.f32.gmra.mrb[0].mxu0 %v650
    %v930 = vpop.f32.mrb[0].mxu0
    %v931 = vadd.f32 0.0, %v930
    %v932 = vpop.f32.mrb[0].mxu0
    %933 = vmatprep.mubr.f32.mxu0 0.0
    %934 = vmatmul.mubr.f32.gmra.mrb[0].mxu0 %v651
    %v935 = vpop.f32.mrb[0].mxu0
    %v936 = vadd.f32 0.0, %v935
    %v937 = vpop.f32.mrb[0].mxu0
    %938 = vmatprep.mubr.f32.mxu0 0.0
    %939 = vmatmul.mubr.f32.gmra.mrb[0].mxu0 %v652
    %v940 = vpop.f32.mrb[0].mxu0
    %v941 = vadd.f32 0.0, %v940
    %v942 = vpop.f32.mrb[0].mxu0
    %943 = vmatprep.mubr.f32.mxu0 0.0
    %944 = vmatmul.mubr.f32.gmra.mrb[0].mxu0 %v653
    %v945 = vpop.f32.mrb[0].mxu0
    %v946 = vadd.f32 0.0, %v945
    %v947 = vpop.f32.mrb[0].mxu0
    %948 = vmatprep.mubr.f32.mxu0 0.0
    %949 = vmatmul.mubr.f32.gmra.mrb[0].mxu0 %v654
    %v950 = vpop.f32.mrb[0].mxu0
    %v951 = vadd.f32 0.0, %v950
    %v952 = vpop.f32.mrb[0].mxu0
    %953 = vmatprep.mubr.f32.mxu0 0.0
    %954 = vmatmul.mubr.f32.gmra.mrb[0].mxu0 %v655
    %v955 = vpop.f32.mrb[0].mxu0
    %v956 = vadd.f32 0.0, %v955
    %v957 = vpop.f32.mrb[0].mxu0
    %958 = vmatprep.mubr.f32.mxu0 0.0
    %959 = vmatmul.mubr.f32.gmra.mrb[0].mxu0 %v656
    %v960 = vpop.f32.mrb[0].mxu0
    %v961 = vadd.f32 0.0, %v960
    %v962 = vpop.f32.mrb[0].mxu0
    %963 = vmatprep.mubr.f32.mxu0 0.0
    %964 = vmatmul.mubr.f32.gmra.mrb[0].mxu0 %v657
    %v965 = vpop.f32.mrb[0].mxu0
    %v966 = vadd.f32 0.0, %v965
    %v967 = vpop.f32.mrb[0].mxu0
    %968 = vmatprep.mubr.f32.mxu0 0.0
    %969 = vmatmul.mubr.f32.gmra.mrb[0].mxu0 %v658
    %v970 = vpop.f32.mrb[0].mxu0
    %v971 = vadd.f32 0.0, %v970
    %v972 = vpop.f32.mrb[0].mxu0
    %973 = vmatprep.mubr.f32.mxu0 0.0
    %974 = vmatmul.mubr.f32.gmra.mrb[0].mxu0 %v659
    %v975 = vpop.f32.mrb[0].mxu0
    %v976 = vadd.f32 0.0, %v975
    %v977 = vpop.f32.mrb[0].mxu0
    %978 = vmatprep.mubr.f32.mxu0 0.0
    %979 = vmatmul.mubr.f32.gmra.mrb[0].mxu0 %v660
    %v980 = vpop.f32.mrb[0].mxu0
    %v981 = vadd.f32 0.0, %v980
    %v982 = vpop.f32.mrb[0].mxu0
    %983 = vmatprep.mubr.f32.mxu0 0.0
    %984 = vmatmul.mubr.f32.gmra.mrb[0].mxu0 %v661
    %v985 = vpop.f32.mrb[0].mxu0
    %v986 = vadd.f32 0.0, %v985
    %v987 = vpop.f32.mrb[0].mxu0
    %988 = vmatprep.mubr.f32.mxu0 0.0
    %989 = vmatmul.mubr.f32.gmra.mrb[0].mxu0 %v662
    %v990 = vpop.f32.mrb[0].mxu0
    %v991 = vadd.f32 0.0, %v990
    %v992 = vpop.f32.mrb[0].mxu0
    %993 = vmatprep.mubr.f32.mxu0 0.0
    %994 = vmatmul.mubr.f32.gmra.mrb[0].mxu0 %v663
    %v995 = vpop.f32.mrb[0].mxu0
    %v996 = vadd.f32 0.0, %v995
    %v997 = vpop.f32.mrb[0].mxu0
    %998 = vmatprep.mubr.f32.mxu0 0.0
    %999 = vmatmul.mubr.f32.gmra.mrb[0].mxu0 %v664
    %v1000 = vpop.f32.mrb[0].mxu0
    %v1001 = vadd.f32 0.0, %v1000
    %v1002 = vpop.f32.mrb[0].mxu0
    %1003 = vdwg.mxu0
    %1004 = vmatprep.subr.mxu0 0.0
    %1005 = vmatpush1.msra.mxu0 %v304
    %1006 = vmatprep.subr.mxu0 0.0
    %1007 = vmatpush1.msra.mxu0 %v305
    %1008 = vmatprep.subr.mxu0 0.0
    %1009 = vmatpush1.msra.mxu0 %v306
    %1010 = vmatprep.subr.mxu0 0.0
    %1011 = vmatpush1.msra.mxu0 %v307
    %1012 = vmatprep.subr.mxu0 0.0
    %1013 = vmatpush1.msra.mxu0 %v308
    %1014 = vmatprep.subr.mxu0 0.0
    %1015 = vmatpush1.msra.mxu0 %v309
    %1016 = vmatprep.subr.mxu0 0.0
    %1017 = vmatpush1.msra.mxu0 %v310
    %1018 = vmatprep.subr.mxu0 0.0
    %1019 = vmatpush1.msra.mxu0 %v311
    %1020 = vmatprep.subr.mxu0 0.0
    %1021 = vmatpush1.msra.mxu0 %v312
    %1022 = vmatprep.subr.mxu0 0.0
    %1023 = vmatpush1.msra.mxu0 %v313
    %1024 = vmatprep.subr.mxu0 0.0
    %1025 = vmatpush1.msra.mxu0 %v314
    %1026 = vmatprep.subr.mxu0 0.0
    %1027 = vmatpush1.msra.mxu0 %v315
    %1028 = vmatprep.subr.mxu0 0.0
    %1029 = vmatpush1.msra.mxu0 %v316
    %1030 = vmatprep.subr.mxu0 0.0
    %1031 = vmatpush1.msra.mxu0 %v317
    %1032 = vmatprep.subr.mxu0 0.0
    %1033 = vmatpush1.msra.mxu0 %v318
    %1034 = vmatprep.subr.mxu0 0.0
    %1035 = vmatpush1.msra.mxu0 %v319
    %1036 = vmatprep.subr.mxu0 0.0
    %1037 = vmatpush1.msra.mxu0 0.0
    %1038 = vmatprep.subr.mxu0 0.0
    %1039 = vmatpush1.msra.mxu0 0.0
    %1040 = vmatprep.subr.mxu0 0.0
    %1041 = vmatpush1.msra.mxu0 0.0
    %1042 = vmatprep.subr.mxu0 0.0
    %1043 = vmatpush1.msra.mxu0 0.0
    %1044 = vmatprep.subr.mxu0 0.0
    %1045 = vmatpush1.msra.mxu0 0.0
    %1046 = vmatprep.subr.mxu0 0.0
    %1047 = vmatpush1.msra.mxu0 0.0
    %1048 = vmatprep.subr.mxu0 0.0
    %1049 = vmatpush1.msra.mxu0 0.0
    %1050 = vmatprep.subr.mxu0 0.0
    %1051 = vmatpush1.msra.mxu0 0.0
    %1052 = vmatprep.subr.mxu0 0.0
    %1053 = vmatpush1.msra.mxu0 0.0
    %1054 = vmatprep.subr.mxu0 0.0
    %1055 = vmatpush1.msra.mxu0 0.0
    %1056 = vmatprep.subr.mxu0 0.0
    %1057 = vmatpush1.msra.mxu0 0.0
    %1058 = vmatprep.subr.mxu0 0.0
    %1059 = vmatpush1.msra.mxu0 0.0
    %1060 = vmatprep.subr.mxu0 0.0
    %1061 = vmatpush1.msra.mxu0 0.0
    %1062 = vmatprep.subr.mxu0 0.0
    %1063 = vmatpush1.msra.mxu0 0.0
    %1064 = vmatprep.subr.mxu0 0.0
    %1065 = vmatpush1.msra.mxu0 0.0
    %1066 = vmatprep.subr.mxu0 0.0
    %1067 = vmatpush1.msra.mxu0 0.0
    %1068 = vmatprep.mubr.f32.mxu0 0.0
    %1069 = vmatmul.mubr.f32.gmra.mrb[0].mxu0 %v843
    %v1070 = vpop.f32.mrb[0].mxu0
    %v1071 = vadd.f32 %v926, %v1070
    %v1072 = vpop.f32.mrb[0].mxu0
    %1073 = vmatprep.mubr.f32.mxu0 0.0
    %1074 = vmatmul.mubr.f32.gmra.mrb[0].mxu0 %v844
    %v1075 = vpop.f32.mrb[0].mxu0
    %v1076 = vadd.f32 %v931, %v1075
    %v1077 = vpop.f32.mrb[0].mxu0
    %1078 = vmatprep.mubr.f32.mxu0 0.0
    %1079 = vmatmul.mubr.f32.gmra.mrb[0].mxu0 %v845
    %v1080 = vpop.f32.mrb[0].mxu0
    %v1081 = vadd.f32 %v936, %v1080
    %v1082 = vpop.f32.mrb[0].mxu0
    %1083 = vmatprep.mubr.f32.mxu0 0.0
    %1084 = vmatmul.mubr.f32.gmra.mrb[0].mxu0 %v846
    %v1085 = vpop.f32.mrb[0].mxu0
    %v1086 = vadd.f32 %v941, %v1085
    %v1087 = vpop.f32.mrb[0].mxu0
    %1088 = vmatprep.mubr.f32.mxu0 0.0
    %1089 = vmatmul.mubr.f32.gmra.mrb[0].mxu0 %v847
    %v1090 = vpop.f32.mrb[0].mxu0
    %v1091 = vadd.f32 %v946, %v1090
    %v1092 = vpop.f32.mrb[0].mxu0
    %1093 = vmatprep.mubr.f32.mxu0 0.0
    %1094 = vmatmul.mubr.f32.gmra.mrb[0].mxu0 %v848
    %v1095 = vpop.f32.mrb[0].mxu0
    %v1096 = vadd.f32 %v951, %v1095
    %v1097 = vpop.f32.mrb[0].mxu0
    %1098 = vmatprep.mubr.f32.mxu0 0.0
    %1099 = vmatmul.mubr.f32.gmra.mrb[0].mxu0 %v849
    %v1100 = vpop.f32.mrb[0].mxu0
    %v1101 = vadd.f32 %v956, %v1100
    %v1102 = vpop.f32.mrb[0].mxu0
    %1103 = vmatprep.mubr.f32.mxu0 0.0
    %1104 = vmatmul.mubr.f32.gmra.mrb[0].mxu0 %v850
    %v1105 = vpop.f32.mrb[0].mxu0
    %v1106 = vadd.f32 %v961, %v1105
    %v1107 = vpop.f32.mrb[0].mxu0
    %1108 = vmatprep.mubr.f32.mxu0 0.0
    %1109 = vmatmul.mubr.f32.gmra.mrb[0].mxu0 %v851
    %v1110 = vpop.f32.mrb[0].mxu0
    %v1111 = vadd.f32 %v966, %v1110
    %v1112 = vpop.f32.mrb[0].mxu0
    %1113 = vmatprep.mubr.f32.mxu0 0.0
    %1114 = vmatmul.mubr.f32.gmra.mrb[0].mxu0 %v852
    %v1115 = vpop.f32.mrb[0].mxu0
    %v1116 = vadd.f32 %v971, %v1115
    %v1117 = vpop.f32.mrb[0].mxu0
    %1118 = vmatprep.mubr.f32.mxu0 0.0
    %1119 = vmatmul.mubr.f32.gmra.mrb[0].mxu0 %v853
    %v1120 = vpop.f32.mrb[0].mxu0
    %v1121 = vadd.f32 %v976, %v1120
    %v1122 = vpop.f32.mrb[0].mxu0
    %1123 = vmatprep.mubr.f32.mxu0 0.0
    %1124 = vmatmul.mubr.f32.gmra.mrb[0].mxu0 %v854
    %v1125 = vpop.f32.mrb[0].mxu0
    %v1126 = vadd.f32 %v981, %v1125
    %v1127 = vpop.f32.mrb[0].mxu0
    %1128 = vmatprep.mubr.f32.mxu0 0.0
    %1129 = vmatmul.mubr.f32.gmra.mrb[0].mxu0 %v855
    %v1130 = vpop.f32.mrb[0].mxu0
    %v1131 = vadd.f32 %v986, %v1130
    %v1132 = vpop.f32.mrb[0].mxu0
    %1133 = vmatprep.mubr.f32.mxu0 0.0
    %1134 = vmatmul.mubr.f32.gmra.mrb[0].mxu0 %v856
    %v1135 = vpop.f32.mrb[0].mxu0
    %v1136 = vadd.f32 %v991, %v1135
    %v1137 = vpop.f32.mrb[0].mxu0
    %1138 = vmatprep.mubr.f32.mxu0 0.0
    %1139 = vmatmul.mubr.f32.gmra.mrb[0].mxu0 %v857
    %v1140 = vpop.f32.mrb[0].mxu0
    %v1141 = vadd.f32 %v996, %v1140
    %v1142 = vpop.f32.mrb[0].mxu0
    %1143 = vmatprep.mubr.f32.mxu0 0.0
    %1144 = vmatmul.mubr.f32.gmra.mrb[0].mxu0 %v858
    %v1145 = vpop.f32.mrb[0].mxu0
    %v1146 = vadd.f32 %v1001, %v1145
    %v1147 = vpop.f32.mrb[0].mxu0
    %1148 = vdwg.mxu0
    %v1149 = vadd.f32 %v1071, %v631
    %v1150 = vadd.f32 %v1076, %v631
    %v1151 = vadd.f32 %v1081, %v631
    %v1152 = vadd.f32 %v1086, %v631
    %v1153 = vadd.f32 %v1091, %v631
    %v1154 = vadd.f32 %v1096, %v631
    %v1155 = vadd.f32 %v1101, %v631
    %v1156 = vadd.f32 %v1106, %v631
    %v1157 = vadd.f32 %v1111, %v631
    %v1158 = vadd.f32 %v1116, %v631
    %v1159 = vadd.f32 %v1121, %v631
    %v1160 = vadd.f32 %v1126, %v631
    %v1161 = vadd.f32 %v1131, %v631
    %v1162 = vadd.f32 %v1136, %v631
    %v1163 = vadd.f32 %v1141, %v631
    %v1164 = vadd.f32 %v1146, %v631
    %v1165 = vtanh.pop %v1149
    %v1166 = vtanh.pop %v1150
    %v1167 = vtanh.pop %v1151
    %v1168 = vtanh.pop %v1152
    %v1169 = vtanh.pop %v1153
    %v1170 = vtanh.pop %v1154
    %v1171 = vtanh.pop %v1155
    %v1172 = vtanh.pop %v1156
    %v1173 = vtanh.pop %v1157
    %v1174 = vtanh.pop %v1158
    %v1175 = vtanh.pop %v1159
    %v1176 = vtanh.pop %v1160
    %v1177 = vtanh.pop %v1161
    %v1178 = vtanh.pop %v1162
    %v1179 = vtanh.pop %v1163
    %v1180 = vtanh.pop %v1164
    %s1181 = scalar_lea.vmem [#allocation2], 256
    %v1182 = vld [vmem:[%s1181] sm:$0xff]
    %v1183 = vld [vmem:[%s1181 + $0x8] sm:$0xff]
    %v1184 = vld [vmem:[%s1181 + $0x10] sm:$0xff]
    %v1185 = vld [vmem:[%s1181 + $0x18] sm:$0xff]
    %v1186 = vld [vmem:[%s1181 + $0x20] sm:$0xff]
    %v1187 = vld [vmem:[%s1181 + $0x28] sm:$0xff]
    %v1188 = vld [vmem:[%s1181 + $0x30] sm:$0xff]
    %v1189 = vld [vmem:[%s1181 + $0x38] sm:$0xff]
    %v1190 = vld [vmem:[%s1181 + $0x40] sm:$0xff]
    %v1191 = vld [vmem:[%s1181 + $0x48] sm:$0xff]
    %v1192 = vld [vmem:[%s1181 + $0x50] sm:$0xff]
    %v1193 = vld [vmem:[%s1181 + $0x58] sm:$0xff]
    %v1194 = vld [vmem:[%s1181 + $0x60] sm:$0xff]
    %v1195 = vld [vmem:[%s1181 + $0x68] sm:$0xff]
    %v1196 = vld [vmem:[%s1181 + $0x70] sm:$0xff]
    %v1197 = vld [vmem:[%s1181 + $0x78] sm:$0xff]
    %1198 = vmatprep.subr.mxu0 0.0
    %1199 = vmatpush1.msra.mxu0 %v111
    %1200 = vmatprep.subr.mxu0 0.0
    %1201 = vmatpush1.msra.mxu0 %v112
    %1202 = vmatprep.subr.mxu0 0.0
    %1203 = vmatpush1.msra.mxu0 %v113
    %1204 = vmatprep.subr.mxu0 0.0
    %1205 = vmatpush1.msra.mxu0 %v114
    %1206 = vmatprep.subr.mxu0 0.0
    %1207 = vmatpush1.msra.mxu0 %v115
    %1208 = vmatprep.subr.mxu0 0.0
    %1209 = vmatpush1.msra.mxu0 %v116
    %1210 = vmatprep.subr.mxu0 0.0
    %1211 = vmatpush1.msra.mxu0 %v117
    %1212 = vmatprep.subr.mxu0 0.0
    %1213 = vmatpush1.msra.mxu0 %v118
    %1214 = vmatprep.subr.mxu0 0.0
    %1215 = vmatpush1.msra.mxu0 %v119
    %1216 = vmatprep.subr.mxu0 0.0
    %1217 = vmatpush1.msra.mxu0 %v120
    %1218 = vmatprep.subr.mxu0 0.0
    %1219 = vmatpush1.msra.mxu0 %v121
    %1220 = vmatprep.subr.mxu0 0.0
    %1221 = vmatpush1.msra.mxu0 %v122
    %1222 = vmatprep.subr.mxu0 0.0
    %1223 = vmatpush1.msra.mxu0 %v123
    %1224 = vmatprep.subr.mxu0 0.0
    %1225 = vmatpush1.msra.mxu0 %v124
    %1226 = vmatprep.subr.mxu0 0.0
    %1227 = vmatpush1.msra.mxu0 %v125
    %1228 = vmatprep.subr.mxu0 0.0
    %1229 = vmatpush1.msra.mxu0 %v126
    %1230 = vmatprep.subr.mxu0 0.0
    %1231 = vmatpush1.msra.mxu0 0.0
    %1232 = vmatprep.subr.mxu0 0.0
    %1233 = vmatpush1.msra.mxu0 0.0
    %1234 = vmatprep.subr.mxu0 0.0
    %1235 = vmatpush1.msra.mxu0 0.0
    %1236 = vmatprep.subr.mxu0 0.0
    %1237 = vmatpush1.msra.mxu0 0.0
    %1238 = vmatprep.subr.mxu0 0.0
    %1239 = vmatpush1.msra.mxu0 0.0
    %1240 = vmatprep.subr.mxu0 0.0
    %1241 = vmatpush1.msra.mxu0 0.0
    %1242 = vmatprep.subr.mxu0 0.0
    %1243 = vmatpush1.msra.mxu0 0.0
    %1244 = vmatprep.subr.mxu0 0.0
    %1245 = vmatpush1.msra.mxu0 0.0
    %1246 = vmatprep.subr.mxu0 0.0
    %1247 = vmatpush1.msra.mxu0 0.0
    %1248 = vmatprep.subr.mxu0 0.0
    %1249 = vmatpush1.msra.mxu0 0.0
    %1250 = vmatprep.subr.mxu0 0.0
    %1251 = vmatpush1.msra.mxu0 0.0
    %1252 = vmatprep.subr.mxu0 0.0
    %1253 = vmatpush1.msra.mxu0 0.0
    %1254 = vmatprep.subr.mxu0 0.0
    %1255 = vmatpush1.msra.mxu0 0.0
    %1256 = vmatprep.subr.mxu0 0.0
    %1257 = vmatpush1.msra.mxu0 0.0
    %1258 = vmatprep.subr.mxu0 0.0
    %1259 = vmatpush1.msra.mxu0 0.0
    %1260 = vmatprep.subr.mxu0 0.0
    %1261 = vmatpush1.msra.mxu0 0.0
    %1262 = vmatprep.mubr.f32.mxu0 0.0
    %1263 = vmatmul.mubr.f32.gmra.mrb[0].mxu0 %v843
    %v1264 = vpop.f32.mrb[0].mxu0
    %v1265 = vadd.f32 0.0, %v1264
    %v1266 = vpop.f32.mrb[0].mxu0
    %1267 = vmatprep.mubr.f32.mxu0 0.0
    %1268 = vmatmul.mubr.f32.gmra.mrb[0].mxu0 %v844
    %v1269 = vpop.f32.mrb[0].mxu0
    %v1270 = vadd.f32 0.0, %v1269
    %v1271 = vpop.f32.mrb[0].mxu0
    %1272 = vmatprep.mubr.f32.mxu0 0.0
    %1273 = vmatmul.mubr.f32.gmra.mrb[0].mxu0 %v845
    %v1274 = vpop.f32.mrb[0].mxu0
    %v1275 = vadd.f32 0.0, %v1274
    %v1276 = vpop.f32.mrb[0].mxu0
    %1277 = vmatprep.mubr.f32.mxu0 0.0
    %1278 = vmatmul.mubr.f32.gmra.mrb[0].mxu0 %v846
    %v1279 = vpop.f32.mrb[0].mxu0
    %v1280 = vadd.f32 0.0, %v1279
    %v1281 = vpop.f32.mrb[0].mxu0
    %1282 = vmatprep.mubr.f32.mxu0 0.0
    %1283 = vmatmul.mubr.f32.gmra.mrb[0].mxu0 %v847
    %v1284 = vpop.f32.mrb[0].mxu0
    %v1285 = vadd.f32 0.0, %v1284
    %v1286 = vpop.f32.mrb[0].mxu0
    %1287 = vmatprep.mubr.f32.mxu0 0.0
    %1288 = vmatmul.mubr.f32.gmra.mrb[0].mxu0 %v848
    %v1289 = vpop.f32.mrb[0].mxu0
    %v1290 = vadd.f32 0.0, %v1289
    %v1291 = vpop.f32.mrb[0].mxu0
    %1292 = vmatprep.mubr.f32.mxu0 0.0
    %1293 = vmatmul.mubr.f32.gmra.mrb[0].mxu0 %v849
    %v1294 = vpop.f32.mrb[0].mxu0
    %v1295 = vadd.f32 0.0, %v1294
    %v1296 = vpop.f32.mrb[0].mxu0
    %1297 = vmatprep.mubr.f32.mxu0 0.0
    %1298 = vmatmul.mubr.f32.gmra.mrb[0].mxu0 %v850
    %v1299 = vpop.f32.mrb[0].mxu0
    %v1300 = vadd.f32 0.0, %v1299
    %v1301 = vpop.f32.mrb[0].mxu0
    %1302 = vmatprep.mubr.f32.mxu0 0.0
    %1303 = vmatmul.mubr.f32.gmra.mrb[0].mxu0 %v851
    %v1304 = vpop.f32.mrb[0].mxu0
    %v1305 = vadd.f32 0.0, %v1304
    %v1306 = vpop.f32.mrb[0].mxu0
    %1307 = vmatprep.mubr.f32.mxu0 0.0
    %1308 = vmatmul.mubr.f32.gmra.mrb[0].mxu0 %v852
    %v1309 = vpop.f32.mrb[0].mxu0
    %v1310 = vadd.f32 0.0, %v1309
    %v1311 = vpop.f32.mrb[0].mxu0
    %1312 = vmatprep.mubr.f32.mxu0 0.0
    %1313 = vmatmul.mubr.f32.gmra.mrb[0].mxu0 %v853
    %v1314 = vpop.f32.mrb[0].mxu0
    %v1315 = vadd.f32 0.0, %v1314
    %v1316 = vpop.f32.mrb[0].mxu0
    %1317 = vmatprep.mubr.f32.mxu0 0.0
    %1318 = vmatmul.mubr.f32.gmra.mrb[0].mxu0 %v854
    %v1319 = vpop.f32.mrb[0].mxu0
    %v1320 = vadd.f32 0.0, %v1319
    %v1321 = vpop.f32.mrb[0].mxu0
    %1322 = vmatprep.mubr.f32.mxu0 0.0
    %1323 = vmatmul.mubr.f32.gmra.mrb[0].mxu0 %v855
    %v1324 = vpop.f32.mrb[0].mxu0
    %v1325 = vadd.f32 0.0, %v1324
    %v1326 = vpop.f32.mrb[0].mxu0
    %1327 = vmatprep.mubr.f32.mxu0 0.0
    %1328 = vmatmul.mubr.f32.gmra.mrb[0].mxu0 %v856
    %v1329 = vpop.f32.mrb[0].mxu0
    %v1330 = vadd.f32 0.0, %v1329
    %v1331 = vpop.f32.mrb[0].mxu0
    %1332 = vmatprep.mubr.f32.mxu0 0.0
    %1333 = vmatmul.mubr.f32.gmra.mrb[0].mxu0 %v857
    %v1334 = vpop.f32.mrb[0].mxu0
    %v1335 = vadd.f32 0.0, %v1334
    %v1336 = vpop.f32.mrb[0].mxu0
    %1337 = vmatprep.mubr.f32.mxu0 0.0
    %1338 = vmatmul.mubr.f32.gmra.mrb[0].mxu0 %v858
    %v1339 = vpop.f32.mrb[0].mxu0
    %v1340 = vadd.f32 0.0, %v1339
    %v1341 = vpop.f32.mrb[0].mxu0
    %1342 = vdwg.mxu0
    %v1343 = vadd.f32 %v1182, %v1265
    %v1344 = vadd.f32 %v1183, %v1270
    %v1345 = vadd.f32 %v1184, %v1275
    %v1346 = vadd.f32 %v1185, %v1280
    %v1347 = vadd.f32 %v1186, %v1285
    %v1348 = vadd.f32 %v1187, %v1290
    %v1349 = vadd.f32 %v1188, %v1295
    %v1350 = vadd.f32 %v1189, %v1300
    %v1351 = vadd.f32 %v1190, %v1305
    %v1352 = vadd.f32 %v1191, %v1310
    %v1353 = vadd.f32 %v1192, %v1315
    %v1354 = vadd.f32 %v1193, %v1320
    %v1355 = vadd.f32 %v1194, %v1325
    %v1356 = vadd.f32 %v1195, %v1330
    %v1357 = vadd.f32 %v1196, %v1335
    %v1358 = vadd.f32 %v1197, %v1340
    %v1359 = vtanh.pop %v1343
    %v1360 = vtanh.pop %v1344
    %v1361 = vtanh.pop %v1345
    %v1362 = vtanh.pop %v1346
    %v1363 = vtanh.pop %v1347
    %v1364 = vtanh.pop %v1348
    %v1365 = vtanh.pop %v1349
    %v1366 = vtanh.pop %v1350
    %v1367 = vtanh.pop %v1351
    %v1368 = vtanh.pop %v1352
    %v1369 = vtanh.pop %v1353
    %v1370 = vtanh.pop %v1354
    %v1371 = vtanh.pop %v1355
    %v1372 = vtanh.pop %v1356
    %v1373 = vtanh.pop %v1357
    %v1374 = vtanh.pop %v1358
    %1375 = vmatprep.subr.mxu0 0.0
    %1376 = vmatpush1.msra.mxu0 %v320
    %1377 = vmatprep.subr.mxu0 0.0
    %1378 = vmatpush1.msra.mxu0 %v321
    %1379 = vmatprep.subr.mxu0 0.0
    %1380 = vmatpush1.msra.mxu0 %v322
    %1381 = vmatprep.subr.mxu0 0.0
    %1382 = vmatpush1.msra.mxu0 %v323
    %1383 = vmatprep.subr.mxu0 0.0
    %1384 = vmatpush1.msra.mxu0 %v324
    %1385 = vmatprep.subr.mxu0 0.0
    %1386 = vmatpush1.msra.mxu0 %v325
    %1387 = vmatprep.subr.mxu0 0.0
    %1388 = vmatpush1.msra.mxu0 %v326
    %1389 = vmatprep.subr.mxu0 0.0
    %1390 = vmatpush1.msra.mxu0 %v327
    %1391 = vmatprep.subr.mxu0 0.0
    %1392 = vmatpush1.msra.mxu0 %v328
    %1393 = vmatprep.subr.mxu0 0.0
    %1394 = vmatpush1.msra.mxu0 %v329
    %1395 = vmatprep.subr.mxu0 0.0
    %1396 = vmatpush1.msra.mxu0 %v330
    %1397 = vmatprep.subr.mxu0 0.0
    %1398 = vmatpush1.msra.mxu0 %v331
    %1399 = vmatprep.subr.mxu0 0.0
    %1400 = vmatpush1.msra.mxu0 %v332
    %1401 = vmatprep.subr.mxu0 0.0
    %1402 = vmatpush1.msra.mxu0 %v333
    %1403 = vmatprep.subr.mxu0 0.0
    %1404 = vmatpush1.msra.mxu0 %v334
    %1405 = vmatprep.subr.mxu0 0.0
    %1406 = vmatpush1.msra.mxu0 %v335
    %1407 = vmatprep.subr.mxu0 0.0
    %1408 = vmatpush1.msra.mxu0 0.0
    %1409 = vmatprep.subr.mxu0 0.0
    %1410 = vmatpush1.msra.mxu0 0.0
    %1411 = vmatprep.subr.mxu0 0.0
    %1412 = vmatpush1.msra.mxu0 0.0
    %1413 = vmatprep.subr.mxu0 0.0
    %1414 = vmatpush1.msra.mxu0 0.0
    %1415 = vmatprep.subr.mxu0 0.0
    %1416 = vmatpush1.msra.mxu0 0.0
    %1417 = vmatprep.subr.mxu0 0.0
    %1418 = vmatpush1.msra.mxu0 0.0
    %1419 = vmatprep.subr.mxu0 0.0
    %1420 = vmatpush1.msra.mxu0 0.0
    %1421 = vmatprep.subr.mxu0 0.0
    %1422 = vmatpush1.msra.mxu0 0.0
    %1423 = vmatprep.subr.mxu0 0.0
    %1424 = vmatpush1.msra.mxu0 0.0
    %1425 = vmatprep.subr.mxu0 0.0
    %1426 = vmatpush1.msra.mxu0 0.0
    %1427 = vmatprep.subr.mxu0 0.0
    %1428 = vmatpush1.msra.mxu0 0.0
    %1429 = vmatprep.subr.mxu0 0.0
    %1430 = vmatpush1.msra.mxu0 0.0
    %1431 = vmatprep.subr.mxu0 0.0
    %1432 = vmatpush1.msra.mxu0 0.0
    %1433 = vmatprep.subr.mxu0 0.0
    %1434 = vmatpush1.msra.mxu0 0.0
    %1435 = vmatprep.subr.mxu0 0.0
    %1436 = vmatpush1.msra.mxu0 0.0
    %1437 = vmatprep.subr.mxu0 0.0
    %1438 = vmatpush1.msra.mxu0 0.0
    %1439 = vmatprep.mubr.f32.mxu0 0.0
    %1440 = vmatmul.mubr.f32.gmra.mrb[0].mxu0 %v1165
    %v1441 = vpop.f32.mrb[0].mxu0
    %v1442 = vadd.f32 0.0, %v1441
    %v1443 = vpop.f32.mrb[0].mxu0
    %1444 = vmatprep.mubr.f32.mxu0 0.0
    %1445 = vmatmul.mubr.f32.gmra.mrb[0].mxu0 %v1166
    %v1446 = vpop.f32.mrb[0].mxu0
    %v1447 = vadd.f32 0.0, %v1446
    %v1448 = vpop.f32.mrb[0].mxu0
    %1449 = vmatprep.mubr.f32.mxu0 0.0
    %1450 = vmatmul.mubr.f32.gmra.mrb[0].mxu0 %v1167
    %v1451 = vpop.f32.mrb[0].mxu0
    %v1452 = vadd.f32 0.0, %v1451
    %v1453 = vpop.f32.mrb[0].mxu0
    %1454 = vmatprep.mubr.f32.mxu0 0.0
    %1455 = vmatmul.mubr.f32.gmra.mrb[0].mxu0 %v1168
    %v1456 = vpop.f32.mrb[0].mxu0
    %v1457 = vadd.f32 0.0, %v1456
    %v1458 = vpop.f32.mrb[0].mxu0
    %1459 = vmatprep.mubr.f32.mxu0 0.0
    %1460 = vmatmul.mubr.f32.gmra.mrb[0].mxu0 %v1169
    %v1461 = vpop.f32.mrb[0].mxu0
    %v1462 = vadd.f32 0.0, %v1461
    %v1463 = vpop.f32.mrb[0].mxu0
    %1464 = vmatprep.mubr.f32.mxu0 0.0
    %1465 = vmatmul.mubr.f32.gmra.mrb[0].mxu0 %v1170
    %v1466 = vpop.f32.mrb[0].mxu0
    %v1467 = vadd.f32 0.0, %v1466
    %v1468 = vpop.f32.mrb[0].mxu0
    %1469 = vmatprep.mubr.f32.mxu0 0.0
    %1470 = vmatmul.mubr.f32.gmra.mrb[0].mxu0 %v1171
    %v1471 = vpop.f32.mrb[0].mxu0
    %v1472 = vadd.f32 0.0, %v1471
    %v1473 = vpop.f32.mrb[0].mxu0
    %1474 = vmatprep.mubr.f32.mxu0 0.0
    %1475 = vmatmul.mubr.f32.gmra.mrb[0].mxu0 %v1172
    %v1476 = vpop.f32.mrb[0].mxu0
    %v1477 = vadd.f32 0.0, %v1476
    %v1478 = vpop.f32.mrb[0].mxu0
    %1479 = vmatprep.mubr.f32.mxu0 0.0
    %1480 = vmatmul.mubr.f32.gmra.mrb[0].mxu0 %v1173
    %v1481 = vpop.f32.mrb[0].mxu0
    %v1482 = vadd.f32 0.0, %v1481
    %v1483 = vpop.f32.mrb[0].mxu0
    %1484 = vmatprep.mubr.f32.mxu0 0.0
    %1485 = vmatmul.mubr.f32.gmra.mrb[0].mxu0 %v1174
    %v1486 = vpop.f32.mrb[0].mxu0
    %v1487 = vadd.f32 0.0, %v1486
    %v1488 = vpop.f32.mrb[0].mxu0
    %1489 = vmatprep.mubr.f32.mxu0 0.0
    %1490 = vmatmul.mubr.f32.gmra.mrb[0].mxu0 %v1175
    %v1491 = vpop.f32.mrb[0].mxu0
    %v1492 = vadd.f32 0.0, %v1491
    %v1493 = vpop.f32.mrb[0].mxu0
    %1494 = vmatprep.mubr.f32.mxu0 0.0
    %1495 = vmatmul.mubr.f32.gmra.mrb[0].mxu0 %v1176
    %v1496 = vpop.f32.mrb[0].mxu0
    %v1497 = vadd.f32 0.0, %v1496
    %v1498 = vpop.f32.mrb[0].mxu0
    %1499 = vmatprep.mubr.f32.mxu0 0.0
    %1500 = vmatmul.mubr.f32.gmra.mrb[0].mxu0 %v1177
    %v1501 = vpop.f32.mrb[0].mxu0
    %v1502 = vadd.f32 0.0, %v1501
    %v1503 = vpop.f32.mrb[0].mxu0
    %1504 = vmatprep.mubr.f32.mxu0 0.0
    %1505 = vmatmul.mubr.f32.gmra.mrb[0].mxu0 %v1178
    %v1506 = vpop.f32.mrb[0].mxu0
    %v1507 = vadd.f32 0.0, %v1506
    %v1508 = vpop.f32.mrb[0].mxu0
    %1509 = vmatprep.mubr.f32.mxu0 0.0
    %1510 = vmatmul.mubr.f32.gmra.mrb[0].mxu0 %v1179
    %v1511 = vpop.f32.mrb[0].mxu0
    %v1512 = vadd.f32 0.0, %v1511
    %v1513 = vpop.f32.mrb[0].mxu0
    %1514 = vmatprep.mubr.f32.mxu0 0.0
    %1515 = vmatmul.mubr.f32.gmra.mrb[0].mxu0 %v1180
    %v1516 = vpop.f32.mrb[0].mxu0
    %v1517 = vadd.f32 0.0, %v1516
    %v1518 = vpop.f32.mrb[0].mxu0
    %1519 = vdwg.mxu0
    %1520 = vmatprep.subr.mxu0 0.0
    %1521 = vmatpush1.msra.mxu0 %v304
    %1522 = vmatprep.subr.mxu0 0.0
    %1523 = vmatpush1.msra.mxu0 %v305
    %1524 = vmatprep.subr.mxu0 0.0
    %1525 = vmatpush1.msra.mxu0 %v306
    %1526 = vmatprep.subr.mxu0 0.0
    %1527 = vmatpush1.msra.mxu0 %v307
    %1528 = vmatprep.subr.mxu0 0.0
    %1529 = vmatpush1.msra.mxu0 %v308
    %1530 = vmatprep.subr.mxu0 0.0
    %1531 = vmatpush1.msra.mxu0 %v309
    %1532 = vmatprep.subr.mxu0 0.0
    %1533 = vmatpush1.msra.mxu0 %v310
    %1534 = vmatprep.subr.mxu0 0.0
    %1535 = vmatpush1.msra.mxu0 %v311
    %1536 = vmatprep.subr.mxu0 0.0
    %1537 = vmatpush1.msra.mxu0 %v312
    %1538 = vmatprep.subr.mxu0 0.0
    %1539 = vmatpush1.msra.mxu0 %v313
    %1540 = vmatprep.subr.mxu0 0.0
    %1541 = vmatpush1.msra.mxu0 %v314
    %1542 = vmatprep.subr.mxu0 0.0
    %1543 = vmatpush1.msra.mxu0 %v315
    %1544 = vmatprep.subr.mxu0 0.0
    %1545 = vmatpush1.msra.mxu0 %v316
    %1546 = vmatprep.subr.mxu0 0.0
    %1547 = vmatpush1.msra.mxu0 %v317
    %1548 = vmatprep.subr.mxu0 0.0
    %1549 = vmatpush1.msra.mxu0 %v318
    %1550 = vmatprep.subr.mxu0 0.0
    %1551 = vmatpush1.msra.mxu0 %v319
    %1552 = vmatprep.subr.mxu0 0.0
    %1553 = vmatpush1.msra.mxu0 0.0
    %1554 = vmatprep.subr.mxu0 0.0
    %1555 = vmatpush1.msra.mxu0 0.0
    %1556 = vmatprep.subr.mxu0 0.0
    %1557 = vmatpush1.msra.mxu0 0.0
    %1558 = vmatprep.subr.mxu0 0.0
    %1559 = vmatpush1.msra.mxu0 0.0
    %1560 = vmatprep.subr.mxu0 0.0
    %1561 = vmatpush1.msra.mxu0 0.0
    %1562 = vmatprep.subr.mxu0 0.0
    %1563 = vmatpush1.msra.mxu0 0.0
    %1564 = vmatprep.subr.mxu0 0.0
    %1565 = vmatpush1.msra.mxu0 0.0
    %1566 = vmatprep.subr.mxu0 0.0
    %1567 = vmatpush1.msra.mxu0 0.0
    %1568 = vmatprep.subr.mxu0 0.0
    %1569 = vmatpush1.msra.mxu0 0.0
    %1570 = vmatprep.subr.mxu0 0.0
    %1571 = vmatpush1.msra.mxu0 0.0
    %1572 = vmatprep.subr.mxu0 0.0
    %1573 = vmatpush1.msra.mxu0 0.0
    %1574 = vmatprep.subr.mxu0 0.0
    %1575 = vmatpush1.msra.mxu0 0.0
    %1576 = vmatprep.subr.mxu0 0.0
    %1577 = vmatpush1.msra.mxu0 0.0
    %1578 = vmatprep.subr.mxu0 0.0
    %1579 = vmatpush1.msra.mxu0 0.0
    %1580 = vmatprep.subr.mxu0 0.0
    %1581 = vmatpush1.msra.mxu0 0.0
    %1582 = vmatprep.subr.mxu0 0.0
    %1583 = vmatpush1.msra.mxu0 0.0
    %1584 = vmatprep.mubr.f32.mxu0 0.0
    %1585 = vmatmul.mubr.f32.gmra.mrb[0].mxu0 %v1359
    %v1586 = vpop.f32.mrb[0].mxu0
    %v1587 = vadd.f32 %v1442, %v1586
    %v1588 = vpop.f32.mrb[0].mxu0
    %1589 = vmatprep.mubr.f32.mxu0 0.0
    %1590 = vmatmul.mubr.f32.gmra.mrb[0].mxu0 %v1360
    %v1591 = vpop.f32.mrb[0].mxu0
    %v1592 = vadd.f32 %v1447, %v1591
    %v1593 = vpop.f32.mrb[0].mxu0
    %1594 = vmatprep.mubr.f32.mxu0 0.0
    %1595 = vmatmul.mubr.f32.gmra.mrb[0].mxu0 %v1361
    %v1596 = vpop.f32.mrb[0].mxu0
    %v1597 = vadd.f32 %v1452, %v1596
    %v1598 = vpop.f32.mrb[0].mxu0
    %1599 = vmatprep.mubr.f32.mxu0 0.0
    %1600 = vmatmul.mubr.f32.gmra.mrb[0].mxu0 %v1362
    %v1601 = vpop.f32.mrb[0].mxu0
    %v1602 = vadd.f32 %v1457, %v1601
    %v1603 = vpop.f32.mrb[0].mxu0
    %1604 = vmatprep.mubr.f32.mxu0 0.0
    %1605 = vmatmul.mubr.f32.gmra.mrb[0].mxu0 %v1363
    %v1606 = vpop.f32.mrb[0].mxu0
    %v1607 = vadd.f32 %v1462, %v1606
    %v1608 = vpop.f32.mrb[0].mxu0
    %1609 = vmatprep.mubr.f32.mxu0 0.0
    %1610 = vmatmul.mubr.f32.gmra.mrb[0].mxu0 %v1364
    %v1611 = vpop.f32.mrb[0].mxu0
    %v1612 = vadd.f32 %v1467, %v1611
    %v1613 = vpop.f32.mrb[0].mxu0
    %1614 = vmatprep.mubr.f32.mxu0 0.0
    %1615 = vmatmul.mubr.f32.gmra.mrb[0].mxu0 %v1365
    %v1616 = vpop.f32.mrb[0].mxu0
    %v1617 = vadd.f32 %v1472, %v1616
    %v1618 = vpop.f32.mrb[0].mxu0
    %1619 = vmatprep.mubr.f32.mxu0 0.0
    %1620 = vmatmul.mubr.f32.gmra.mrb[0].mxu0 %v1366
    %v1621 = vpop.f32.mrb[0].mxu0
    %v1622 = vadd.f32 %v1477, %v1621
    %v1623 = vpop.f32.mrb[0].mxu0
    %1624 = vmatprep.mubr.f32.mxu0 0.0
    %1625 = vmatmul.mubr.f32.gmra.mrb[0].mxu0 %v1367
    %v1626 = vpop.f32.mrb[0].mxu0
    %v1627 = vadd.f32 %v1482, %v1626
    %v1628 = vpop.f32.mrb[0].mxu0
    %1629 = vmatprep.mubr.f32.mxu0 0.0
    %1630 = vmatmul.mubr.f32.gmra.mrb[0].mxu0 %v1368
    %v1631 = vpop.f32.mrb[0].mxu0
    %v1632 = vadd.f32 %v1487, %v1631
    %v1633 = vpop.f32.mrb[0].mxu0
    %1634 = vmatprep.mubr.f32.mxu0 0.0
    %1635 = vmatmul.mubr.f32.gmra.mrb[0].mxu0 %v1369
    %v1636 = vpop.f32.mrb[0].mxu0
    %v1637 = vadd.f32 %v1492, %v1636
    %v1638 = vpop.f32.mrb[0].mxu0
    %1639 = vmatprep.mubr.f32.mxu0 0.0
    %1640 = vmatmul.mubr.f32.gmra.mrb[0].mxu0 %v1370
    %v1641 = vpop.f32.mrb[0].mxu0
    %v1642 = vadd.f32 %v1497, %v1641
    %v1643 = vpop.f32.mrb[0].mxu0
    %1644 = vmatprep.mubr.f32.mxu0 0.0
    %1645 = vmatmul.mubr.f32.gmra.mrb[0].mxu0 %v1371
    %v1646 = vpop.f32.mrb[0].mxu0
    %v1647 = vadd.f32 %v1502, %v1646
    %v1648 = vpop.f32.mrb[0].mxu0
    %1649 = vmatprep.mubr.f32.mxu0 0.0
    %1650 = vmatmul.mubr.f32.gmra.mrb[0].mxu0 %v1372
    %v1651 = vpop.f32.mrb[0].mxu0
    %v1652 = vadd.f32 %v1507, %v1651
    %v1653 = vpop.f32.mrb[0].mxu0
    %1654 = vmatprep.mubr.f32.mxu0 0.0
    %1655 = vmatmul.mubr.f32.gmra.mrb[0].mxu0 %v1373
    %v1656 = vpop.f32.mrb[0].mxu0
    %v1657 = vadd.f32 %v1512, %v1656
    %v1658 = vpop.f32.mrb[0].mxu0
    %1659 = vmatprep.mubr.f32.mxu0 0.0
    %1660 = vmatmul.mubr.f32.gmra.mrb[0].mxu0 %v1374
    %v1661 = vpop.f32.mrb[0].mxu0
    %v1662 = vadd.f32 %v1517, %v1661
    %v1663 = vpop.f32.mrb[0].mxu0
    %1664 = vdwg.mxu0
    %v1665 = vadd.f32 %v1587, %v631
    %v1666 = vadd.f32 %v1592, %v631
    %v1667 = vadd.f32 %v1597, %v631
    %v1668 = vadd.f32 %v1602, %v631
    %v1669 = vadd.f32 %v1607, %v631
    %v1670 = vadd.f32 %v1612, %v631
    %v1671 = vadd.f32 %v1617, %v631
    %v1672 = vadd.f32 %v1622, %v631
    %v1673 = vadd.f32 %v1627, %v631
    %v1674 = vadd.f32 %v1632, %v631
    %v1675 = vadd.f32 %v1637, %v631
    %v1676 = vadd.f32 %v1642, %v631
    %v1677 = vadd.f32 %v1647, %v631
    %v1678 = vadd.f32 %v1652, %v631
    %v1679 = vadd.f32 %v1657, %v631
    %v1680 = vadd.f32 %v1662, %v631
    %v1681 = vtanh.pop %v1665
    %v1682 = vtanh.pop %v1666
    %v1683 = vtanh.pop %v1667
    %v1684 = vtanh.pop %v1668
    %v1685 = vtanh.pop %v1669
    %v1686 = vtanh.pop %v1670
    %v1687 = vtanh.pop %v1671
    %v1688 = vtanh.pop %v1672
    %v1689 = vtanh.pop %v1673
    %v1690 = vtanh.pop %v1674
    %v1691 = vtanh.pop %v1675
    %v1692 = vtanh.pop %v1676
    %v1693 = vtanh.pop %v1677
    %v1694 = vtanh.pop %v1678
    %v1695 = vtanh.pop %v1679
    %v1696 = vtanh.pop %v1680
    %s1697 = scalar_lea.vmem [#allocation2], 384
    %v1698 = vld [vmem:[%s1697] sm:$0xff]
    %v1699 = vld [vmem:[%s1697 + $0x8] sm:$0xff]
    %v1700 = vld [vmem:[%s1697 + $0x10] sm:$0xff]
    %v1701 = vld [vmem:[%s1697 + $0x18] sm:$0xff]
    %v1702 = vld [vmem:[%s1697 + $0x20] sm:$0xff]
    %v1703 = vld [vmem:[%s1697 + $0x28] sm:$0xff]
    %v1704 = vld [vmem:[%s1697 + $0x30] sm:$0xff]
    %v1705 = vld [vmem:[%s1697 + $0x38] sm:$0xff]
    %v1706 = vld [vmem:[%s1697 + $0x40] sm:$0xff]
    %v1707 = vld [vmem:[%s1697 + $0x48] sm:$0xff]
    %v1708 = vld [vmem:[%s1697 + $0x50] sm:$0xff]
    %v1709 = vld [vmem:[%s1697 + $0x58] sm:$0xff]
    %v1710 = vld [vmem:[%s1697 + $0x60] sm:$0xff]
    %v1711 = vld [vmem:[%s1697 + $0x68] sm:$0xff]
    %v1712 = vld [vmem:[%s1697 + $0x70] sm:$0xff]
    %v1713 = vld [vmem:[%s1697 + $0x78] sm:$0xff]
    %1714 = vmatprep.subr.mxu0 0.0
    %1715 = vmatpush1.msra.mxu0 %v111
    %1716 = vmatprep.subr.mxu0 0.0
    %1717 = vmatpush1.msra.mxu0 %v112
    %1718 = vmatprep.subr.mxu0 0.0
    %1719 = vmatpush1.msra.mxu0 %v113
    %1720 = vmatprep.subr.mxu0 0.0
    %1721 = vmatpush1.msra.mxu0 %v114
    %1722 = vmatprep.subr.mxu0 0.0
    %1723 = vmatpush1.msra.mxu0 %v115
    %1724 = vmatprep.subr.mxu0 0.0
    %1725 = vmatpush1.msra.mxu0 %v116
    %1726 = vmatprep.subr.mxu0 0.0
    %1727 = vmatpush1.msra.mxu0 %v117
    %1728 = vmatprep.subr.mxu0 0.0
    %1729 = vmatpush1.msra.mxu0 %v118
    %1730 = vmatprep.subr.mxu0 0.0
    %1731 = vmatpush1.msra.mxu0 %v119
    %1732 = vmatprep.subr.mxu0 0.0
    %1733 = vmatpush1.msra.mxu0 %v120
    %1734 = vmatprep.subr.mxu0 0.0
    %1735 = vmatpush1.msra.mxu0 %v121
    %1736 = vmatprep.subr.mxu0 0.0
    %1737 = vmatpush1.msra.mxu0 %v122
    %1738 = vmatprep.subr.mxu0 0.0
    %1739 = vmatpush1.msra.mxu0 %v123
    %1740 = vmatprep.subr.mxu0 0.0
    %1741 = vmatpush1.msra.mxu0 %v124
    %1742 = vmatprep.subr.mxu0 0.0
    %1743 = vmatpush1.msra.mxu0 %v125
    %1744 = vmatprep.subr.mxu0 0.0
    %1745 = vmatpush1.msra.mxu0 %v126
    %1746 = vmatprep.subr.mxu0 0.0
    %1747 = vmatpush1.msra.mxu0 0.0
    %1748 = vmatprep.subr.mxu0 0.0
    %1749 = vmatpush1.msra.mxu0 0.0
    %1750 = vmatprep.subr.mxu0 0.0
    %1751 = vmatpush1.msra.mxu0 0.0
    %1752 = vmatprep.subr.mxu0 0.0
    %1753 = vmatpush1.msra.mxu0 0.0
    %1754 = vmatprep.subr.mxu0 0.0
    %1755 = vmatpush1.msra.mxu0 0.0
    %1756 = vmatprep.subr.mxu0 0.0
    %1757 = vmatpush1.msra.mxu0 0.0
    %1758 = vmatprep.subr.mxu0 0.0
    %1759 = vmatpush1.msra.mxu0 0.0
    %1760 = vmatprep.subr.mxu0 0.0
    %1761 = vmatpush1.msra.mxu0 0.0
    %1762 = vmatprep.subr.mxu0 0.0
    %1763 = vmatpush1.msra.mxu0 0.0
    %1764 = vmatprep.subr.mxu0 0.0
    %1765 = vmatpush1.msra.mxu0 0.0
    %1766 = vmatprep.subr.mxu0 0.0
    %1767 = vmatpush1.msra.mxu0 0.0
    %1768 = vmatprep.subr.mxu0 0.0
    %1769 = vmatpush1.msra.mxu0 0.0
    %1770 = vmatprep.subr.mxu0 0.0
    %1771 = vmatpush1.msra.mxu0 0.0
    %1772 = vmatprep.subr.mxu0 0.0
    %1773 = vmatpush1.msra.mxu0 0.0
    %1774 = vmatprep.subr.mxu0 0.0
    %1775 = vmatpush1.msra.mxu0 0.0
    %1776 = vmatprep.subr.mxu0 0.0
    %1777 = vmatpush1.msra.mxu0 0.0
    %1778 = vmatprep.mubr.f32.mxu0 0.0
    %1779 = vmatmul.mubr.f32.gmra.mrb[0].mxu0 %v1359
    %v1780 = vpop.f32.mrb[0].mxu0
    %v1781 = vadd.f32 0.0, %v1780
    %v1782 = vpop.f32.mrb[0].mxu0
    %1783 = vmatprep.mubr.f32.mxu0 0.0
    %1784 = vmatmul.mubr.f32.gmra.mrb[0].mxu0 %v1360
    %v1785 = vpop.f32.mrb[0].mxu0
    %v1786 = vadd.f32 0.0, %v1785
    %v1787 = vpop.f32.mrb[0].mxu0
    %1788 = vmatprep.mubr.f32.mxu0 0.0
    %1789 = vmatmul.mubr.f32.gmra.mrb[0].mxu0 %v1361
    %v1790 = vpop.f32.mrb[0].mxu0
    %v1791 = vadd.f32 0.0, %v1790
    %v1792 = vpop.f32.mrb[0].mxu0
    %1793 = vmatprep.mubr.f32.mxu0 0.0
    %1794 = vmatmul.mubr.f32.gmra.mrb[0].mxu0 %v1362
    %v1795 = vpop.f32.mrb[0].mxu0
    %v1796 = vadd.f32 0.0, %v1795
    %v1797 = vpop.f32.mrb[0].mxu0
    %1798 = vmatprep.mubr.f32.mxu0 0.0
    %1799 = vmatmul.mubr.f32.gmra.mrb[0].mxu0 %v1363
    %v1800 = vpop.f32.mrb[0].mxu0
    %v1801 = vadd.f32 0.0, %v1800
    %v1802 = vpop.f32.mrb[0].mxu0
    %1803 = vmatprep.mubr.f32.mxu0 0.0
    %1804 = vmatmul.mubr.f32.gmra.mrb[0].mxu0 %v1364
    %v1805 = vpop.f32.mrb[0].mxu0
    %v1806 = vadd.f32 0.0, %v1805
    %v1807 = vpop.f32.mrb[0].mxu0
    %1808 = vmatprep.mubr.f32.mxu0 0.0
    %1809 = vmatmul.mubr.f32.gmra.mrb[0].mxu0 %v1365
    %v1810 = vpop.f32.mrb[0].mxu0
    %v1811 = vadd.f32 0.0, %v1810
    %v1812 = vpop.f32.mrb[0].mxu0
    %1813 = vmatprep.mubr.f32.mxu0 0.0
    %1814 = vmatmul.mubr.f32.gmra.mrb[0].mxu0 %v1366
    %v1815 = vpop.f32.mrb[0].mxu0
    %v1816 = vadd.f32 0.0, %v1815
    %v1817 = vpop.f32.mrb[0].mxu0
    %1818 = vmatprep.mubr.f32.mxu0 0.0
    %1819 = vmatmul.mubr.f32.gmra.mrb[0].mxu0 %v1367
    %v1820 = vpop.f32.mrb[0].mxu0
    %v1821 = vadd.f32 0.0, %v1820
    %v1822 = vpop.f32.mrb[0].mxu0
    %1823 = vmatprep.mubr.f32.mxu0 0.0
    %1824 = vmatmul.mubr.f32.gmra.mrb[0].mxu0 %v1368
    %v1825 = vpop.f32.mrb[0].mxu0
    %v1826 = vadd.f32 0.0, %v1825
    %v1827 = vpop.f32.mrb[0].mxu0
    %1828 = vmatprep.mubr.f32.mxu0 0.0
    %1829 = vmatmul.mubr.f32.gmra.mrb[0].mxu0 %v1369
    %v1830 = vpop.f32.mrb[0].mxu0
    %v1831 = vadd.f32 0.0, %v1830
    %v1832 = vpop.f32.mrb[0].mxu0
    %1833 = vmatprep.mubr.f32.mxu0 0.0
    %1834 = vmatmul.mubr.f32.gmra.mrb[0].mxu0 %v1370
    %v1835 = vpop.f32.mrb[0].mxu0
    %v1836 = vadd.f32 0.0, %v1835
    %v1837 = vpop.f32.mrb[0].mxu0
    %1838 = vmatprep.mubr.f32.mxu0 0.0
    %1839 = vmatmul.mubr.f32.gmra.mrb[0].mxu0 %v1371
    %v1840 = vpop.f32.mrb[0].mxu0
    %v1841 = vadd.f32 0.0, %v1840
    %v1842 = vpop.f32.mrb[0].mxu0
    %1843 = vmatprep.mubr.f32.mxu0 0.0
    %1844 = vmatmul.mubr.f32.gmra.mrb[0].mxu0 %v1372
    %v1845 = vpop.f32.mrb[0].mxu0
    %v1846 = vadd.f32 0.0, %v1845
    %v1847 = vpop.f32.mrb[0].mxu0
    %1848 = vmatprep.mubr.f32.mxu0 0.0
    %1849 = vmatmul.mubr.f32.gmra.mrb[0].mxu0 %v1373
    %v1850 = vpop.f32.mrb[0].mxu0
    %v1851 = vadd.f32 0.0, %v1850
    %v1852 = vpop.f32.mrb[0].mxu0
    %1853 = vmatprep.mubr.f32.mxu0 0.0
    %1854 = vmatmul.mubr.f32.gmra.mrb[0].mxu0 %v1374
    %v1855 = vpop.f32.mrb[0].mxu0
    %v1856 = vadd.f32 0.0, %v1855
    %v1857 = vpop.f32.mrb[0].mxu0
    %1858 = vdwg.mxu0
    %v1859 = vadd.f32 %v1698, %v1781
    %v1860 = vadd.f32 %v1699, %v1786
    %v1861 = vadd.f32 %v1700, %v1791
    %v1862 = vadd.f32 %v1701, %v1796
    %v1863 = vadd.f32 %v1702, %v1801
    %v1864 = vadd.f32 %v1703, %v1806
    %v1865 = vadd.f32 %v1704, %v1811
    %v1866 = vadd.f32 %v1705, %v1816
    %v1867 = vadd.f32 %v1706, %v1821
    %v1868 = vadd.f32 %v1707, %v1826
    %v1869 = vadd.f32 %v1708, %v1831
    %v1870 = vadd.f32 %v1709, %v1836
    %v1871 = vadd.f32 %v1710, %v1841
    %v1872 = vadd.f32 %v1711, %v1846
    %v1873 = vadd.f32 %v1712, %v1851
    %v1874 = vadd.f32 %v1713, %v1856
    %v1875 = vtanh.pop %v1859
    %v1876 = vtanh.pop %v1860
    %v1877 = vtanh.pop %v1861
    %v1878 = vtanh.pop %v1862
    %v1879 = vtanh.pop %v1863
    %v1880 = vtanh.pop %v1864
    %v1881 = vtanh.pop %v1865
    %v1882 = vtanh.pop %v1866
    %v1883 = vtanh.pop %v1867
    %v1884 = vtanh.pop %v1868
    %v1885 = vtanh.pop %v1869
    %v1886 = vtanh.pop %v1870
    %v1887 = vtanh.pop %v1871
    %v1888 = vtanh.pop %v1872
    %v1889 = vtanh.pop %v1873
    %v1890 = vtanh.pop %v1874
    %1891 = vmatprep.subr.mxu0 0.0
    %1892 = vmatpush1.msra.mxu0 %v320
    %1893 = vmatprep.subr.mxu0 0.0
    %1894 = vmatpush1.msra.mxu0 %v321
    %1895 = vmatprep.subr.mxu0 0.0
    %1896 = vmatpush1.msra.mxu0 %v322
    %1897 = vmatprep.subr.mxu0 0.0
    %1898 = vmatpush1.msra.mxu0 %v323
    %1899 = vmatprep.subr.mxu0 0.0
    %1900 = vmatpush1.msra.mxu0 %v324
    %1901 = vmatprep.subr.mxu0 0.0
    %1902 = vmatpush1.msra.mxu0 %v325
    %1903 = vmatprep.subr.mxu0 0.0
    %1904 = vmatpush1.msra.mxu0 %v326
    %1905 = vmatprep.subr.mxu0 0.0
    %1906 = vmatpush1.msra.mxu0 %v327
    %1907 = vmatprep.subr.mxu0 0.0
    %1908 = vmatpush1.msra.mxu0 %v328
    %1909 = vmatprep.subr.mxu0 0.0
    %1910 = vmatpush1.msra.mxu0 %v329
    %1911 = vmatprep.subr.mxu0 0.0
    %1912 = vmatpush1.msra.mxu0 %v330
    %1913 = vmatprep.subr.mxu0 0.0
    %1914 = vmatpush1.msra.mxu0 %v331
    %1915 = vmatprep.subr.mxu0 0.0
    %1916 = vmatpush1.msra.mxu0 %v332
    %1917 = vmatprep.subr.mxu0 0.0
    %1918 = vmatpush1.msra.mxu0 %v333
    %1919 = vmatprep.subr.mxu0 0.0
    %1920 = vmatpush1.msra.mxu0 %v334
    %1921 = vmatprep.subr.mxu0 0.0
    %1922 = vmatpush1.msra.mxu0 %v335
    %1923 = vmatprep.subr.mxu0 0.0
    %1924 = vmatpush1.msra.mxu0 0.0
    %1925 = vmatprep.subr.mxu0 0.0
    %1926 = vmatpush1.msra.mxu0 0.0
    %1927 = vmatprep.subr.mxu0 0.0
    %1928 = vmatpush1.msra.mxu0 0.0
    %1929 = vmatprep.subr.mxu0 0.0
    %1930 = vmatpush1.msra.mxu0 0.0
    %1931 = vmatprep.subr.mxu0 0.0
    %1932 = vmatpush1.msra.mxu0 0.0
    %1933 = vmatprep.subr.mxu0 0.0
    %1934 = vmatpush1.msra.mxu0 0.0
    %1935 = vmatprep.subr.mxu0 0.0
    %1936 = vmatpush1.msra.mxu0 0.0
    %1937 = vmatprep.subr.mxu0 0.0
    %1938 = vmatpush1.msra.mxu0 0.0
    %1939 = vmatprep.subr.mxu0 0.0
    %1940 = vmatpush1.msra.mxu0 0.0
    %1941 = vmatprep.subr.mxu0 0.0
    %1942 = vmatpush1.msra.mxu0 0.0
    %1943 = vmatprep.subr.mxu0 0.0
    %1944 = vmatpush1.msra.mxu0 0.0
    %1945 = vmatprep.subr.mxu0 0.0
    %1946 = vmatpush1.msra.mxu0 0.0
    %1947 = vmatprep.subr.mxu0 0.0
    %1948 = vmatpush1.msra.mxu0 0.0
    %1949 = vmatprep.subr.mxu0 0.0
    %1950 = vmatpush1.msra.mxu0 0.0
    %1951 = vmatprep.subr.mxu0 0.0
    %1952 = vmatpush1.msra.mxu0 0.0
    %1953 = vmatprep.subr.mxu0 0.0
    %1954 = vmatpush1.msra.mxu0 0.0
    %1955 = vmatprep.mubr.f32.mxu0 0.0
    %1956 = vmatmul.mubr.f32.gmra.mrb[0].mxu0 %v1681
    %v1957 = vpop.f32.mrb[0].mxu0
    %v1958 = vadd.f32 0.0, %v1957
    %v1959 = vpop.f32.mrb[0].mxu0
    %1960 = vmatprep.mubr.f32.mxu0 0.0
    %1961 = vmatmul.mubr.f32.gmra.mrb[0].mxu0 %v1682
    %v1962 = vpop.f32.mrb[0].mxu0
    %v1963 = vadd.f32 0.0, %v1962
    %v1964 = vpop.f32.mrb[0].mxu0
    %1965 = vmatprep.mubr.f32.mxu0 0.0
    %1966 = vmatmul.mubr.f32.gmra.mrb[0].mxu0 %v1683
    %v1967 = vpop.f32.mrb[0].mxu0
    %v1968 = vadd.f32 0.0, %v1967
    %v1969 = vpop.f32.mrb[0].mxu0
    %1970 = vmatprep.mubr.f32.mxu0 0.0
    %1971 = vmatmul.mubr.f32.gmra.mrb[0].mxu0 %v1684
    %v1972 = vpop.f32.mrb[0].mxu0
    %v1973 = vadd.f32 0.0, %v1972
    %v1974 = vpop.f32.mrb[0].mxu0
    %1975 = vmatprep.mubr.f32.mxu0 0.0
    %1976 = vmatmul.mubr.f32.gmra.mrb[0].mxu0 %v1685
    %v1977 = vpop.f32.mrb[0].mxu0
    %v1978 = vadd.f32 0.0, %v1977
    %v1979 = vpop.f32.mrb[0].mxu0
    %1980 = vmatprep.mubr.f32.mxu0 0.0
    %1981 = vmatmul.mubr.f32.gmra.mrb[0].mxu0 %v1686
    %v1982 = vpop.f32.mrb[0].mxu0
    %v1983 = vadd.f32 0.0, %v1982
    %v1984 = vpop.f32.mrb[0].mxu0
    %1985 = vmatprep.mubr.f32.mxu0 0.0
    %1986 = vmatmul.mubr.f32.gmra.mrb[0].mxu0 %v1687
    %v1987 = vpop.f32.mrb[0].mxu0
    %v1988 = vadd.f32 0.0, %v1987
    %v1989 = vpop.f32.mrb[0].mxu0
    %1990 = vmatprep.mubr.f32.mxu0 0.0
    %1991 = vmatmul.mubr.f32.gmra.mrb[0].mxu0 %v1688
    %v1992 = vpop.f32.mrb[0].mxu0
    %v1993 = vadd.f32 0.0, %v1992
    %v1994 = vpop.f32.mrb[0].mxu0
    %1995 = vmatprep.mubr.f32.mxu0 0.0
    %1996 = vmatmul.mubr.f32.gmra.mrb[0].mxu0 %v1689
    %v1997 = vpop.f32.mrb[0].mxu0
    %v1998 = vadd.f32 0.0, %v1997
    %v1999 = vpop.f32.mrb[0].mxu0
    %2000 = vmatprep.mubr.f32.mxu0 0.0
    %2001 = vmatmul.mubr.f32.gmra.mrb[0].mxu0 %v1690
    %v2002 = vpop.f32.mrb[0].mxu0
    %v2003 = vadd.f32 0.0, %v2002
    %v2004 = vpop.f32.mrb[0].mxu0
    %2005 = vmatprep.mubr.f32.mxu0 0.0
    %2006 = vmatmul.mubr.f32.gmra.mrb[0].mxu0 %v1691
    %v2007 = vpop.f32.mrb[0].mxu0
    %v2008 = vadd.f32 0.0, %v2007
    %v2009 = vpop.f32.mrb[0].mxu0
    %2010 = vmatprep.mubr.f32.mxu0 0.0
    %2011 = vmatmul.mubr.f32.gmra.mrb[0].mxu0 %v1692
    %v2012 = vpop.f32.mrb[0].mxu0
    %v2013 = vadd.f32 0.0, %v2012
    %v2014 = vpop.f32.mrb[0].mxu0
    %2015 = vmatprep.mubr.f32.mxu0 0.0
    %2016 = vmatmul.mubr.f32.gmra.mrb[0].mxu0 %v1693
    %v2017 = vpop.f32.mrb[0].mxu0
    %v2018 = vadd.f32 0.0, %v2017
    %v2019 = vpop.f32.mrb[0].mxu0
    %2020 = vmatprep.mubr.f32.mxu0 0.0
    %2021 = vmatmul.mubr.f32.gmra.mrb[0].mxu0 %v1694
    %v2022 = vpop.f32.mrb[0].mxu0
    %v2023 = vadd.f32 0.0, %v2022
    %v2024 = vpop.f32.mrb[0].mxu0
    %2025 = vmatprep.mubr.f32.mxu0 0.0
    %2026 = vmatmul.mubr.f32.gmra.mrb[0].mxu0 %v1695
    %v2027 = vpop.f32.mrb[0].mxu0
    %v2028 = vadd.f32 0.0, %v2027
    %v2029 = vpop.f32.mrb[0].mxu0
    %2030 = vmatprep.mubr.f32.mxu0 0.0
    %2031 = vmatmul.mubr.f32.gmra.mrb[0].mxu0 %v1696
    %v2032 = vpop.f32.mrb[0].mxu0
    %v2033 = vadd.f32 0.0, %v2032
    %v2034 = vpop.f32.mrb[0].mxu0
    %2035 = vdwg.mxu0
    %2036 = vmatprep.subr.mxu0 0.0
    %2037 = vmatpush1.msra.mxu0 %v304
    %2038 = vmatprep.subr.mxu0 0.0
    %2039 = vmatpush1.msra.mxu0 %v305
    %2040 = vmatprep.subr.mxu0 0.0
    %2041 = vmatpush1.msra.mxu0 %v306
    %2042 = vmatprep.subr.mxu0 0.0
    %2043 = vmatpush1.msra.mxu0 %v307
    %2044 = vmatprep.subr.mxu0 0.0
    %2045 = vmatpush1.msra.mxu0 %v308
    %2046 = vmatprep.subr.mxu0 0.0
    %2047 = vmatpush1.msra.mxu0 %v309
    %2048 = vmatprep.subr.mxu0 0.0
    %2049 = vmatpush1.msra.mxu0 %v310
    %2050 = vmatprep.subr.mxu0 0.0
    %2051 = vmatpush1.msra.mxu0 %v311
    %2052 = vmatprep.subr.mxu0 0.0
    %2053 = vmatpush1.msra.mxu0 %v312
    %2054 = vmatprep.subr.mxu0 0.0
    %2055 = vmatpush1.msra.mxu0 %v313
    %2056 = vmatprep.subr.mxu0 0.0
    %2057 = vmatpush1.msra.mxu0 %v314
    %2058 = vmatprep.subr.mxu0 0.0
    %2059 = vmatpush1.msra.mxu0 %v315
    %2060 = vmatprep.subr.mxu0 0.0
    %2061 = vmatpush1.msra.mxu0 %v316
    %2062 = vmatprep.subr.mxu0 0.0
    %2063 = vmatpush1.msra.mxu0 %v317
    %2064 = vmatprep.subr.mxu0 0.0
    %2065 = vmatpush1.msra.mxu0 %v318
    %2066 = vmatprep.subr.mxu0 0.0
    %2067 = vmatpush1.msra.mxu0 %v319
    %2068 = vmatprep.subr.mxu0 0.0
    %2069 = vmatpush1.msra.mxu0 0.0
    %2070 = vmatprep.subr.mxu0 0.0
    %2071 = vmatpush1.msra.mxu0 0.0
    %2072 = vmatprep.subr.mxu0 0.0
    %2073 = vmatpush1.msra.mxu0 0.0
    %2074 = vmatprep.subr.mxu0 0.0
    %2075 = vmatpush1.msra.mxu0 0.0
    %2076 = vmatprep.subr.mxu0 0.0
    %2077 = vmatpush1.msra.mxu0 0.0
    %2078 = vmatprep.subr.mxu0 0.0
    %2079 = vmatpush1.msra.mxu0 0.0
    %2080 = vmatprep.subr.mxu0 0.0
    %2081 = vmatpush1.msra.mxu0 0.0
    %2082 = vmatprep.subr.mxu0 0.0
    %2083 = vmatpush1.msra.mxu0 0.0
    %2084 = vmatprep.subr.mxu0 0.0
    %2085 = vmatpush1.msra.mxu0 0.0
    %2086 = vmatprep.subr.mxu0 0.0
    %2087 = vmatpush1.msra.mxu0 0.0
    %2088 = vmatprep.subr.mxu0 0.0
    %2089 = vmatpush1.msra.mxu0 0.0
    %2090 = vmatprep.subr.mxu0 0.0
    %2091 = vmatpush1.msra.mxu0 0.0
    %2092 = vmatprep.subr.mxu0 0.0
    %2093 = vmatpush1.msra.mxu0 0.0
    %2094 = vmatprep.subr.mxu0 0.0
    %2095 = vmatpush1.msra.mxu0 0.0
    %2096 = vmatprep.subr.mxu0 0.0
    %2097 = vmatpush1.msra.mxu0 0.0
    %2098 = vmatprep.subr.mxu0 0.0
    %2099 = vmatpush1.msra.mxu0 0.0
    %2100 = vmatprep.mubr.f32.mxu0 0.0
    %2101 = vmatmul.mubr.f32.gmra.mrb[0].mxu0 %v1875
    %v2102 = vpop.f32.mrb[0].mxu0
    %v2103 = vadd.f32 %v1958, %v2102
    %v2104 = vpop.f32.mrb[0].mxu0
    %2105 = vmatprep.mubr.f32.mxu0 0.0
    %2106 = vmatmul.mubr.f32.gmra.mrb[0].mxu0 %v1876
    %v2107 = vpop.f32.mrb[0].mxu0
    %v2108 = vadd.f32 %v1963, %v2107
    %v2109 = vpop.f32.mrb[0].mxu0
    %2110 = vmatprep.mubr.f32.mxu0 0.0
    %2111 = vmatmul.mubr.f32.gmra.mrb[0].mxu0 %v1877
    %v2112 = vpop.f32.mrb[0].mxu0
    %v2113 = vadd.f32 %v1968, %v2112
    %v2114 = vpop.f32.mrb[0].mxu0
    %2115 = vmatprep.mubr.f32.mxu0 0.0
    %2116 = vmatmul.mubr.f32.gmra.mrb[0].mxu0 %v1878
    %v2117 = vpop.f32.mrb[0].mxu0
    %v2118 = vadd.f32 %v1973, %v2117
    %v2119 = vpop.f32.mrb[0].mxu0
    %2120 = vmatprep.mubr.f32.mxu0 0.0
    %2121 = vmatmul.mubr.f32.gmra.mrb[0].mxu0 %v1879
    %v2122 = vpop.f32.mrb[0].mxu0
    %v2123 = vadd.f32 %v1978, %v2122
    %v2124 = vpop.f32.mrb[0].mxu0
    %2125 = vmatprep.mubr.f32.mxu0 0.0
    %2126 = vmatmul.mubr.f32.gmra.mrb[0].mxu0 %v1880
    %v2127 = vpop.f32.mrb[0].mxu0
    %v2128 = vadd.f32 %v1983, %v2127
    %v2129 = vpop.f32.mrb[0].mxu0
    %2130 = vmatprep.mubr.f32.mxu0 0.0
    %2131 = vmatmul.mubr.f32.gmra.mrb[0].mxu0 %v1881
    %v2132 = vpop.f32.mrb[0].mxu0
    %v2133 = vadd.f32 %v1988, %v2132
    %v2134 = vpop.f32.mrb[0].mxu0
    %2135 = vmatprep.mubr.f32.mxu0 0.0
    %2136 = vmatmul.mubr.f32.gmra.mrb[0].mxu0 %v1882
    %v2137 = vpop.f32.mrb[0].mxu0
    %v2138 = vadd.f32 %v1993, %v2137
    %v2139 = vpop.f32.mrb[0].mxu0
    %2140 = vmatprep.mubr.f32.mxu0 0.0
    %2141 = vmatmul.mubr.f32.gmra.mrb[0].mxu0 %v1883
    %v2142 = vpop.f32.mrb[0].mxu0
    %v2143 = vadd.f32 %v1998, %v2142
    %v2144 = vpop.f32.mrb[0].mxu0
    %2145 = vmatprep.mubr.f32.mxu0 0.0
    %2146 = vmatmul.mubr.f32.gmra.mrb[0].mxu0 %v1884
    %v2147 = vpop.f32.mrb[0].mxu0
    %v2148 = vadd.f32 %v2003, %v2147
    %v2149 = vpop.f32.mrb[0].mxu0
    %2150 = vmatprep.mubr.f32.mxu0 0.0
    %2151 = vmatmul.mubr.f32.gmra.mrb[0].mxu0 %v1885
    %v2152 = vpop.f32.mrb[0].mxu0
    %v2153 = vadd.f32 %v2008, %v2152
    %v2154 = vpop.f32.mrb[0].mxu0
    %2155 = vmatprep.mubr.f32.mxu0 0.0
    %2156 = vmatmul.mubr.f32.gmra.mrb[0].mxu0 %v1886
    %v2157 = vpop.f32.mrb[0].mxu0
    %v2158 = vadd.f32 %v2013, %v2157
    %v2159 = vpop.f32.mrb[0].mxu0
    %2160 = vmatprep.mubr.f32.mxu0 0.0
    %2161 = vmatmul.mubr.f32.gmra.mrb[0].mxu0 %v1887
    %v2162 = vpop.f32.mrb[0].mxu0
    %v2163 = vadd.f32 %v2018, %v2162
    %v2164 = vpop.f32.mrb[0].mxu0
    %2165 = vmatprep.mubr.f32.mxu0 0.0
    %2166 = vmatmul.mubr.f32.gmra.mrb[0].mxu0 %v1888
    %v2167 = vpop.f32.mrb[0].mxu0
    %v2168 = vadd.f32 %v2023, %v2167
    %v2169 = vpop.f32.mrb[0].mxu0
    %2170 = vmatprep.mubr.f32.mxu0 0.0
    %2171 = vmatmul.mubr.f32.gmra.mrb[0].mxu0 %v1889
    %v2172 = vpop.f32.mrb[0].mxu0
    %v2173 = vadd.f32 %v2028, %v2172
    %v2174 = vpop.f32.mrb[0].mxu0
    %2175 = vmatprep.mubr.f32.mxu0 0.0
    %2176 = vmatmul.mubr.f32.gmra.mrb[0].mxu0 %v1890
    %v2177 = vpop.f32.mrb[0].mxu0
    %v2178 = vadd.f32 %v2033, %v2177
    %v2179 = vpop.f32.mrb[0].mxu0
    %2180 = vdwg.mxu0
    %v2181 = vadd.f32 %v2103, %v631
    %v2182 = vadd.f32 %v2108, %v631
    %v2183 = vadd.f32 %v2113, %v631
    %v2184 = vadd.f32 %v2118, %v631
    %v2185 = vadd.f32 %v2123, %v631
    %v2186 = vadd.f32 %v2128, %v631
    %v2187 = vadd.f32 %v2133, %v631
    %v2188 = vadd.f32 %v2138, %v631
    %v2189 = vadd.f32 %v2143, %v631
    %v2190 = vadd.f32 %v2148, %v631
    %v2191 = vadd.f32 %v2153, %v631
    %v2192 = vadd.f32 %v2158, %v631
    %v2193 = vadd.f32 %v2163, %v631
    %v2194 = vadd.f32 %v2168, %v631
    %v2195 = vadd.f32 %v2173, %v631
    %v2196 = vadd.f32 %v2178, %v631
    %v2197 = vtanh.pop %v2181
    %v2198 = vtanh.pop %v2182
    %v2199 = vtanh.pop %v2183
    %v2200 = vtanh.pop %v2184
    %v2201 = vtanh.pop %v2185
    %v2202 = vtanh.pop %v2186
    %v2203 = vtanh.pop %v2187
    %v2204 = vtanh.pop %v2188
    %v2205 = vtanh.pop %v2189
    %v2206 = vtanh.pop %v2190
    %v2207 = vtanh.pop %v2191
    %v2208 = vtanh.pop %v2192
    %v2209 = vtanh.pop %v2193
    %v2210 = vtanh.pop %v2194
    %v2211 = vtanh.pop %v2195
    %v2212 = vtanh.pop %v2196
    %s2213 = scalar_lea.vmem [#allocation2], 512
    %v2214 = vld [vmem:[%s2213] sm:$0xff]
    %v2215 = vld [vmem:[%s2213 + $0x8] sm:$0xff]
    %v2216 = vld [vmem:[%s2213 + $0x10] sm:$0xff]
    %v2217 = vld [vmem:[%s2213 + $0x18] sm:$0xff]
    %v2218 = vld [vmem:[%s2213 + $0x20] sm:$0xff]
    %v2219 = vld [vmem:[%s2213 + $0x28] sm:$0xff]
    %v2220 = vld [vmem:[%s2213 + $0x30] sm:$0xff]
    %v2221 = vld [vmem:[%s2213 + $0x38] sm:$0xff]
    %v2222 = vld [vmem:[%s2213 + $0x40] sm:$0xff]
    %v2223 = vld [vmem:[%s2213 + $0x48] sm:$0xff]
    %v2224 = vld [vmem:[%s2213 + $0x50] sm:$0xff]
    %v2225 = vld [vmem:[%s2213 + $0x58] sm:$0xff]
    %v2226 = vld [vmem:[%s2213 + $0x60] sm:$0xff]
    %v2227 = vld [vmem:[%s2213 + $0x68] sm:$0xff]
    %v2228 = vld [vmem:[%s2213 + $0x70] sm:$0xff]
    %v2229 = vld [vmem:[%s2213 + $0x78] sm:$0xff]
    %2230 = vmatprep.subr.mxu0 0.0
    %2231 = vmatpush1.msra.mxu0 %v111
    %2232 = vmatprep.subr.mxu0 0.0
    %2233 = vmatpush1.msra.mxu0 %v112
    %2234 = vmatprep.subr.mxu0 0.0
    %2235 = vmatpush1.msra.mxu0 %v113
    %2236 = vmatprep.subr.mxu0 0.0
    %2237 = vmatpush1.msra.mxu0 %v114
    %2238 = vmatprep.subr.mxu0 0.0
    %2239 = vmatpush1.msra.mxu0 %v115
    %2240 = vmatprep.subr.mxu0 0.0
    %2241 = vmatpush1.msra.mxu0 %v116
    %2242 = vmatprep.subr.mxu0 0.0
    %2243 = vmatpush1.msra.mxu0 %v117
    %2244 = vmatprep.subr.mxu0 0.0
    %2245 = vmatpush1.msra.mxu0 %v118
    %2246 = vmatprep.subr.mxu0 0.0
    %2247 = vmatpush1.msra.mxu0 %v119
    %2248 = vmatprep.subr.mxu0 0.0
    %2249 = vmatpush1.msra.mxu0 %v120
    %2250 = vmatprep.subr.mxu0 0.0
    %2251 = vmatpush1.msra.mxu0 %v121
    %2252 = vmatprep.subr.mxu0 0.0
    %2253 = vmatpush1.msra.mxu0 %v122
    %2254 = vmatprep.subr.mxu0 0.0
    %2255 = vmatpush1.msra.mxu0 %v123
    %2256 = vmatprep.subr.mxu0 0.0
    %2257 = vmatpush1.msra.mxu0 %v124
    %2258 = vmatprep.subr.mxu0 0.0
    %2259 = vmatpush1.msra.mxu0 %v125
    %2260 = vmatprep.subr.mxu0 0.0
    %2261 = vmatpush1.msra.mxu0 %v126
    %2262 = vmatprep.subr.mxu0 0.0
    %2263 = vmatpush1.msra.mxu0 0.0
    %2264 = vmatprep.subr.mxu0 0.0
    %2265 = vmatpush1.msra.mxu0 0.0
    %2266 = vmatprep.subr.mxu0 0.0
    %2267 = vmatpush1.msra.mxu0 0.0
    %2268 = vmatprep.subr.mxu0 0.0
    %2269 = vmatpush1.msra.mxu0 0.0
    %2270 = vmatprep.subr.mxu0 0.0
    %2271 = vmatpush1.msra.mxu0 0.0
    %2272 = vmatprep.subr.mxu0 0.0
    %2273 = vmatpush1.msra.mxu0 0.0
    %2274 = vmatprep.subr.mxu0 0.0
    %2275 = vmatpush1.msra.mxu0 0.0
    %2276 = vmatprep.subr.mxu0 0.0
    %2277 = vmatpush1.msra.mxu0 0.0
    %2278 = vmatprep.subr.mxu0 0.0
    %2279 = vmatpush1.msra.mxu0 0.0
    %2280 = vmatprep.subr.mxu0 0.0
    %2281 = vmatpush1.msra.mxu0 0.0
    %2282 = vmatprep.subr.mxu0 0.0
    %2283 = vmatpush1.msra.mxu0 0.0
    %2284 = vmatprep.subr.mxu0 0.0
    %2285 = vmatpush1.msra.mxu0 0.0
    %2286 = vmatprep.subr.mxu0 0.0
    %2287 = vmatpush1.msra.mxu0 0.0
    %2288 = vmatprep.subr.mxu0 0.0
    %2289 = vmatpush1.msra.mxu0 0.0
    %2290 = vmatprep.subr.mxu0 0.0
    %2291 = vmatpush1.msra.mxu0 0.0
    %2292 = vmatprep.subr.mxu0 0.0
    %2293 = vmatpush1.msra.mxu0 0.0
    %2294 = vmatprep.mubr.f32.mxu0 0.0
    %2295 = vmatmul.mubr.f32.gmra.mrb[0].mxu0 %v1875
    %v2296 = vpop.f32.mrb[0].mxu0
    %v2297 = vadd.f32 0.0, %v2296
    %v2298 = vpop.f32.mrb[0].mxu0
    %2299 = vmatprep.mubr.f32.mxu0 0.0
    %2300 = vmatmul.mubr.f32.gmra.mrb[0].mxu0 %v1876
    %v2301 = vpop.f32.mrb[0].mxu0
    %v2302 = vadd.f32 0.0, %v2301
    %v2303 = vpop.f32.mrb[0].mxu0
    %2304 = vmatprep.mubr.f32.mxu0 0.0
    %2305 = vmatmul.mubr.f32.gmra.mrb[0].mxu0 %v1877
    %v2306 = vpop.f32.mrb[0].mxu0
    %v2307 = vadd.f32 0.0, %v2306
    %v2308 = vpop.f32.mrb[0].mxu0
    %2309 = vmatprep.mubr.f32.mxu0 0.0
    %2310 = vmatmul.mubr.f32.gmra.mrb[0].mxu0 %v1878
    %v2311 = vpop.f32.mrb[0].mxu0
    %v2312 = vadd.f32 0.0, %v2311
    %v2313 = vpop.f32.mrb[0].mxu0
    %2314 = vmatprep.mubr.f32.mxu0 0.0
    %2315 = vmatmul.mubr.f32.gmra.mrb[0].mxu0 %v1879
    %v2316 = vpop.f32.mrb[0].mxu0
    %v2317 = vadd.f32 0.0, %v2316
    %v2318 = vpop.f32.mrb[0].mxu0
    %2319 = vmatprep.mubr.f32.mxu0 0.0
    %2320 = vmatmul.mubr.f32.gmra.mrb[0].mxu0 %v1880
    %v2321 = vpop.f32.mrb[0].mxu0
    %v2322 = vadd.f32 0.0, %v2321
    %v2323 = vpop.f32.mrb[0].mxu0
    %2324 = vmatprep.mubr.f32.mxu0 0.0
    %2325 = vmatmul.mubr.f32.gmra.mrb[0].mxu0 %v1881
    %v2326 = vpop.f32.mrb[0].mxu0
    %v2327 = vadd.f32 0.0, %v2326
    %v2328 = vpop.f32.mrb[0].mxu0
    %2329 = vmatprep.mubr.f32.mxu0 0.0
    %2330 = vmatmul.mubr.f32.gmra.mrb[0].mxu0 %v1882
    %v2331 = vpop.f32.mrb[0].mxu0
    %v2332 = vadd.f32 0.0, %v2331
    %v2333 = vpop.f32.mrb[0].mxu0
    %2334 = vmatprep.mubr.f32.mxu0 0.0
    %2335 = vmatmul.mubr.f32.gmra.mrb[0].mxu0 %v1883
    %v2336 = vpop.f32.mrb[0].mxu0
    %v2337 = vadd.f32 0.0, %v2336
    %v2338 = vpop.f32.mrb[0].mxu0
    %2339 = vmatprep.mubr.f32.mxu0 0.0
    %2340 = vmatmul.mubr.f32.gmra.mrb[0].mxu0 %v1884
    %v2341 = vpop.f32.mrb[0].mxu0
    %v2342 = vadd.f32 0.0, %v2341
    %v2343 = vpop.f32.mrb[0].mxu0
    %2344 = vmatprep.mubr.f32.mxu0 0.0
    %2345 = vmatmul.mubr.f32.gmra.mrb[0].mxu0 %v1885
    %v2346 = vpop.f32.mrb[0].mxu0
    %v2347 = vadd.f32 0.0, %v2346
    %v2348 = vpop.f32.mrb[0].mxu0
    %2349 = vmatprep.mubr.f32.mxu0 0.0
    %2350 = vmatmul.mubr.f32.gmra.mrb[0].mxu0 %v1886
    %v2351 = vpop.f32.mrb[0].mxu0
    %v2352 = vadd.f32 0.0, %v2351
    %v2353 = vpop.f32.mrb[0].mxu0
    %2354 = vmatprep.mubr.f32.mxu0 0.0
    %2355 = vmatmul.mubr.f32.gmra.mrb[0].mxu0 %v1887
    %v2356 = vpop.f32.mrb[0].mxu0
    %v2357 = vadd.f32 0.0, %v2356
    %v2358 = vpop.f32.mrb[0].mxu0
    %2359 = vmatprep.mubr.f32.mxu0 0.0
    %2360 = vmatmul.mubr.f32.gmra.mrb[0].mxu0 %v1888
    %v2361 = vpop.f32.mrb[0].mxu0
    %v2362 = vadd.f32 0.0, %v2361
    %v2363 = vpop.f32.mrb[0].mxu0
    %2364 = vmatprep.mubr.f32.mxu0 0.0
    %2365 = vmatmul.mubr.f32.gmra.mrb[0].mxu0 %v1889
    %v2366 = vpop.f32.mrb[0].mxu0
    %v2367 = vadd.f32 0.0, %v2366
    %v2368 = vpop.f32.mrb[0].mxu0
    %2369 = vmatprep.mubr.f32.mxu0 0.0
    %2370 = vmatmul.mubr.f32.gmra.mrb[0].mxu0 %v1890
    %v2371 = vpop.f32.mrb[0].mxu0
    %v2372 = vadd.f32 0.0, %v2371
    %v2373 = vpop.f32.mrb[0].mxu0
    %2374 = vdwg.mxu0
    %v2375 = vadd.f32 %v2214, %v2297
    %v2376 = vadd.f32 %v2215, %v2302
    %v2377 = vadd.f32 %v2216, %v2307
    %v2378 = vadd.f32 %v2217, %v2312
    %v2379 = vadd.f32 %v2218, %v2317
    %v2380 = vadd.f32 %v2219, %v2322
    %v2381 = vadd.f32 %v2220, %v2327
    %v2382 = vadd.f32 %v2221, %v2332
    %v2383 = vadd.f32 %v2222, %v2337
    %v2384 = vadd.f32 %v2223, %v2342
    %v2385 = vadd.f32 %v2224, %v2347
    %v2386 = vadd.f32 %v2225, %v2352
    %v2387 = vadd.f32 %v2226, %v2357
    %v2388 = vadd.f32 %v2227, %v2362
    %v2389 = vadd.f32 %v2228, %v2367
    %v2390 = vadd.f32 %v2229, %v2372
    %v2391 = vtanh.pop %v2375
    %v2392 = vtanh.pop %v2376
    %v2393 = vtanh.pop %v2377
    %v2394 = vtanh.pop %v2378
    %v2395 = vtanh.pop %v2379
    %v2396 = vtanh.pop %v2380
    %v2397 = vtanh.pop %v2381
    %v2398 = vtanh.pop %v2382
    %v2399 = vtanh.pop %v2383
    %v2400 = vtanh.pop %v2384
    %v2401 = vtanh.pop %v2385
    %v2402 = vtanh.pop %v2386
    %v2403 = vtanh.pop %v2387
    %v2404 = vtanh.pop %v2388
    %v2405 = vtanh.pop %v2389
    %v2406 = vtanh.pop %v2390
    %2407 = vmatprep.subr.mxu0 0.0
    %2408 = vmatpush1.msra.mxu0 %v320
    %2409 = vmatprep.subr.mxu0 0.0
    %2410 = vmatpush1.msra.mxu0 %v321
    %2411 = vmatprep.subr.mxu0 0.0
    %2412 = vmatpush1.msra.mxu0 %v322
    %2413 = vmatprep.subr.mxu0 0.0
    %2414 = vmatpush1.msra.mxu0 %v323
    %2415 = vmatprep.subr.mxu0 0.0
    %2416 = vmatpush1.msra.mxu0 %v324
    %2417 = vmatprep.subr.mxu0 0.0
    %2418 = vmatpush1.msra.mxu0 %v325
    %2419 = vmatprep.subr.mxu0 0.0
    %2420 = vmatpush1.msra.mxu0 %v326
    %2421 = vmatprep.subr.mxu0 0.0
    %2422 = vmatpush1.msra.mxu0 %v327
    %2423 = vmatprep.subr.mxu0 0.0
    %2424 = vmatpush1.msra.mxu0 %v328
    %2425 = vmatprep.subr.mxu0 0.0
    %2426 = vmatpush1.msra.mxu0 %v329
    %2427 = vmatprep.subr.mxu0 0.0
    %2428 = vmatpush1.msra.mxu0 %v330
    %2429 = vmatprep.subr.mxu0 0.0
    %2430 = vmatpush1.msra.mxu0 %v331
    %2431 = vmatprep.subr.mxu0 0.0
    %2432 = vmatpush1.msra.mxu0 %v332
    %2433 = vmatprep.subr.mxu0 0.0
    %2434 = vmatpush1.msra.mxu0 %v333
    %2435 = vmatprep.subr.mxu0 0.0
    %2436 = vmatpush1.msra.mxu0 %v334
    %2437 = vmatprep.subr.mxu0 0.0
    %2438 = vmatpush1.msra.mxu0 %v335
    %2439 = vmatprep.subr.mxu0 0.0
    %2440 = vmatpush1.msra.mxu0 0.0
    %2441 = vmatprep.subr.mxu0 0.0
    %2442 = vmatpush1.msra.mxu0 0.0
    %2443 = vmatprep.subr.mxu0 0.0
    %2444 = vmatpush1.msra.mxu0 0.0
    %2445 = vmatprep.subr.mxu0 0.0
    %2446 = vmatpush1.msra.mxu0 0.0
    %2447 = vmatprep.subr.mxu0 0.0
    %2448 = vmatpush1.msra.mxu0 0.0
    %2449 = vmatprep.subr.mxu0 0.0
    %2450 = vmatpush1.msra.mxu0 0.0
    %2451 = vmatprep.subr.mxu0 0.0
    %2452 = vmatpush1.msra.mxu0 0.0
    %2453 = vmatprep.subr.mxu0 0.0
    %2454 = vmatpush1.msra.mxu0 0.0
    %2455 = vmatprep.subr.mxu0 0.0
    %2456 = vmatpush1.msra.mxu0 0.0
    %2457 = vmatprep.subr.mxu0 0.0
    %2458 = vmatpush1.msra.mxu0 0.0
    %2459 = vmatprep.subr.mxu0 0.0
    %2460 = vmatpush1.msra.mxu0 0.0
    %2461 = vmatprep.subr.mxu0 0.0
    %2462 = vmatpush1.msra.mxu0 0.0
    %2463 = vmatprep.subr.mxu0 0.0
    %2464 = vmatpush1.msra.mxu0 0.0
    %2465 = vmatprep.subr.mxu0 0.0
    %2466 = vmatpush1.msra.mxu0 0.0
    %2467 = vmatprep.subr.mxu0 0.0
    %2468 = vmatpush1.msra.mxu0 0.0
    %2469 = vmatprep.subr.mxu0 0.0
    %2470 = vmatpush1.msra.mxu0 0.0
    %2471 = vmatprep.mubr.f32.mxu0 0.0
    %2472 = vmatmul.mubr.f32.gmra.mrb[0].mxu0 %v2197
    %v2473 = vpop.f32.mrb[0].mxu0
    %v2474 = vadd.f32 0.0, %v2473
    %v2475 = vpop.f32.mrb[0].mxu0
    %2476 = vmatprep.mubr.f32.mxu0 0.0
    %2477 = vmatmul.mubr.f32.gmra.mrb[0].mxu0 %v2198
    %v2478 = vpop.f32.mrb[0].mxu0
    %v2479 = vadd.f32 0.0, %v2478
    %v2480 = vpop.f32.mrb[0].mxu0
    %2481 = vmatprep.mubr.f32.mxu0 0.0
    %2482 = vmatmul.mubr.f32.gmra.mrb[0].mxu0 %v2199
    %v2483 = vpop.f32.mrb[0].mxu0
    %v2484 = vadd.f32 0.0, %v2483
    %v2485 = vpop.f32.mrb[0].mxu0
    %2486 = vmatprep.mubr.f32.mxu0 0.0
    %2487 = vmatmul.mubr.f32.gmra.mrb[0].mxu0 %v2200
    %v2488 = vpop.f32.mrb[0].mxu0
    %v2489 = vadd.f32 0.0, %v2488
    %v2490 = vpop.f32.mrb[0].mxu0
    %2491 = vmatprep.mubr.f32.mxu0 0.0
    %2492 = vmatmul.mubr.f32.gmra.mrb[0].mxu0 %v2201
    %v2493 = vpop.f32.mrb[0].mxu0
    %v2494 = vadd.f32 0.0, %v2493
    %v2495 = vpop.f32.mrb[0].mxu0
    %2496 = vmatprep.mubr.f32.mxu0 0.0
    %2497 = vmatmul.mubr.f32.gmra.mrb[0].mxu0 %v2202
    %v2498 = vpop.f32.mrb[0].mxu0
    %v2499 = vadd.f32 0.0, %v2498
    %v2500 = vpop.f32.mrb[0].mxu0
    %2501 = vmatprep.mubr.f32.mxu0 0.0
    %2502 = vmatmul.mubr.f32.gmra.mrb[0].mxu0 %v2203
    %v2503 = vpop.f32.mrb[0].mxu0
    %v2504 = vadd.f32 0.0, %v2503
    %v2505 = vpop.f32.mrb[0].mxu0
    %2506 = vmatprep.mubr.f32.mxu0 0.0
    %2507 = vmatmul.mubr.f32.gmra.mrb[0].mxu0 %v2204
    %v2508 = vpop.f32.mrb[0].mxu0
    %v2509 = vadd.f32 0.0, %v2508
    %v2510 = vpop.f32.mrb[0].mxu0
    %2511 = vmatprep.mubr.f32.mxu0 0.0
    %2512 = vmatmul.mubr.f32.gmra.mrb[0].mxu0 %v2205
    %v2513 = vpop.f32.mrb[0].mxu0
    %v2514 = vadd.f32 0.0, %v2513
    %v2515 = vpop.f32.mrb[0].mxu0
    %2516 = vmatprep.mubr.f32.mxu0 0.0
    %2517 = vmatmul.mubr.f32.gmra.mrb[0].mxu0 %v2206
    %v2518 = vpop.f32.mrb[0].mxu0
    %v2519 = vadd.f32 0.0, %v2518
    %v2520 = vpop.f32.mrb[0].mxu0
    %2521 = vmatprep.mubr.f32.mxu0 0.0
    %2522 = vmatmul.mubr.f32.gmra.mrb[0].mxu0 %v2207
    %v2523 = vpop.f32.mrb[0].mxu0
    %v2524 = vadd.f32 0.0, %v2523
    %v2525 = vpop.f32.mrb[0].mxu0
    %2526 = vmatprep.mubr.f32.mxu0 0.0
    %2527 = vmatmul.mubr.f32.gmra.mrb[0].mxu0 %v2208
    %v2528 = vpop.f32.mrb[0].mxu0
    %v2529 = vadd.f32 0.0, %v2528
    %v2530 = vpop.f32.mrb[0].mxu0
    %2531 = vmatprep.mubr.f32.mxu0 0.0
    %2532 = vmatmul.mubr.f32.gmra.mrb[0].mxu0 %v2209
    %v2533 = vpop.f32.mrb[0].mxu0
    %v2534 = vadd.f32 0.0, %v2533
    %v2535 = vpop.f32.mrb[0].mxu0
    %2536 = vmatprep.mubr.f32.mxu0 0.0
    %2537 = vmatmul.mubr.f32.gmra.mrb[0].mxu0 %v2210
    %v2538 = vpop.f32.mrb[0].mxu0
    %v2539 = vadd.f32 0.0, %v2538
    %v2540 = vpop.f32.mrb[0].mxu0
    %2541 = vmatprep.mubr.f32.mxu0 0.0
    %2542 = vmatmul.mubr.f32.gmra.mrb[0].mxu0 %v2211
    %v2543 = vpop.f32.mrb[0].mxu0
    %v2544 = vadd.f32 0.0, %v2543
    %v2545 = vpop.f32.mrb[0].mxu0
    %2546 = vmatprep.mubr.f32.mxu0 0.0
    %2547 = vmatmul.mubr.f32.gmra.mrb[0].mxu0 %v2212
    %v2548 = vpop.f32.mrb[0].mxu0
    %v2549 = vadd.f32 0.0, %v2548
    %v2550 = vpop.f32.mrb[0].mxu0
    %2551 = vdwg.mxu0
    %2552 = vmatprep.subr.mxu0 0.0
    %2553 = vmatpush1.msra.mxu0 %v304
    %2554 = vmatprep.subr.mxu0 0.0
    %2555 = vmatpush1.msra.mxu0 %v305
    %2556 = vmatprep.subr.mxu0 0.0
    %2557 = vmatpush1.msra.mxu0 %v306
    %2558 = vmatprep.subr.mxu0 0.0
    %2559 = vmatpush1.msra.mxu0 %v307
    %2560 = vmatprep.subr.mxu0 0.0
    %2561 = vmatpush1.msra.mxu0 %v308
    %2562 = vmatprep.subr.mxu0 0.0
    %2563 = vmatpush1.msra.mxu0 %v309
    %2564 = vmatprep.subr.mxu0 0.0
    %2565 = vmatpush1.msra.mxu0 %v310
    %2566 = vmatprep.subr.mxu0 0.0
    %2567 = vmatpush1.msra.mxu0 %v311
    %2568 = vmatprep.subr.mxu0 0.0
    %2569 = vmatpush1.msra.mxu0 %v312
    %2570 = vmatprep.subr.mxu0 0.0
    %2571 = vmatpush1.msra.mxu0 %v313
    %2572 = vmatprep.subr.mxu0 0.0
    %2573 = vmatpush1.msra.mxu0 %v314
    %2574 = vmatprep.subr.mxu0 0.0
    %2575 = vmatpush1.msra.mxu0 %v315
    %2576 = vmatprep.subr.mxu0 0.0
    %2577 = vmatpush1.msra.mxu0 %v316
    %2578 = vmatprep.subr.mxu0 0.0
    %2579 = vmatpush1.msra.mxu0 %v317
    %2580 = vmatprep.subr.mxu0 0.0
    %2581 = vmatpush1.msra.mxu0 %v318
    %2582 = vmatprep.subr.mxu0 0.0
    %2583 = vmatpush1.msra.mxu0 %v319
    %2584 = vmatprep.subr.mxu0 0.0
    %2585 = vmatpush1.msra.mxu0 0.0
    %2586 = vmatprep.subr.mxu0 0.0
    %2587 = vmatpush1.msra.mxu0 0.0
    %2588 = vmatprep.subr.mxu0 0.0
    %2589 = vmatpush1.msra.mxu0 0.0
    %2590 = vmatprep.subr.mxu0 0.0
    %2591 = vmatpush1.msra.mxu0 0.0
    %2592 = vmatprep.subr.mxu0 0.0
    %2593 = vmatpush1.msra.mxu0 0.0
    %2594 = vmatprep.subr.mxu0 0.0
    %2595 = vmatpush1.msra.mxu0 0.0
    %2596 = vmatprep.subr.mxu0 0.0
    %2597 = vmatpush1.msra.mxu0 0.0
    %2598 = vmatprep.subr.mxu0 0.0
    %2599 = vmatpush1.msra.mxu0 0.0
    %2600 = vmatprep.subr.mxu0 0.0
    %2601 = vmatpush1.msra.mxu0 0.0
    %2602 = vmatprep.subr.mxu0 0.0
    %2603 = vmatpush1.msra.mxu0 0.0
    %2604 = vmatprep.subr.mxu0 0.0
    %2605 = vmatpush1.msra.mxu0 0.0
    %2606 = vmatprep.subr.mxu0 0.0
    %2607 = vmatpush1.msra.mxu0 0.0
    %2608 = vmatprep.subr.mxu0 0.0
    %2609 = vmatpush1.msra.mxu0 0.0
    %2610 = vmatprep.subr.mxu0 0.0
    %2611 = vmatpush1.msra.mxu0 0.0
    %2612 = vmatprep.subr.mxu0 0.0
    %2613 = vmatpush1.msra.mxu0 0.0
    %2614 = vmatprep.subr.mxu0 0.0
    %2615 = vmatpush1.msra.mxu0 0.0
    %2616 = vmatprep.mubr.f32.mxu0 0.0
    %2617 = vmatmul.mubr.f32.gmra.mrb[0].mxu0 %v2391
    %v2618 = vpop.f32.mrb[0].mxu0
    %v2619 = vadd.f32 %v2474, %v2618
    %v2620 = vpop.f32.mrb[0].mxu0
    %2621 = vmatprep.mubr.f32.mxu0 0.0
    %2622 = vmatmul.mubr.f32.gmra.mrb[0].mxu0 %v2392
    %v2623 = vpop.f32.mrb[0].mxu0
    %v2624 = vadd.f32 %v2479, %v2623
    %v2625 = vpop.f32.mrb[0].mxu0
    %2626 = vmatprep.mubr.f32.mxu0 0.0
    %2627 = vmatmul.mubr.f32.gmra.mrb[0].mxu0 %v2393
    %v2628 = vpop.f32.mrb[0].mxu0
    %v2629 = vadd.f32 %v2484, %v2628
    %v2630 = vpop.f32.mrb[0].mxu0
    %2631 = vmatprep.mubr.f32.mxu0 0.0
    %2632 = vmatmul.mubr.f32.gmra.mrb[0].mxu0 %v2394
    %v2633 = vpop.f32.mrb[0].mxu0
    %v2634 = vadd.f32 %v2489, %v2633
    %v2635 = vpop.f32.mrb[0].mxu0
    %2636 = vmatprep.mubr.f32.mxu0 0.0
    %2637 = vmatmul.mubr.f32.gmra.mrb[0].mxu0 %v2395
    %v2638 = vpop.f32.mrb[0].mxu0
    %v2639 = vadd.f32 %v2494, %v2638
    %v2640 = vpop.f32.mrb[0].mxu0
    %2641 = vmatprep.mubr.f32.mxu0 0.0
    %2642 = vmatmul.mubr.f32.gmra.mrb[0].mxu0 %v2396
    %v2643 = vpop.f32.mrb[0].mxu0
    %v2644 = vadd.f32 %v2499, %v2643
    %v2645 = vpop.f32.mrb[0].mxu0
    %2646 = vmatprep.mubr.f32.mxu0 0.0
    %2647 = vmatmul.mubr.f32.gmra.mrb[0].mxu0 %v2397
    %v2648 = vpop.f32.mrb[0].mxu0
    %v2649 = vadd.f32 %v2504, %v2648
    %v2650 = vpop.f32.mrb[0].mxu0
    %2651 = vmatprep.mubr.f32.mxu0 0.0
    %2652 = vmatmul.mubr.f32.gmra.mrb[0].mxu0 %v2398
    %v2653 = vpop.f32.mrb[0].mxu0
    %v2654 = vadd.f32 %v2509, %v2653
    %v2655 = vpop.f32.mrb[0].mxu0
    %2656 = vmatprep.mubr.f32.mxu0 0.0
    %2657 = vmatmul.mubr.f32.gmra.mrb[0].mxu0 %v2399
    %v2658 = vpop.f32.mrb[0].mxu0
    %v2659 = vadd.f32 %v2514, %v2658
    %v2660 = vpop.f32.mrb[0].mxu0
    %2661 = vmatprep.mubr.f32.mxu0 0.0
    %2662 = vmatmul.mubr.f32.gmra.mrb[0].mxu0 %v2400
    %v2663 = vpop.f32.mrb[0].mxu0
    %v2664 = vadd.f32 %v2519, %v2663
    %v2665 = vpop.f32.mrb[0].mxu0
    %2666 = vmatprep.mubr.f32.mxu0 0.0
    %2667 = vmatmul.mubr.f32.gmra.mrb[0].mxu0 %v2401
    %v2668 = vpop.f32.mrb[0].mxu0
    %v2669 = vadd.f32 %v2524, %v2668
    %v2670 = vpop.f32.mrb[0].mxu0
    %2671 = vmatprep.mubr.f32.mxu0 0.0
    %2672 = vmatmul.mubr.f32.gmra.mrb[0].mxu0 %v2402
    %v2673 = vpop.f32.mrb[0].mxu0
    %v2674 = vadd.f32 %v2529, %v2673
    %v2675 = vpop.f32.mrb[0].mxu0
    %2676 = vmatprep.mubr.f32.mxu0 0.0
    %2677 = vmatmul.mubr.f32.gmra.mrb[0].mxu0 %v2403
    %v2678 = vpop.f32.mrb[0].mxu0
    %v2679 = vadd.f32 %v2534, %v2678
    %v2680 = vpop.f32.mrb[0].mxu0
    %2681 = vmatprep.mubr.f32.mxu0 0.0
    %2682 = vmatmul.mubr.f32.gmra.mrb[0].mxu0 %v2404
    %v2683 = vpop.f32.mrb[0].mxu0
    %v2684 = vadd.f32 %v2539, %v2683
    %v2685 = vpop.f32.mrb[0].mxu0
    %2686 = vmatprep.mubr.f32.mxu0 0.0
    %2687 = vmatmul.mubr.f32.gmra.mrb[0].mxu0 %v2405
    %v2688 = vpop.f32.mrb[0].mxu0
    %v2689 = vadd.f32 %v2544, %v2688
    %v2690 = vpop.f32.mrb[0].mxu0
    %2691 = vmatprep.mubr.f32.mxu0 0.0
    %2692 = vmatmul.mubr.f32.gmra.mrb[0].mxu0 %v2406
    %v2693 = vpop.f32.mrb[0].mxu0
    %v2694 = vadd.f32 %v2549, %v2693
    %v2695 = vpop.f32.mrb[0].mxu0
    %2696 = vdwg.mxu0
    %v2697 = vadd.f32 %v2619, %v631
    %v2698 = vadd.f32 %v2624, %v631
    %v2699 = vadd.f32 %v2629, %v631
    %v2700 = vadd.f32 %v2634, %v631
    %v2701 = vadd.f32 %v2639, %v631
    %v2702 = vadd.f32 %v2644, %v631
    %v2703 = vadd.f32 %v2649, %v631
    %v2704 = vadd.f32 %v2654, %v631
    %v2705 = vadd.f32 %v2659, %v631
    %v2706 = vadd.f32 %v2664, %v631
    %v2707 = vadd.f32 %v2669, %v631
    %v2708 = vadd.f32 %v2674, %v631
    %v2709 = vadd.f32 %v2679, %v631
    %v2710 = vadd.f32 %v2684, %v631
    %v2711 = vadd.f32 %v2689, %v631
    %v2712 = vadd.f32 %v2694, %v631
    %v2713 = vtanh.pop %v2697
    %v2714 = vtanh.pop %v2698
    %v2715 = vtanh.pop %v2699
    %v2716 = vtanh.pop %v2700
    %v2717 = vtanh.pop %v2701
    %v2718 = vtanh.pop %v2702
    %v2719 = vtanh.pop %v2703
    %v2720 = vtanh.pop %v2704
    %v2721 = vtanh.pop %v2705
    %v2722 = vtanh.pop %v2706
    %v2723 = vtanh.pop %v2707
    %v2724 = vtanh.pop %v2708
    %v2725 = vtanh.pop %v2709
    %v2726 = vtanh.pop %v2710
    %v2727 = vtanh.pop %v2711
    %v2728 = vtanh.pop %v2712
    %s2729 = scalar_lea.vmem [#allocation2], 640
    %v2730 = vld [vmem:[%s2729] sm:$0xff]
    %v2731 = vld [vmem:[%s2729 + $0x8] sm:$0xff]
    %v2732 = vld [vmem:[%s2729 + $0x10] sm:$0xff]
    %v2733 = vld [vmem:[%s2729 + $0x18] sm:$0xff]
    %v2734 = vld [vmem:[%s2729 + $0x20] sm:$0xff]
    %v2735 = vld [vmem:[%s2729 + $0x28] sm:$0xff]
    %v2736 = vld [vmem:[%s2729 + $0x30] sm:$0xff]
    %v2737 = vld [vmem:[%s2729 + $0x38] sm:$0xff]
    %v2738 = vld [vmem:[%s2729 + $0x40] sm:$0xff]
    %v2739 = vld [vmem:[%s2729 + $0x48] sm:$0xff]
    %v2740 = vld [vmem:[%s2729 + $0x50] sm:$0xff]
    %v2741 = vld [vmem:[%s2729 + $0x58] sm:$0xff]
    %v2742 = vld [vmem:[%s2729 + $0x60] sm:$0xff]
    %v2743 = vld [vmem:[%s2729 + $0x68] sm:$0xff]
    %v2744 = vld [vmem:[%s2729 + $0x70] sm:$0xff]
    %v2745 = vld [vmem:[%s2729 + $0x78] sm:$0xff]
    %2746 = vmatprep.subr.mxu0 0.0
    %2747 = vmatpush1.msra.mxu0 %v111
    %2748 = vmatprep.subr.mxu0 0.0
    %2749 = vmatpush1.msra.mxu0 %v112
    %2750 = vmatprep.subr.mxu0 0.0
    %2751 = vmatpush1.msra.mxu0 %v113
    %2752 = vmatprep.subr.mxu0 0.0
    %2753 = vmatpush1.msra.mxu0 %v114
    %2754 = vmatprep.subr.mxu0 0.0
    %2755 = vmatpush1.msra.mxu0 %v115
    %2756 = vmatprep.subr.mxu0 0.0
    %2757 = vmatpush1.msra.mxu0 %v116
    %2758 = vmatprep.subr.mxu0 0.0
    %2759 = vmatpush1.msra.mxu0 %v117
    %2760 = vmatprep.subr.mxu0 0.0
    %2761 = vmatpush1.msra.mxu0 %v118
    %2762 = vmatprep.subr.mxu0 0.0
    %2763 = vmatpush1.msra.mxu0 %v119
    %2764 = vmatprep.subr.mxu0 0.0
    %2765 = vmatpush1.msra.mxu0 %v120
    %2766 = vmatprep.subr.mxu0 0.0
    %2767 = vmatpush1.msra.mxu0 %v121
    %2768 = vmatprep.subr.mxu0 0.0
    %2769 = vmatpush1.msra.mxu0 %v122
    %2770 = vmatprep.subr.mxu0 0.0
    %2771 = vmatpush1.msra.mxu0 %v123
    %2772 = vmatprep.subr.mxu0 0.0
    %2773 = vmatpush1.msra.mxu0 %v124
    %2774 = vmatprep.subr.mxu0 0.0
    %2775 = vmatpush1.msra.mxu0 %v125
    %2776 = vmatprep.subr.mxu0 0.0
    %2777 = vmatpush1.msra.mxu0 %v126
    %2778 = vmatprep.subr.mxu0 0.0
    %2779 = vmatpush1.msra.mxu0 0.0
    %2780 = vmatprep.subr.mxu0 0.0
    %2781 = vmatpush1.msra.mxu0 0.0
    %2782 = vmatprep.subr.mxu0 0.0
    %2783 = vmatpush1.msra.mxu0 0.0
    %2784 = vmatprep.subr.mxu0 0.0
    %2785 = vmatpush1.msra.mxu0 0.0
    %2786 = vmatprep.subr.mxu0 0.0
    %2787 = vmatpush1.msra.mxu0 0.0
    %2788 = vmatprep.subr.mxu0 0.0
    %2789 = vmatpush1.msra.mxu0 0.0
    %2790 = vmatprep.subr.mxu0 0.0
    %2791 = vmatpush1.msra.mxu0 0.0
    %2792 = vmatprep.subr.mxu0 0.0
    %2793 = vmatpush1.msra.mxu0 0.0
    %2794 = vmatprep.subr.mxu0 0.0
    %2795 = vmatpush1.msra.mxu0 0.0
    %2796 = vmatprep.subr.mxu0 0.0
    %2797 = vmatpush1.msra.mxu0 0.0
    %2798 = vmatprep.subr.mxu0 0.0
    %2799 = vmatpush1.msra.mxu0 0.0
    %2800 = vmatprep.subr.mxu0 0.0
    %2801 = vmatpush1.msra.mxu0 0.0
    %2802 = vmatprep.subr.mxu0 0.0
    %2803 = vmatpush1.msra.mxu0 0.0
    %2804 = vmatprep.subr.mxu0 0.0
    %2805 = vmatpush1.msra.mxu0 0.0
    %2806 = vmatprep.subr.mxu0 0.0
    %2807 = vmatpush1.msra.mxu0 0.0
    %2808 = vmatprep.subr.mxu0 0.0
    %2809 = vmatpush1.msra.mxu0 0.0
    %2810 = vmatprep.mubr.f32.mxu0 0.0
    %2811 = vmatmul.mubr.f32.gmra.mrb[0].mxu0 %v2391
    %v2812 = vpop.f32.mrb[0].mxu0
    %v2813 = vadd.f32 0.0, %v2812
    %v2814 = vpop.f32.mrb[0].mxu0
    %2815 = vmatprep.mubr.f32.mxu0 0.0
    %2816 = vmatmul.mubr.f32.gmra.mrb[0].mxu0 %v2392
    %v2817 = vpop.f32.mrb[0].mxu0
    %v2818 = vadd.f32 0.0, %v2817
    %v2819 = vpop.f32.mrb[0].mxu0
    %2820 = vmatprep.mubr.f32.mxu0 0.0
    %2821 = vmatmul.mubr.f32.gmra.mrb[0].mxu0 %v2393
    %v2822 = vpop.f32.mrb[0].mxu0
    %v2823 = vadd.f32 0.0, %v2822
    %v2824 = vpop.f32.mrb[0].mxu0
    %2825 = vmatprep.mubr.f32.mxu0 0.0
    %2826 = vmatmul.mubr.f32.gmra.mrb[0].mxu0 %v2394
    %v2827 = vpop.f32.mrb[0].mxu0
    %v2828 = vadd.f32 0.0, %v2827
    %v2829 = vpop.f32.mrb[0].mxu0
    %2830 = vmatprep.mubr.f32.mxu0 0.0
    %2831 = vmatmul.mubr.f32.gmra.mrb[0].mxu0 %v2395
    %v2832 = vpop.f32.mrb[0].mxu0
    %v2833 = vadd.f32 0.0, %v2832
    %v2834 = vpop.f32.mrb[0].mxu0
    %2835 = vmatprep.mubr.f32.mxu0 0.0
    %2836 = vmatmul.mubr.f32.gmra.mrb[0].mxu0 %v2396
    %v2837 = vpop.f32.mrb[0].mxu0
    %v2838 = vadd.f32 0.0, %v2837
    %v2839 = vpop.f32.mrb[0].mxu0
    %2840 = vmatprep.mubr.f32.mxu0 0.0
    %2841 = vmatmul.mubr.f32.gmra.mrb[0].mxu0 %v2397
    %v2842 = vpop.f32.mrb[0].mxu0
    %v2843 = vadd.f32 0.0, %v2842
    %v2844 = vpop.f32.mrb[0].mxu0
    %2845 = vmatprep.mubr.f32.mxu0 0.0
    %2846 = vmatmul.mubr.f32.gmra.mrb[0].mxu0 %v2398
    %v2847 = vpop.f32.mrb[0].mxu0
    %v2848 = vadd.f32 0.0, %v2847
    %v2849 = vpop.f32.mrb[0].mxu0
    %2850 = vmatprep.mubr.f32.mxu0 0.0
    %2851 = vmatmul.mubr.f32.gmra.mrb[0].mxu0 %v2399
    %v2852 = vpop.f32.mrb[0].mxu0
    %v2853 = vadd.f32 0.0, %v2852
    %v2854 = vpop.f32.mrb[0].mxu0
    %2855 = vmatprep.mubr.f32.mxu0 0.0
    %2856 = vmatmul.mubr.f32.gmra.mrb[0].mxu0 %v2400
    %v2857 = vpop.f32.mrb[0].mxu0
    %v2858 = vadd.f32 0.0, %v2857
    %v2859 = vpop.f32.mrb[0].mxu0
    %2860 = vmatprep.mubr.f32.mxu0 0.0
    %2861 = vmatmul.mubr.f32.gmra.mrb[0].mxu0 %v2401
    %v2862 = vpop.f32.mrb[0].mxu0
    %v2863 = vadd.f32 0.0, %v2862
    %v2864 = vpop.f32.mrb[0].mxu0
    %2865 = vmatprep.mubr.f32.mxu0 0.0
    %2866 = vmatmul.mubr.f32.gmra.mrb[0].mxu0 %v2402
    %v2867 = vpop.f32.mrb[0].mxu0
    %v2868 = vadd.f32 0.0, %v2867
    %v2869 = vpop.f32.mrb[0].mxu0
    %2870 = vmatprep.mubr.f32.mxu0 0.0
    %2871 = vmatmul.mubr.f32.gmra.mrb[0].mxu0 %v2403
    %v2872 = vpop.f32.mrb[0].mxu0
    %v2873 = vadd.f32 0.0, %v2872
    %v2874 = vpop.f32.mrb[0].mxu0
    %2875 = vmatprep.mubr.f32.mxu0 0.0
    %2876 = vmatmul.mubr.f32.gmra.mrb[0].mxu0 %v2404
    %v2877 = vpop.f32.mrb[0].mxu0
    %v2878 = vadd.f32 0.0, %v2877
    %v2879 = vpop.f32.mrb[0].mxu0
    %2880 = vmatprep.mubr.f32.mxu0 0.0
    %2881 = vmatmul.mubr.f32.gmra.mrb[0].mxu0 %v2405
    %v2882 = vpop.f32.mrb[0].mxu0
    %v2883 = vadd.f32 0.0, %v2882
    %v2884 = vpop.f32.mrb[0].mxu0
    %2885 = vmatprep.mubr.f32.mxu0 0.0
    %2886 = vmatmul.mubr.f32.gmra.mrb[0].mxu0 %v2406
    %v2887 = vpop.f32.mrb[0].mxu0
    %v2888 = vadd.f32 0.0, %v2887
    %v2889 = vpop.f32.mrb[0].mxu0
    %2890 = vdwg.mxu0
    %v2891 = vadd.f32 %v2730, %v2813
    %v2892 = vadd.f32 %v2731, %v2818
    %v2893 = vadd.f32 %v2732, %v2823
    %v2894 = vadd.f32 %v2733, %v2828
    %v2895 = vadd.f32 %v2734, %v2833
    %v2896 = vadd.f32 %v2735, %v2838
    %v2897 = vadd.f32 %v2736, %v2843
    %v2898 = vadd.f32 %v2737, %v2848
    %v2899 = vadd.f32 %v2738, %v2853
    %v2900 = vadd.f32 %v2739, %v2858
    %v2901 = vadd.f32 %v2740, %v2863
    %v2902 = vadd.f32 %v2741, %v2868
    %v2903 = vadd.f32 %v2742, %v2873
    %v2904 = vadd.f32 %v2743, %v2878
    %v2905 = vadd.f32 %v2744, %v2883
    %v2906 = vadd.f32 %v2745, %v2888
    %v2907 = vtanh.pop %v2891
    %v2908 = vtanh.pop %v2892
    %v2909 = vtanh.pop %v2893
    %v2910 = vtanh.pop %v2894
    %v2911 = vtanh.pop %v2895
    %v2912 = vtanh.pop %v2896
    %v2913 = vtanh.pop %v2897
    %v2914 = vtanh.pop %v2898
    %v2915 = vtanh.pop %v2899
    %v2916 = vtanh.pop %v2900
    %v2917 = vtanh.pop %v2901
    %v2918 = vtanh.pop %v2902
    %v2919 = vtanh.pop %v2903
    %v2920 = vtanh.pop %v2904
    %v2921 = vtanh.pop %v2905
    %v2922 = vtanh.pop %v2906
    %2923 = vmatprep.subr.mxu0 0.0
    %2924 = vmatpush1.msra.mxu0 %v320
    %2925 = vmatprep.subr.mxu0 0.0
    %2926 = vmatpush1.msra.mxu0 %v321
    %2927 = vmatprep.subr.mxu0 0.0
    %2928 = vmatpush1.msra.mxu0 %v322
    %2929 = vmatprep.subr.mxu0 0.0
    %2930 = vmatpush1.msra.mxu0 %v323
    %2931 = vmatprep.subr.mxu0 0.0
    %2932 = vmatpush1.msra.mxu0 %v324
    %2933 = vmatprep.subr.mxu0 0.0
    %2934 = vmatpush1.msra.mxu0 %v325
    %2935 = vmatprep.subr.mxu0 0.0
    %2936 = vmatpush1.msra.mxu0 %v326
    %2937 = vmatprep.subr.mxu0 0.0
    %2938 = vmatpush1.msra.mxu0 %v327
    %2939 = vmatprep.subr.mxu0 0.0
    %2940 = vmatpush1.msra.mxu0 %v328
    %2941 = vmatprep.subr.mxu0 0.0
    %2942 = vmatpush1.msra.mxu0 %v329
    %2943 = vmatprep.subr.mxu0 0.0
    %2944 = vmatpush1.msra.mxu0 %v330
    %2945 = vmatprep.subr.mxu0 0.0
    %2946 = vmatpush1.msra.mxu0 %v331
    %2947 = vmatprep.subr.mxu0 0.0
    %2948 = vmatpush1.msra.mxu0 %v332
    %2949 = vmatprep.subr.mxu0 0.0
    %2950 = vmatpush1.msra.mxu0 %v333
    %2951 = vmatprep.subr.mxu0 0.0
    %2952 = vmatpush1.msra.mxu0 %v334
    %2953 = vmatprep.subr.mxu0 0.0
    %2954 = vmatpush1.msra.mxu0 %v335
    %2955 = vmatprep.subr.mxu0 0.0
    %2956 = vmatpush1.msra.mxu0 0.0
    %2957 = vmatprep.subr.mxu0 0.0
    %2958 = vmatpush1.msra.mxu0 0.0
    %2959 = vmatprep.subr.mxu0 0.0
    %2960 = vmatpush1.msra.mxu0 0.0
    %2961 = vmatprep.subr.mxu0 0.0
    %2962 = vmatpush1.msra.mxu0 0.0
    %2963 = vmatprep.subr.mxu0 0.0
    %2964 = vmatpush1.msra.mxu0 0.0
    %2965 = vmatprep.subr.mxu0 0.0
    %2966 = vmatpush1.msra.mxu0 0.0
    %2967 = vmatprep.subr.mxu0 0.0
    %2968 = vmatpush1.msra.mxu0 0.0
    %2969 = vmatprep.subr.mxu0 0.0
    %2970 = vmatpush1.msra.mxu0 0.0
    %2971 = vmatprep.subr.mxu0 0.0
    %2972 = vmatpush1.msra.mxu0 0.0
    %2973 = vmatprep.subr.mxu0 0.0
    %2974 = vmatpush1.msra.mxu0 0.0
    %2975 = vmatprep.subr.mxu0 0.0
    %2976 = vmatpush1.msra.mxu0 0.0
    %2977 = vmatprep.subr.mxu0 0.0
    %2978 = vmatpush1.msra.mxu0 0.0
    %2979 = vmatprep.subr.mxu0 0.0
    %2980 = vmatpush1.msra.mxu0 0.0
    %2981 = vmatprep.subr.mxu0 0.0
    %2982 = vmatpush1.msra.mxu0 0.0
    %2983 = vmatprep.subr.mxu0 0.0
    %2984 = vmatpush1.msra.mxu0 0.0
    %2985 = vmatprep.subr.mxu0 0.0
    %2986 = vmatpush1.msra.mxu0 0.0
    %2987 = vmatprep.mubr.f32.mxu0 0.0
    %2988 = vmatmul.mubr.f32.gmra.mrb[0].mxu0 %v2713
    %v2989 = vpop.f32.mrb[0].mxu0
    %v2990 = vadd.f32 0.0, %v2989
    %v2991 = vpop.f32.mrb[0].mxu0
    %2992 = vmatprep.mubr.f32.mxu0 0.0
    %2993 = vmatmul.mubr.f32.gmra.mrb[0].mxu0 %v2714
    %v2994 = vpop.f32.mrb[0].mxu0
    %v2995 = vadd.f32 0.0, %v2994
    %v2996 = vpop.f32.mrb[0].mxu0
    %2997 = vmatprep.mubr.f32.mxu0 0.0
    %2998 = vmatmul.mubr.f32.gmra.mrb[0].mxu0 %v2715
    %v2999 = vpop.f32.mrb[0].mxu0
    %v3000 = vadd.f32 0.0, %v2999
    %v3001 = vpop.f32.mrb[0].mxu0
    %3002 = vmatprep.mubr.f32.mxu0 0.0
    %3003 = vmatmul.mubr.f32.gmra.mrb[0].mxu0 %v2716
    %v3004 = vpop.f32.mrb[0].mxu0
    %v3005 = vadd.f32 0.0, %v3004
    %v3006 = vpop.f32.mrb[0].mxu0
    %3007 = vmatprep.mubr.f32.mxu0 0.0
    %3008 = vmatmul.mubr.f32.gmra.mrb[0].mxu0 %v2717
    %v3009 = vpop.f32.mrb[0].mxu0
    %v3010 = vadd.f32 0.0, %v3009
    %v3011 = vpop.f32.mrb[0].mxu0
    %3012 = vmatprep.mubr.f32.mxu0 0.0
    %3013 = vmatmul.mubr.f32.gmra.mrb[0].mxu0 %v2718
    %v3014 = vpop.f32.mrb[0].mxu0
    %v3015 = vadd.f32 0.0, %v3014
    %v3016 = vpop.f32.mrb[0].mxu0
    %3017 = vmatprep.mubr.f32.mxu0 0.0
    %3018 = vmatmul.mubr.f32.gmra.mrb[0].mxu0 %v2719
    %v3019 = vpop.f32.mrb[0].mxu0
    %v3020 = vadd.f32 0.0, %v3019
    %v3021 = vpop.f32.mrb[0].mxu0
    %3022 = vmatprep.mubr.f32.mxu0 0.0
    %3023 = vmatmul.mubr.f32.gmra.mrb[0].mxu0 %v2720
    %v3024 = vpop.f32.mrb[0].mxu0
    %v3025 = vadd.f32 0.0, %v3024
    %v3026 = vpop.f32.mrb[0].mxu0
    %3027 = vmatprep.mubr.f32.mxu0 0.0
    %3028 = vmatmul.mubr.f32.gmra.mrb[0].mxu0 %v2721
    %v3029 = vpop.f32.mrb[0].mxu0
    %v3030 = vadd.f32 0.0, %v3029
    %v3031 = vpop.f32.mrb[0].mxu0
    %3032 = vmatprep.mubr.f32.mxu0 0.0
    %3033 = vmatmul.mubr.f32.gmra.mrb[0].mxu0 %v2722
    %v3034 = vpop.f32.mrb[0].mxu0
    %v3035 = vadd.f32 0.0, %v3034
    %v3036 = vpop.f32.mrb[0].mxu0
    %3037 = vmatprep.mubr.f32.mxu0 0.0
    %3038 = vmatmul.mubr.f32.gmra.mrb[0].mxu0 %v2723
    %v3039 = vpop.f32.mrb[0].mxu0
    %v3040 = vadd.f32 0.0, %v3039
    %v3041 = vpop.f32.mrb[0].mxu0
    %3042 = vmatprep.mubr.f32.mxu0 0.0
    %3043 = vmatmul.mubr.f32.gmra.mrb[0].mxu0 %v2724
    %v3044 = vpop.f32.mrb[0].mxu0
    %v3045 = vadd.f32 0.0, %v3044
    %v3046 = vpop.f32.mrb[0].mxu0
    %3047 = vmatprep.mubr.f32.mxu0 0.0
    %3048 = vmatmul.mubr.f32.gmra.mrb[0].mxu0 %v2725
    %v3049 = vpop.f32.mrb[0].mxu0
    %v3050 = vadd.f32 0.0, %v3049
    %v3051 = vpop.f32.mrb[0].mxu0
    %3052 = vmatprep.mubr.f32.mxu0 0.0
    %3053 = vmatmul.mubr.f32.gmra.mrb[0].mxu0 %v2726
    %v3054 = vpop.f32.mrb[0].mxu0
    %v3055 = vadd.f32 0.0, %v3054
    %v3056 = vpop.f32.mrb[0].mxu0
    %3057 = vmatprep.mubr.f32.mxu0 0.0
    %3058 = vmatmul.mubr.f32.gmra.mrb[0].mxu0 %v2727
    %v3059 = vpop.f32.mrb[0].mxu0
    %v3060 = vadd.f32 0.0, %v3059
    %v3061 = vpop.f32.mrb[0].mxu0
    %3062 = vmatprep.mubr.f32.mxu0 0.0
    %3063 = vmatmul.mubr.f32.gmra.mrb[0].mxu0 %v2728
    %v3064 = vpop.f32.mrb[0].mxu0
    %v3065 = vadd.f32 0.0, %v3064
    %v3066 = vpop.f32.mrb[0].mxu0
    %3067 = vdwg.mxu0
    %3068 = vmatprep.subr.mxu0 0.0
    %3069 = vmatpush1.msra.mxu0 %v304
    %3070 = vmatprep.subr.mxu0 0.0
    %3071 = vmatpush1.msra.mxu0 %v305
    %3072 = vmatprep.subr.mxu0 0.0
    %3073 = vmatpush1.msra.mxu0 %v306
    %3074 = vmatprep.subr.mxu0 0.0
    %3075 = vmatpush1.msra.mxu0 %v307
    %3076 = vmatprep.subr.mxu0 0.0
    %3077 = vmatpush1.msra.mxu0 %v308
    %3078 = vmatprep.subr.mxu0 0.0
    %3079 = vmatpush1.msra.mxu0 %v309
    %3080 = vmatprep.subr.mxu0 0.0
    %3081 = vmatpush1.msra.mxu0 %v310
    %3082 = vmatprep.subr.mxu0 0.0
    %3083 = vmatpush1.msra.mxu0 %v311
    %3084 = vmatprep.subr.mxu0 0.0
    %3085 = vmatpush1.msra.mxu0 %v312
    %3086 = vmatprep.subr.mxu0 0.0
    %3087 = vmatpush1.msra.mxu0 %v313
    %3088 = vmatprep.subr.mxu0 0.0
    %3089 = vmatpush1.msra.mxu0 %v314
    %3090 = vmatprep.subr.mxu0 0.0
    %3091 = vmatpush1.msra.mxu0 %v315
    %3092 = vmatprep.subr.mxu0 0.0
    %3093 = vmatpush1.msra.mxu0 %v316
    %3094 = vmatprep.subr.mxu0 0.0
    %3095 = vmatpush1.msra.mxu0 %v317
    %3096 = vmatprep.subr.mxu0 0.0
    %3097 = vmatpush1.msra.mxu0 %v318
    %3098 = vmatprep.subr.mxu0 0.0
    %3099 = vmatpush1.msra.mxu0 %v319
    %3100 = vmatprep.subr.mxu0 0.0
    %3101 = vmatpush1.msra.mxu0 0.0
    %3102 = vmatprep.subr.mxu0 0.0
    %3103 = vmatpush1.msra.mxu0 0.0
    %3104 = vmatprep.subr.mxu0 0.0
    %3105 = vmatpush1.msra.mxu0 0.0
    %3106 = vmatprep.subr.mxu0 0.0
    %3107 = vmatpush1.msra.mxu0 0.0
    %3108 = vmatprep.subr.mxu0 0.0
    %3109 = vmatpush1.msra.mxu0 0.0
    %3110 = vmatprep.subr.mxu0 0.0
    %3111 = vmatpush1.msra.mxu0 0.0
    %3112 = vmatprep.subr.mxu0 0.0
    %3113 = vmatpush1.msra.mxu0 0.0
    %3114 = vmatprep.subr.mxu0 0.0
    %3115 = vmatpush1.msra.mxu0 0.0
    %3116 = vmatprep.subr.mxu0 0.0
    %3117 = vmatpush1.msra.mxu0 0.0
    %3118 = vmatprep.subr.mxu0 0.0
    %3119 = vmatpush1.msra.mxu0 0.0
    %3120 = vmatprep.subr.mxu0 0.0
    %3121 = vmatpush1.msra.mxu0 0.0
    %3122 = vmatprep.subr.mxu0 0.0
    %3123 = vmatpush1.msra.mxu0 0.0
    %3124 = vmatprep.subr.mxu0 0.0
    %3125 = vmatpush1.msra.mxu0 0.0
    %3126 = vmatprep.subr.mxu0 0.0
    %3127 = vmatpush1.msra.mxu0 0.0
    %3128 = vmatprep.subr.mxu0 0.0
    %3129 = vmatpush1.msra.mxu0 0.0
    %3130 = vmatprep.subr.mxu0 0.0
    %3131 = vmatpush1.msra.mxu0 0.0
    %3132 = vmatprep.mubr.f32.mxu0 0.0
    %3133 = vmatmul.mubr.f32.gmra.mrb[0].mxu0 %v2907
    %v3134 = vpop.f32.mrb[0].mxu0
    %v3135 = vadd.f32 %v2990, %v3134
    %v3136 = vpop.f32.mrb[0].mxu0
    %3137 = vmatprep.mubr.f32.mxu0 0.0
    %3138 = vmatmul.mubr.f32.gmra.mrb[0].mxu0 %v2908
    %v3139 = vpop.f32.mrb[0].mxu0
    %v3140 = vadd.f32 %v2995, %v3139
    %v3141 = vpop.f32.mrb[0].mxu0
    %3142 = vmatprep.mubr.f32.mxu0 0.0
    %3143 = vmatmul.mubr.f32.gmra.mrb[0].mxu0 %v2909
    %v3144 = vpop.f32.mrb[0].mxu0
    %v3145 = vadd.f32 %v3000, %v3144
    %v3146 = vpop.f32.mrb[0].mxu0
    %3147 = vmatprep.mubr.f32.mxu0 0.0
    %3148 = vmatmul.mubr.f32.gmra.mrb[0].mxu0 %v2910
    %v3149 = vpop.f32.mrb[0].mxu0
    %v3150 = vadd.f32 %v3005, %v3149
    %v3151 = vpop.f32.mrb[0].mxu0
    %3152 = vmatprep.mubr.f32.mxu0 0.0
    %3153 = vmatmul.mubr.f32.gmra.mrb[0].mxu0 %v2911
    %v3154 = vpop.f32.mrb[0].mxu0
    %v3155 = vadd.f32 %v3010, %v3154
    %v3156 = vpop.f32.mrb[0].mxu0
    %3157 = vmatprep.mubr.f32.mxu0 0.0
    %3158 = vmatmul.mubr.f32.gmra.mrb[0].mxu0 %v2912
    %v3159 = vpop.f32.mrb[0].mxu0
    %v3160 = vadd.f32 %v3015, %v3159
    %v3161 = vpop.f32.mrb[0].mxu0
    %3162 = vmatprep.mubr.f32.mxu0 0.0
    %3163 = vmatmul.mubr.f32.gmra.mrb[0].mxu0 %v2913
    %v3164 = vpop.f32.mrb[0].mxu0
    %v3165 = vadd.f32 %v3020, %v3164
    %v3166 = vpop.f32.mrb[0].mxu0
    %3167 = vmatprep.mubr.f32.mxu0 0.0
    %3168 = vmatmul.mubr.f32.gmra.mrb[0].mxu0 %v2914
    %v3169 = vpop.f32.mrb[0].mxu0
    %v3170 = vadd.f32 %v3025, %v3169
    %v3171 = vpop.f32.mrb[0].mxu0
    %3172 = vmatprep.mubr.f32.mxu0 0.0
    %3173 = vmatmul.mubr.f32.gmra.mrb[0].mxu0 %v2915
    %v3174 = vpop.f32.mrb[0].mxu0
    %v3175 = vadd.f32 %v3030, %v3174
    %v3176 = vpop.f32.mrb[0].mxu0
    %3177 = vmatprep.mubr.f32.mxu0 0.0
    %3178 = vmatmul.mubr.f32.gmra.mrb[0].mxu0 %v2916
    %v3179 = vpop.f32.mrb[0].mxu0
    %v3180 = vadd.f32 %v3035, %v3179
    %v3181 = vpop.f32.mrb[0].mxu0
    %3182 = vmatprep.mubr.f32.mxu0 0.0
    %3183 = vmatmul.mubr.f32.gmra.mrb[0].mxu0 %v2917
    %v3184 = vpop.f32.mrb[0].mxu0
    %v3185 = vadd.f32 %v3040, %v3184
    %v3186 = vpop.f32.mrb[0].mxu0
    %3187 = vmatprep.mubr.f32.mxu0 0.0
    %3188 = vmatmul.mubr.f32.gmra.mrb[0].mxu0 %v2918
    %v3189 = vpop.f32.mrb[0].mxu0
    %v3190 = vadd.f32 %v3045, %v3189
    %v3191 = vpop.f32.mrb[0].mxu0
    %3192 = vmatprep.mubr.f32.mxu0 0.0
    %3193 = vmatmul.mubr.f32.gmra.mrb[0].mxu0 %v2919
    %v3194 = vpop.f32.mrb[0].mxu0
    %v3195 = vadd.f32 %v3050, %v3194
    %v3196 = vpop.f32.mrb[0].mxu0
    %3197 = vmatprep.mubr.f32.mxu0 0.0
    %3198 = vmatmul.mubr.f32.gmra.mrb[0].mxu0 %v2920
    %v3199 = vpop.f32.mrb[0].mxu0
    %v3200 = vadd.f32 %v3055, %v3199
    %v3201 = vpop.f32.mrb[0].mxu0
    %3202 = vmatprep.mubr.f32.mxu0 0.0
    %3203 = vmatmul.mubr.f32.gmra.mrb[0].mxu0 %v2921
    %v3204 = vpop.f32.mrb[0].mxu0
    %v3205 = vadd.f32 %v3060, %v3204
    %v3206 = vpop.f32.mrb[0].mxu0
    %3207 = vmatprep.mubr.f32.mxu0 0.0
    %3208 = vmatmul.mubr.f32.gmra.mrb[0].mxu0 %v2922
    %v3209 = vpop.f32.mrb[0].mxu0
    %v3210 = vadd.f32 %v3065, %v3209
    %v3211 = vpop.f32.mrb[0].mxu0
    %3212 = vdwg.mxu0
    %v3213 = vadd.f32 %v3135, %v631
    %v3214 = vadd.f32 %v3140, %v631
    %v3215 = vadd.f32 %v3145, %v631
    %v3216 = vadd.f32 %v3150, %v631
    %v3217 = vadd.f32 %v3155, %v631
    %v3218 = vadd.f32 %v3160, %v631
    %v3219 = vadd.f32 %v3165, %v631
    %v3220 = vadd.f32 %v3170, %v631
    %v3221 = vadd.f32 %v3175, %v631
    %v3222 = vadd.f32 %v3180, %v631
    %v3223 = vadd.f32 %v3185, %v631
    %v3224 = vadd.f32 %v3190, %v631
    %v3225 = vadd.f32 %v3195, %v631
    %v3226 = vadd.f32 %v3200, %v631
    %v3227 = vadd.f32 %v3205, %v631
    %v3228 = vadd.f32 %v3210, %v631
    %v3229 = vtanh.pop %v3213
    %v3230 = vtanh.pop %v3214
    %v3231 = vtanh.pop %v3215
    %v3232 = vtanh.pop %v3216
    %v3233 = vtanh.pop %v3217
    %v3234 = vtanh.pop %v3218
    %v3235 = vtanh.pop %v3219
    %v3236 = vtanh.pop %v3220
    %v3237 = vtanh.pop %v3221
    %v3238 = vtanh.pop %v3222
    %v3239 = vtanh.pop %v3223
    %v3240 = vtanh.pop %v3224
    %v3241 = vtanh.pop %v3225
    %v3242 = vtanh.pop %v3226
    %v3243 = vtanh.pop %v3227
    %v3244 = vtanh.pop %v3228
    %s3245 = scalar_lea.vmem [#allocation2], 768
    %v3246 = vld [vmem:[%s3245] sm:$0xff]
    %v3247 = vld [vmem:[%s3245 + $0x8] sm:$0xff]
    %v3248 = vld [vmem:[%s3245 + $0x10] sm:$0xff]
    %v3249 = vld [vmem:[%s3245 + $0x18] sm:$0xff]
    %v3250 = vld [vmem:[%s3245 + $0x20] sm:$0xff]
    %v3251 = vld [vmem:[%s3245 + $0x28] sm:$0xff]
    %v3252 = vld [vmem:[%s3245 + $0x30] sm:$0xff]
    %v3253 = vld [vmem:[%s3245 + $0x38] sm:$0xff]
    %v3254 = vld [vmem:[%s3245 + $0x40] sm:$0xff]
    %v3255 = vld [vmem:[%s3245 + $0x48] sm:$0xff]
    %v3256 = vld [vmem:[%s3245 + $0x50] sm:$0xff]
    %v3257 = vld [vmem:[%s3245 + $0x58] sm:$0xff]
    %v3258 = vld [vmem:[%s3245 + $0x60] sm:$0xff]
    %v3259 = vld [vmem:[%s3245 + $0x68] sm:$0xff]
    %v3260 = vld [vmem:[%s3245 + $0x70] sm:$0xff]
    %v3261 = vld [vmem:[%s3245 + $0x78] sm:$0xff]
    %3262 = vmatprep.subr.mxu0 0.0
    %3263 = vmatpush1.msra.mxu0 %v111
    %3264 = vmatprep.subr.mxu0 0.0
    %3265 = vmatpush1.msra.mxu0 %v112
    %3266 = vmatprep.subr.mxu0 0.0
    %3267 = vmatpush1.msra.mxu0 %v113
    %3268 = vmatprep.subr.mxu0 0.0
    %3269 = vmatpush1.msra.mxu0 %v114
    %3270 = vmatprep.subr.mxu0 0.0
    %3271 = vmatpush1.msra.mxu0 %v115
    %3272 = vmatprep.subr.mxu0 0.0
    %3273 = vmatpush1.msra.mxu0 %v116
    %3274 = vmatprep.subr.mxu0 0.0
    %3275 = vmatpush1.msra.mxu0 %v117
    %3276 = vmatprep.subr.mxu0 0.0
    %3277 = vmatpush1.msra.mxu0 %v118
    %3278 = vmatprep.subr.mxu0 0.0
    %3279 = vmatpush1.msra.mxu0 %v119
    %3280 = vmatprep.subr.mxu0 0.0
    %3281 = vmatpush1.msra.mxu0 %v120
    %3282 = vmatprep.subr.mxu0 0.0
    %3283 = vmatpush1.msra.mxu0 %v121
    %3284 = vmatprep.subr.mxu0 0.0
    %3285 = vmatpush1.msra.mxu0 %v122
    %3286 = vmatprep.subr.mxu0 0.0
    %3287 = vmatpush1.msra.mxu0 %v123
    %3288 = vmatprep.subr.mxu0 0.0
    %3289 = vmatpush1.msra.mxu0 %v124
    %3290 = vmatprep.subr.mxu0 0.0
    %3291 = vmatpush1.msra.mxu0 %v125
    %3292 = vmatprep.subr.mxu0 0.0
    %3293 = vmatpush1.msra.mxu0 %v126
    %3294 = vmatprep.subr.mxu0 0.0
    %3295 = vmatpush1.msra.mxu0 0.0
    %3296 = vmatprep.subr.mxu0 0.0
    %3297 = vmatpush1.msra.mxu0 0.0
    %3298 = vmatprep.subr.mxu0 0.0
    %3299 = vmatpush1.msra.mxu0 0.0
    %3300 = vmatprep.subr.mxu0 0.0
    %3301 = vmatpush1.msra.mxu0 0.0
    %3302 = vmatprep.subr.mxu0 0.0
    %3303 = vmatpush1.msra.mxu0 0.0
    %3304 = vmatprep.subr.mxu0 0.0
    %3305 = vmatpush1.msra.mxu0 0.0
    %3306 = vmatprep.subr.mxu0 0.0
    %3307 = vmatpush1.msra.mxu0 0.0
    %3308 = vmatprep.subr.mxu0 0.0
    %3309 = vmatpush1.msra.mxu0 0.0
    %3310 = vmatprep.subr.mxu0 0.0
    %3311 = vmatpush1.msra.mxu0 0.0
    %3312 = vmatprep.subr.mxu0 0.0
    %3313 = vmatpush1.msra.mxu0 0.0
    %3314 = vmatprep.subr.mxu0 0.0
    %3315 = vmatpush1.msra.mxu0 0.0
    %3316 = vmatprep.subr.mxu0 0.0
    %3317 = vmatpush1.msra.mxu0 0.0
    %3318 = vmatprep.subr.mxu0 0.0
    %3319 = vmatpush1.msra.mxu0 0.0
    %3320 = vmatprep.subr.mxu0 0.0
    %3321 = vmatpush1.msra.mxu0 0.0
    %3322 = vmatprep.subr.mxu0 0.0
    %3323 = vmatpush1.msra.mxu0 0.0
    %3324 = vmatprep.subr.mxu0 0.0
    %3325 = vmatpush1.msra.mxu0 0.0
    %3326 = vmatprep.mubr.f32.mxu0 0.0
    %3327 = vmatmul.mubr.f32.gmra.mrb[0].mxu0 %v2907
    %v3328 = vpop.f32.mrb[0].mxu0
    %v3329 = vadd.f32 0.0, %v3328
    %v3330 = vpop.f32.mrb[0].mxu0
    %3331 = vmatprep.mubr.f32.mxu0 0.0
    %3332 = vmatmul.mubr.f32.gmra.mrb[0].mxu0 %v2908
    %v3333 = vpop.f32.mrb[0].mxu0
    %v3334 = vadd.f32 0.0, %v3333
    %v3335 = vpop.f32.mrb[0].mxu0
    %3336 = vmatprep.mubr.f32.mxu0 0.0
    %3337 = vmatmul.mubr.f32.gmra.mrb[0].mxu0 %v2909
    %v3338 = vpop.f32.mrb[0].mxu0
    %v3339 = vadd.f32 0.0, %v3338
    %v3340 = vpop.f32.mrb[0].mxu0
    %3341 = vmatprep.mubr.f32.mxu0 0.0
    %3342 = vmatmul.mubr.f32.gmra.mrb[0].mxu0 %v2910
    %v3343 = vpop.f32.mrb[0].mxu0
    %v3344 = vadd.f32 0.0, %v3343
    %v3345 = vpop.f32.mrb[0].mxu0
    %3346 = vmatprep.mubr.f32.mxu0 0.0
    %3347 = vmatmul.mubr.f32.gmra.mrb[0].mxu0 %v2911
    %v3348 = vpop.f32.mrb[0].mxu0
    %v3349 = vadd.f32 0.0, %v3348
    %v3350 = vpop.f32.mrb[0].mxu0
    %3351 = vmatprep.mubr.f32.mxu0 0.0
    %3352 = vmatmul.mubr.f32.gmra.mrb[0].mxu0 %v2912
    %v3353 = vpop.f32.mrb[0].mxu0
    %v3354 = vadd.f32 0.0, %v3353
    %v3355 = vpop.f32.mrb[0].mxu0
    %3356 = vmatprep.mubr.f32.mxu0 0.0
    %3357 = vmatmul.mubr.f32.gmra.mrb[0].mxu0 %v2913
    %v3358 = vpop.f32.mrb[0].mxu0
    %v3359 = vadd.f32 0.0, %v3358
    %v3360 = vpop.f32.mrb[0].mxu0
    %3361 = vmatprep.mubr.f32.mxu0 0.0
    %3362 = vmatmul.mubr.f32.gmra.mrb[0].mxu0 %v2914
    %v3363 = vpop.f32.mrb[0].mxu0
    %v3364 = vadd.f32 0.0, %v3363
    %v3365 = vpop.f32.mrb[0].mxu0
    %3366 = vmatprep.mubr.f32.mxu0 0.0
    %3367 = vmatmul.mubr.f32.gmra.mrb[0].mxu0 %v2915
    %v3368 = vpop.f32.mrb[0].mxu0
    %v3369 = vadd.f32 0.0, %v3368
    %v3370 = vpop.f32.mrb[0].mxu0
    %3371 = vmatprep.mubr.f32.mxu0 0.0
    %3372 = vmatmul.mubr.f32.gmra.mrb[0].mxu0 %v2916
    %v3373 = vpop.f32.mrb[0].mxu0
    %v3374 = vadd.f32 0.0, %v3373
    %v3375 = vpop.f32.mrb[0].mxu0
    %3376 = vmatprep.mubr.f32.mxu0 0.0
    %3377 = vmatmul.mubr.f32.gmra.mrb[0].mxu0 %v2917
    %v3378 = vpop.f32.mrb[0].mxu0
    %v3379 = vadd.f32 0.0, %v3378
    %v3380 = vpop.f32.mrb[0].mxu0
    %3381 = vmatprep.mubr.f32.mxu0 0.0
    %3382 = vmatmul.mubr.f32.gmra.mrb[0].mxu0 %v2918
    %v3383 = vpop.f32.mrb[0].mxu0
    %v3384 = vadd.f32 0.0, %v3383
    %v3385 = vpop.f32.mrb[0].mxu0
    %3386 = vmatprep.mubr.f32.mxu0 0.0
    %3387 = vmatmul.mubr.f32.gmra.mrb[0].mxu0 %v2919
    %v3388 = vpop.f32.mrb[0].mxu0
    %v3389 = vadd.f32 0.0, %v3388
    %v3390 = vpop.f32.mrb[0].mxu0
    %3391 = vmatprep.mubr.f32.mxu0 0.0
    %3392 = vmatmul.mubr.f32.gmra.mrb[0].mxu0 %v2920
    %v3393 = vpop.f32.mrb[0].mxu0
    %v3394 = vadd.f32 0.0, %v3393
    %v3395 = vpop.f32.mrb[0].mxu0
    %3396 = vmatprep.mubr.f32.mxu0 0.0
    %3397 = vmatmul.mubr.f32.gmra.mrb[0].mxu0 %v2921
    %v3398 = vpop.f32.mrb[0].mxu0
    %v3399 = vadd.f32 0.0, %v3398
    %v3400 = vpop.f32.mrb[0].mxu0
    %3401 = vmatprep.mubr.f32.mxu0 0.0
    %3402 = vmatmul.mubr.f32.gmra.mrb[0].mxu0 %v2922
    %v3403 = vpop.f32.mrb[0].mxu0
    %v3404 = vadd.f32 0.0, %v3403
    %v3405 = vpop.f32.mrb[0].mxu0
    %3406 = vdwg.mxu0
    %v3407 = vadd.f32 %v3246, %v3329
    %v3408 = vadd.f32 %v3247, %v3334
    %v3409 = vadd.f32 %v3248, %v3339
    %v3410 = vadd.f32 %v3249, %v3344
    %v3411 = vadd.f32 %v3250, %v3349
    %v3412 = vadd.f32 %v3251, %v3354
    %v3413 = vadd.f32 %v3252, %v3359
    %v3414 = vadd.f32 %v3253, %v3364
    %v3415 = vadd.f32 %v3254, %v3369
    %v3416 = vadd.f32 %v3255, %v3374
    %v3417 = vadd.f32 %v3256, %v3379
    %v3418 = vadd.f32 %v3257, %v3384
    %v3419 = vadd.f32 %v3258, %v3389
    %v3420 = vadd.f32 %v3259, %v3394
    %v3421 = vadd.f32 %v3260, %v3399
    %v3422 = vadd.f32 %v3261, %v3404
    %v3423 = vtanh.pop %v3407
    %v3424 = vtanh.pop %v3408
    %v3425 = vtanh.pop %v3409
    %v3426 = vtanh.pop %v3410
    %v3427 = vtanh.pop %v3411
    %v3428 = vtanh.pop %v3412
    %v3429 = vtanh.pop %v3413
    %v3430 = vtanh.pop %v3414
    %v3431 = vtanh.pop %v3415
    %v3432 = vtanh.pop %v3416
    %v3433 = vtanh.pop %v3417
    %v3434 = vtanh.pop %v3418
    %v3435 = vtanh.pop %v3419
    %v3436 = vtanh.pop %v3420
    %v3437 = vtanh.pop %v3421
    %v3438 = vtanh.pop %v3422
    %3439 = vmatprep.subr.mxu0 0.0
    %3440 = vmatpush1.msra.mxu0 %v320
    %3441 = vmatprep.subr.mxu0 0.0
    %3442 = vmatpush1.msra.mxu0 %v321
    %3443 = vmatprep.subr.mxu0 0.0
    %3444 = vmatpush1.msra.mxu0 %v322
    %3445 = vmatprep.subr.mxu0 0.0
    %3446 = vmatpush1.msra.mxu0 %v323
    %3447 = vmatprep.subr.mxu0 0.0
    %3448 = vmatpush1.msra.mxu0 %v324
    %3449 = vmatprep.subr.mxu0 0.0
    %3450 = vmatpush1.msra.mxu0 %v325
    %3451 = vmatprep.subr.mxu0 0.0
    %3452 = vmatpush1.msra.mxu0 %v326
    %3453 = vmatprep.subr.mxu0 0.0
    %3454 = vmatpush1.msra.mxu0 %v327
    %3455 = vmatprep.subr.mxu0 0.0
    %3456 = vmatpush1.msra.mxu0 %v328
    %3457 = vmatprep.subr.mxu0 0.0
    %3458 = vmatpush1.msra.mxu0 %v329
    %3459 = vmatprep.subr.mxu0 0.0
    %3460 = vmatpush1.msra.mxu0 %v330
    %3461 = vmatprep.subr.mxu0 0.0
    %3462 = vmatpush1.msra.mxu0 %v331
    %3463 = vmatprep.subr.mxu0 0.0
    %3464 = vmatpush1.msra.mxu0 %v332
    %3465 = vmatprep.subr.mxu0 0.0
    %3466 = vmatpush1.msra.mxu0 %v333
    %3467 = vmatprep.subr.mxu0 0.0
    %3468 = vmatpush1.msra.mxu0 %v334
    %3469 = vmatprep.subr.mxu0 0.0
    %3470 = vmatpush1.msra.mxu0 %v335
    %3471 = vmatprep.subr.mxu0 0.0
    %3472 = vmatpush1.msra.mxu0 0.0
    %3473 = vmatprep.subr.mxu0 0.0
    %3474 = vmatpush1.msra.mxu0 0.0
    %3475 = vmatprep.subr.mxu0 0.0
    %3476 = vmatpush1.msra.mxu0 0.0
    %3477 = vmatprep.subr.mxu0 0.0
    %3478 = vmatpush1.msra.mxu0 0.0
    %3479 = vmatprep.subr.mxu0 0.0
    %3480 = vmatpush1.msra.mxu0 0.0
    %3481 = vmatprep.subr.mxu0 0.0
    %3482 = vmatpush1.msra.mxu0 0.0
    %3483 = vmatprep.subr.mxu0 0.0
    %3484 = vmatpush1.msra.mxu0 0.0
    %3485 = vmatprep.subr.mxu0 0.0
    %3486 = vmatpush1.msra.mxu0 0.0
    %3487 = vmatprep.subr.mxu0 0.0
    %3488 = vmatpush1.msra.mxu0 0.0
    %3489 = vmatprep.subr.mxu0 0.0
    %3490 = vmatpush1.msra.mxu0 0.0
    %3491 = vmatprep.subr.mxu0 0.0
    %3492 = vmatpush1.msra.mxu0 0.0
    %3493 = vmatprep.subr.mxu0 0.0
    %3494 = vmatpush1.msra.mxu0 0.0
    %3495 = vmatprep.subr.mxu0 0.0
    %3496 = vmatpush1.msra.mxu0 0.0
    %3497 = vmatprep.subr.mxu0 0.0
    %3498 = vmatpush1.msra.mxu0 0.0
    %3499 = vmatprep.subr.mxu0 0.0
    %3500 = vmatpush1.msra.mxu0 0.0
    %3501 = vmatprep.subr.mxu0 0.0
    %3502 = vmatpush1.msra.mxu0 0.0
    %3503 = vmatprep.mubr.f32.mxu0 0.0
    %3504 = vmatmul.mubr.f32.gmra.mrb[0].mxu0 %v3229
    %v3505 = vpop.f32.mrb[0].mxu0
    %v3506 = vadd.f32 0.0, %v3505
    %v3507 = vpop.f32.mrb[0].mxu0
    %3508 = vmatprep.mubr.f32.mxu0 0.0
    %3509 = vmatmul.mubr.f32.gmra.mrb[0].mxu0 %v3230
    %v3510 = vpop.f32.mrb[0].mxu0
    %v3511 = vadd.f32 0.0, %v3510
    %v3512 = vpop.f32.mrb[0].mxu0
    %3513 = vmatprep.mubr.f32.mxu0 0.0
    %3514 = vmatmul.mubr.f32.gmra.mrb[0].mxu0 %v3231
    %v3515 = vpop.f32.mrb[0].mxu0
    %v3516 = vadd.f32 0.0, %v3515
    %v3517 = vpop.f32.mrb[0].mxu0
    %3518 = vmatprep.mubr.f32.mxu0 0.0
    %3519 = vmatmul.mubr.f32.gmra.mrb[0].mxu0 %v3232
    %v3520 = vpop.f32.mrb[0].mxu0
    %v3521 = vadd.f32 0.0, %v3520
    %v3522 = vpop.f32.mrb[0].mxu0
    %3523 = vmatprep.mubr.f32.mxu0 0.0
    %3524 = vmatmul.mubr.f32.gmra.mrb[0].mxu0 %v3233
    %v3525 = vpop.f32.mrb[0].mxu0
    %v3526 = vadd.f32 0.0, %v3525
    %v3527 = vpop.f32.mrb[0].mxu0
    %3528 = vmatprep.mubr.f32.mxu0 0.0
    %3529 = vmatmul.mubr.f32.gmra.mrb[0].mxu0 %v3234
    %v3530 = vpop.f32.mrb[0].mxu0
    %v3531 = vadd.f32 0.0, %v3530
    %v3532 = vpop.f32.mrb[0].mxu0
    %3533 = vmatprep.mubr.f32.mxu0 0.0
    %3534 = vmatmul.mubr.f32.gmra.mrb[0].mxu0 %v3235
    %v3535 = vpop.f32.mrb[0].mxu0
    %v3536 = vadd.f32 0.0, %v3535
    %v3537 = vpop.f32.mrb[0].mxu0
    %3538 = vmatprep.mubr.f32.mxu0 0.0
    %3539 = vmatmul.mubr.f32.gmra.mrb[0].mxu0 %v3236
    %v3540 = vpop.f32.mrb[0].mxu0
    %v3541 = vadd.f32 0.0, %v3540
    %v3542 = vpop.f32.mrb[0].mxu0
    %3543 = vmatprep.mubr.f32.mxu0 0.0
    %3544 = vmatmul.mubr.f32.gmra.mrb[0].mxu0 %v3237
    %v3545 = vpop.f32.mrb[0].mxu0
    %v3546 = vadd.f32 0.0, %v3545
    %v3547 = vpop.f32.mrb[0].mxu0
    %3548 = vmatprep.mubr.f32.mxu0 0.0
    %3549 = vmatmul.mubr.f32.gmra.mrb[0].mxu0 %v3238
    %v3550 = vpop.f32.mrb[0].mxu0
    %v3551 = vadd.f32 0.0, %v3550
    %v3552 = vpop.f32.mrb[0].mxu0
    %3553 = vmatprep.mubr.f32.mxu0 0.0
    %3554 = vmatmul.mubr.f32.gmra.mrb[0].mxu0 %v3239
    %v3555 = vpop.f32.mrb[0].mxu0
    %v3556 = vadd.f32 0.0, %v3555
    %v3557 = vpop.f32.mrb[0].mxu0
    %3558 = vmatprep.mubr.f32.mxu0 0.0
    %3559 = vmatmul.mubr.f32.gmra.mrb[0].mxu0 %v3240
    %v3560 = vpop.f32.mrb[0].mxu0
    %v3561 = vadd.f32 0.0, %v3560
    %v3562 = vpop.f32.mrb[0].mxu0
    %3563 = vmatprep.mubr.f32.mxu0 0.0
    %3564 = vmatmul.mubr.f32.gmra.mrb[0].mxu0 %v3241
    %v3565 = vpop.f32.mrb[0].mxu0
    %v3566 = vadd.f32 0.0, %v3565
    %v3567 = vpop.f32.mrb[0].mxu0
    %3568 = vmatprep.mubr.f32.mxu0 0.0
    %3569 = vmatmul.mubr.f32.gmra.mrb[0].mxu0 %v3242
    %v3570 = vpop.f32.mrb[0].mxu0
    %v3571 = vadd.f32 0.0, %v3570
    %v3572 = vpop.f32.mrb[0].mxu0
    %3573 = vmatprep.mubr.f32.mxu0 0.0
    %3574 = vmatmul.mubr.f32.gmra.mrb[0].mxu0 %v3243
    %v3575 = vpop.f32.mrb[0].mxu0
    %v3576 = vadd.f32 0.0, %v3575
    %v3577 = vpop.f32.mrb[0].mxu0
    %3578 = vmatprep.mubr.f32.mxu0 0.0
    %3579 = vmatmul.mubr.f32.gmra.mrb[0].mxu0 %v3244
    %v3580 = vpop.f32.mrb[0].mxu0
    %v3581 = vadd.f32 0.0, %v3580
    %v3582 = vpop.f32.mrb[0].mxu0
    %3583 = vdwg.mxu0
    %3584 = vmatprep.subr.mxu0 0.0
    %3585 = vmatpush1.msra.mxu0 %v304
    %3586 = vmatprep.subr.mxu0 0.0
    %3587 = vmatpush1.msra.mxu0 %v305
    %3588 = vmatprep.subr.mxu0 0.0
    %3589 = vmatpush1.msra.mxu0 %v306
    %3590 = vmatprep.subr.mxu0 0.0
    %3591 = vmatpush1.msra.mxu0 %v307
    %3592 = vmatprep.subr.mxu0 0.0
    %3593 = vmatpush1.msra.mxu0 %v308
    %3594 = vmatprep.subr.mxu0 0.0
    %3595 = vmatpush1.msra.mxu0 %v309
    %3596 = vmatprep.subr.mxu0 0.0
    %3597 = vmatpush1.msra.mxu0 %v310
    %3598 = vmatprep.subr.mxu0 0.0
    %3599 = vmatpush1.msra.mxu0 %v311
    %3600 = vmatprep.subr.mxu0 0.0
    %3601 = vmatpush1.msra.mxu0 %v312
    %3602 = vmatprep.subr.mxu0 0.0
    %3603 = vmatpush1.msra.mxu0 %v313
    %3604 = vmatprep.subr.mxu0 0.0
    %3605 = vmatpush1.msra.mxu0 %v314
    %3606 = vmatprep.subr.mxu0 0.0
    %3607 = vmatpush1.msra.mxu0 %v315
    %3608 = vmatprep.subr.mxu0 0.0
    %3609 = vmatpush1.msra.mxu0 %v316
    %3610 = vmatprep.subr.mxu0 0.0
    %3611 = vmatpush1.msra.mxu0 %v317
    %3612 = vmatprep.subr.mxu0 0.0
    %3613 = vmatpush1.msra.mxu0 %v318
    %3614 = vmatprep.subr.mxu0 0.0
    %3615 = vmatpush1.msra.mxu0 %v319
    %3616 = vmatprep.subr.mxu0 0.0
    %3617 = vmatpush1.msra.mxu0 0.0
    %3618 = vmatprep.subr.mxu0 0.0
    %3619 = vmatpush1.msra.mxu0 0.0
    %3620 = vmatprep.subr.mxu0 0.0
    %3621 = vmatpush1.msra.mxu0 0.0
    %3622 = vmatprep.subr.mxu0 0.0
    %3623 = vmatpush1.msra.mxu0 0.0
    %3624 = vmatprep.subr.mxu0 0.0
    %3625 = vmatpush1.msra.mxu0 0.0
    %3626 = vmatprep.subr.mxu0 0.0
    %3627 = vmatpush1.msra.mxu0 0.0
    %3628 = vmatprep.subr.mxu0 0.0
    %3629 = vmatpush1.msra.mxu0 0.0
    %3630 = vmatprep.subr.mxu0 0.0
    %3631 = vmatpush1.msra.mxu0 0.0
    %3632 = vmatprep.subr.mxu0 0.0
    %3633 = vmatpush1.msra.mxu0 0.0
    %3634 = vmatprep.subr.mxu0 0.0
    %3635 = vmatpush1.msra.mxu0 0.0
    %3636 = vmatprep.subr.mxu0 0.0
    %3637 = vmatpush1.msra.mxu0 0.0
    %3638 = vmatprep.subr.mxu0 0.0
    %3639 = vmatpush1.msra.mxu0 0.0
    %3640 = vmatprep.subr.mxu0 0.0
    %3641 = vmatpush1.msra.mxu0 0.0
    %3642 = vmatprep.subr.mxu0 0.0
    %3643 = vmatpush1.msra.mxu0 0.0
    %3644 = vmatprep.subr.mxu0 0.0
    %3645 = vmatpush1.msra.mxu0 0.0
    %3646 = vmatprep.subr.mxu0 0.0
    %3647 = vmatpush1.msra.mxu0 0.0
    %3648 = vmatprep.mubr.f32.mxu0 0.0
    %3649 = vmatmul.mubr.f32.gmra.mrb[0].mxu0 %v3423
    %v3650 = vpop.f32.mrb[0].mxu0
    %v3651 = vadd.f32 %v3506, %v3650
    %v3652 = vpop.f32.mrb[0].mxu0
    %3653 = vmatprep.mubr.f32.mxu0 0.0
    %3654 = vmatmul.mubr.f32.gmra.mrb[0].mxu0 %v3424
    %v3655 = vpop.f32.mrb[0].mxu0
    %v3656 = vadd.f32 %v3511, %v3655
    %v3657 = vpop.f32.mrb[0].mxu0
    %3658 = vmatprep.mubr.f32.mxu0 0.0
    %3659 = vmatmul.mubr.f32.gmra.mrb[0].mxu0 %v3425
    %v3660 = vpop.f32.mrb[0].mxu0
    %v3661 = vadd.f32 %v3516, %v3660
    %v3662 = vpop.f32.mrb[0].mxu0
    %3663 = vmatprep.mubr.f32.mxu0 0.0
    %3664 = vmatmul.mubr.f32.gmra.mrb[0].mxu0 %v3426
    %v3665 = vpop.f32.mrb[0].mxu0
    %v3666 = vadd.f32 %v3521, %v3665
    %v3667 = vpop.f32.mrb[0].mxu0
    %3668 = vmatprep.mubr.f32.mxu0 0.0
    %3669 = vmatmul.mubr.f32.gmra.mrb[0].mxu0 %v3427
    %v3670 = vpop.f32.mrb[0].mxu0
    %v3671 = vadd.f32 %v3526, %v3670
    %v3672 = vpop.f32.mrb[0].mxu0
    %3673 = vmatprep.mubr.f32.mxu0 0.0
    %3674 = vmatmul.mubr.f32.gmra.mrb[0].mxu0 %v3428
    %v3675 = vpop.f32.mrb[0].mxu0
    %v3676 = vadd.f32 %v3531, %v3675
    %v3677 = vpop.f32.mrb[0].mxu0
    %3678 = vmatprep.mubr.f32.mxu0 0.0
    %3679 = vmatmul.mubr.f32.gmra.mrb[0].mxu0 %v3429
    %v3680 = vpop.f32.mrb[0].mxu0
    %v3681 = vadd.f32 %v3536, %v3680
    %v3682 = vpop.f32.mrb[0].mxu0
    %3683 = vmatprep.mubr.f32.mxu0 0.0
    %3684 = vmatmul.mubr.f32.gmra.mrb[0].mxu0 %v3430
    %v3685 = vpop.f32.mrb[0].mxu0
    %v3686 = vadd.f32 %v3541, %v3685
    %v3687 = vpop.f32.mrb[0].mxu0
    %3688 = vmatprep.mubr.f32.mxu0 0.0
    %3689 = vmatmul.mubr.f32.gmra.mrb[0].mxu0 %v3431
    %v3690 = vpop.f32.mrb[0].mxu0
    %v3691 = vadd.f32 %v3546, %v3690
    %v3692 = vpop.f32.mrb[0].mxu0
    %3693 = vmatprep.mubr.f32.mxu0 0.0
    %3694 = vmatmul.mubr.f32.gmra.mrb[0].mxu0 %v3432
    %v3695 = vpop.f32.mrb[0].mxu0
    %v3696 = vadd.f32 %v3551, %v3695
    %v3697 = vpop.f32.mrb[0].mxu0
    %3698 = vmatprep.mubr.f32.mxu0 0.0
    %3699 = vmatmul.mubr.f32.gmra.mrb[0].mxu0 %v3433
    %v3700 = vpop.f32.mrb[0].mxu0
    %v3701 = vadd.f32 %v3556, %v3700
    %v3702 = vpop.f32.mrb[0].mxu0
    %3703 = vmatprep.mubr.f32.mxu0 0.0
    %3704 = vmatmul.mubr.f32.gmra.mrb[0].mxu0 %v3434
    %v3705 = vpop.f32.mrb[0].mxu0
    %v3706 = vadd.f32 %v3561, %v3705
    %v3707 = vpop.f32.mrb[0].mxu0
    %3708 = vmatprep.mubr.f32.mxu0 0.0
    %3709 = vmatmul.mubr.f32.gmra.mrb[0].mxu0 %v3435
    %v3710 = vpop.f32.mrb[0].mxu0
    %v3711 = vadd.f32 %v3566, %v3710
    %v3712 = vpop.f32.mrb[0].mxu0
    %3713 = vmatprep.mubr.f32.mxu0 0.0
    %3714 = vmatmul.mubr.f32.gmra.mrb[0].mxu0 %v3436
    %v3715 = vpop.f32.mrb[0].mxu0
    %v3716 = vadd.f32 %v3571, %v3715
    %v3717 = vpop.f32.mrb[0].mxu0
    %3718 = vmatprep.mubr.f32.mxu0 0.0
    %3719 = vmatmul.mubr.f32.gmra.mrb[0].mxu0 %v3437
    %v3720 = vpop.f32.mrb[0].mxu0
    %v3721 = vadd.f32 %v3576, %v3720
    %v3722 = vpop.f32.mrb[0].mxu0
    %3723 = vmatprep.mubr.f32.mxu0 0.0
    %3724 = vmatmul.mubr.f32.gmra.mrb[0].mxu0 %v3438
    %v3725 = vpop.f32.mrb[0].mxu0
    %v3726 = vadd.f32 %v3581, %v3725
    %v3727 = vpop.f32.mrb[0].mxu0
    %3728 = vdwg.mxu0
    %v3729 = vadd.f32 %v3651, %v631
    %v3730 = vadd.f32 %v3656, %v631
    %v3731 = vadd.f32 %v3661, %v631
    %v3732 = vadd.f32 %v3666, %v631
    %v3733 = vadd.f32 %v3671, %v631
    %v3734 = vadd.f32 %v3676, %v631
    %v3735 = vadd.f32 %v3681, %v631
    %v3736 = vadd.f32 %v3686, %v631
    %v3737 = vadd.f32 %v3691, %v631
    %v3738 = vadd.f32 %v3696, %v631
    %v3739 = vadd.f32 %v3701, %v631
    %v3740 = vadd.f32 %v3706, %v631
    %v3741 = vadd.f32 %v3711, %v631
    %v3742 = vadd.f32 %v3716, %v631
    %v3743 = vadd.f32 %v3721, %v631
    %v3744 = vadd.f32 %v3726, %v631
    %v3745 = vtanh.pop %v3729
    %v3746 = vtanh.pop %v3730
    %v3747 = vtanh.pop %v3731
    %v3748 = vtanh.pop %v3732
    %v3749 = vtanh.pop %v3733
    %v3750 = vtanh.pop %v3734
    %v3751 = vtanh.pop %v3735
    %v3752 = vtanh.pop %v3736
    %v3753 = vtanh.pop %v3737
    %v3754 = vtanh.pop %v3738
    %v3755 = vtanh.pop %v3739
    %v3756 = vtanh.pop %v3740
    %v3757 = vtanh.pop %v3741
    %v3758 = vtanh.pop %v3742
    %v3759 = vtanh.pop %v3743
    %v3760 = vtanh.pop %v3744
    %s3761 = scalar_lea.vmem [#allocation2], 896
    %v3762 = vld [vmem:[%s3761] sm:$0xff]
    %v3763 = vld [vmem:[%s3761 + $0x8] sm:$0xff]
    %v3764 = vld [vmem:[%s3761 + $0x10] sm:$0xff]
    %v3765 = vld [vmem:[%s3761 + $0x18] sm:$0xff]
    %v3766 = vld [vmem:[%s3761 + $0x20] sm:$0xff]
    %v3767 = vld [vmem:[%s3761 + $0x28] sm:$0xff]
    %v3768 = vld [vmem:[%s3761 + $0x30] sm:$0xff]
    %v3769 = vld [vmem:[%s3761 + $0x38] sm:$0xff]
    %v3770 = vld [vmem:[%s3761 + $0x40] sm:$0xff]
    %v3771 = vld [vmem:[%s3761 + $0x48] sm:$0xff]
    %v3772 = vld [vmem:[%s3761 + $0x50] sm:$0xff]
    %v3773 = vld [vmem:[%s3761 + $0x58] sm:$0xff]
    %v3774 = vld [vmem:[%s3761 + $0x60] sm:$0xff]
    %v3775 = vld [vmem:[%s3761 + $0x68] sm:$0xff]
    %v3776 = vld [vmem:[%s3761 + $0x70] sm:$0xff]
    %v3777 = vld [vmem:[%s3761 + $0x78] sm:$0xff]
    %3778 = vmatprep.subr.mxu0 0.0
    %3779 = vmatpush1.msra.mxu0 %v111
    %3780 = vmatprep.subr.mxu0 0.0
    %3781 = vmatpush1.msra.mxu0 %v112
    %3782 = vmatprep.subr.mxu0 0.0
    %3783 = vmatpush1.msra.mxu0 %v113
    %3784 = vmatprep.subr.mxu0 0.0
    %3785 = vmatpush1.msra.mxu0 %v114
    %3786 = vmatprep.subr.mxu0 0.0
    %3787 = vmatpush1.msra.mxu0 %v115
    %3788 = vmatprep.subr.mxu0 0.0
    %3789 = vmatpush1.msra.mxu0 %v116
    %3790 = vmatprep.subr.mxu0 0.0
    %3791 = vmatpush1.msra.mxu0 %v117
    %3792 = vmatprep.subr.mxu0 0.0
    %3793 = vmatpush1.msra.mxu0 %v118
    %3794 = vmatprep.subr.mxu0 0.0
    %3795 = vmatpush1.msra.mxu0 %v119
    %3796 = vmatprep.subr.mxu0 0.0
    %3797 = vmatpush1.msra.mxu0 %v120
    %3798 = vmatprep.subr.mxu0 0.0
    %3799 = vmatpush1.msra.mxu0 %v121
    %3800 = vmatprep.subr.mxu0 0.0
    %3801 = vmatpush1.msra.mxu0 %v122
    %3802 = vmatprep.subr.mxu0 0.0
    %3803 = vmatpush1.msra.mxu0 %v123
    %3804 = vmatprep.subr.mxu0 0.0
    %3805 = vmatpush1.msra.mxu0 %v124
    %3806 = vmatprep.subr.mxu0 0.0
    %3807 = vmatpush1.msra.mxu0 %v125
    %3808 = vmatprep.subr.mxu0 0.0
    %3809 = vmatpush1.msra.mxu0 %v126
    %3810 = vmatprep.subr.mxu0 0.0
    %3811 = vmatpush1.msra.mxu0 0.0
    %3812 = vmatprep.subr.mxu0 0.0
    %3813 = vmatpush1.msra.mxu0 0.0
    %3814 = vmatprep.subr.mxu0 0.0
    %3815 = vmatpush1.msra.mxu0 0.0
    %3816 = vmatprep.subr.mxu0 0.0
    %3817 = vmatpush1.msra.mxu0 0.0
    %3818 = vmatprep.subr.mxu0 0.0
    %3819 = vmatpush1.msra.mxu0 0.0
    %3820 = vmatprep.subr.mxu0 0.0
    %3821 = vmatpush1.msra.mxu0 0.0
    %3822 = vmatprep.subr.mxu0 0.0
    %3823 = vmatpush1.msra.mxu0 0.0
    %3824 = vmatprep.subr.mxu0 0.0
    %3825 = vmatpush1.msra.mxu0 0.0
    %3826 = vmatprep.subr.mxu0 0.0
    %3827 = vmatpush1.msra.mxu0 0.0
    %3828 = vmatprep.subr.mxu0 0.0
    %3829 = vmatpush1.msra.mxu0 0.0
    %3830 = vmatprep.subr.mxu0 0.0
    %3831 = vmatpush1.msra.mxu0 0.0
    %3832 = vmatprep.subr.mxu0 0.0
    %3833 = vmatpush1.msra.mxu0 0.0
    %3834 = vmatprep.subr.mxu0 0.0
    %3835 = vmatpush1.msra.mxu0 0.0
    %3836 = vmatprep.subr.mxu0 0.0
    %3837 = vmatpush1.msra.mxu0 0.0
    %3838 = vmatprep.subr.mxu0 0.0
    %3839 = vmatpush1.msra.mxu0 0.0
    %3840 = vmatprep.subr.mxu0 0.0
    %3841 = vmatpush1.msra.mxu0 0.0
    %3842 = vmatprep.mubr.f32.mxu0 0.0
    %3843 = vmatmul.mubr.f32.gmra.mrb[0].mxu0 %v3423
    %v3844 = vpop.f32.mrb[0].mxu0
    %v3845 = vadd.f32 0.0, %v3844
    %v3846 = vpop.f32.mrb[0].mxu0
    %3847 = vmatprep.mubr.f32.mxu0 0.0
    %3848 = vmatmul.mubr.f32.gmra.mrb[0].mxu0 %v3424
    %v3849 = vpop.f32.mrb[0].mxu0
    %v3850 = vadd.f32 0.0, %v3849
    %v3851 = vpop.f32.mrb[0].mxu0
    %3852 = vmatprep.mubr.f32.mxu0 0.0
    %3853 = vmatmul.mubr.f32.gmra.mrb[0].mxu0 %v3425
    %v3854 = vpop.f32.mrb[0].mxu0
    %v3855 = vadd.f32 0.0, %v3854
    %v3856 = vpop.f32.mrb[0].mxu0
    %3857 = vmatprep.mubr.f32.mxu0 0.0
    %3858 = vmatmul.mubr.f32.gmra.mrb[0].mxu0 %v3426
    %v3859 = vpop.f32.mrb[0].mxu0
    %v3860 = vadd.f32 0.0, %v3859
    %v3861 = vpop.f32.mrb[0].mxu0
    %3862 = vmatprep.mubr.f32.mxu0 0.0
    %3863 = vmatmul.mubr.f32.gmra.mrb[0].mxu0 %v3427
    %v3864 = vpop.f32.mrb[0].mxu0
    %v3865 = vadd.f32 0.0, %v3864
    %v3866 = vpop.f32.mrb[0].mxu0
    %3867 = vmatprep.mubr.f32.mxu0 0.0
    %3868 = vmatmul.mubr.f32.gmra.mrb[0].mxu0 %v3428
    %v3869 = vpop.f32.mrb[0].mxu0
    %v3870 = vadd.f32 0.0, %v3869
    %v3871 = vpop.f32.mrb[0].mxu0
    %3872 = vmatprep.mubr.f32.mxu0 0.0
    %3873 = vmatmul.mubr.f32.gmra.mrb[0].mxu0 %v3429
    %v3874 = vpop.f32.mrb[0].mxu0
    %v3875 = vadd.f32 0.0, %v3874
    %v3876 = vpop.f32.mrb[0].mxu0
    %3877 = vmatprep.mubr.f32.mxu0 0.0
    %3878 = vmatmul.mubr.f32.gmra.mrb[0].mxu0 %v3430
    %v3879 = vpop.f32.mrb[0].mxu0
    %v3880 = vadd.f32 0.0, %v3879
    %v3881 = vpop.f32.mrb[0].mxu0
    %3882 = vmatprep.mubr.f32.mxu0 0.0
    %3883 = vmatmul.mubr.f32.gmra.mrb[0].mxu0 %v3431
    %v3884 = vpop.f32.mrb[0].mxu0
    %v3885 = vadd.f32 0.0, %v3884
    %v3886 = vpop.f32.mrb[0].mxu0
    %3887 = vmatprep.mubr.f32.mxu0 0.0
    %3888 = vmatmul.mubr.f32.gmra.mrb[0].mxu0 %v3432
    %v3889 = vpop.f32.mrb[0].mxu0
    %v3890 = vadd.f32 0.0, %v3889
    %v3891 = vpop.f32.mrb[0].mxu0
    %3892 = vmatprep.mubr.f32.mxu0 0.0
    %3893 = vmatmul.mubr.f32.gmra.mrb[0].mxu0 %v3433
    %v3894 = vpop.f32.mrb[0].mxu0
    %v3895 = vadd.f32 0.0, %v3894
    %v3896 = vpop.f32.mrb[0].mxu0
    %3897 = vmatprep.mubr.f32.mxu0 0.0
    %3898 = vmatmul.mubr.f32.gmra.mrb[0].mxu0 %v3434
    %v3899 = vpop.f32.mrb[0].mxu0
    %v3900 = vadd.f32 0.0, %v3899
    %v3901 = vpop.f32.mrb[0].mxu0
    %3902 = vmatprep.mubr.f32.mxu0 0.0
    %3903 = vmatmul.mubr.f32.gmra.mrb[0].mxu0 %v3435
    %v3904 = vpop.f32.mrb[0].mxu0
    %v3905 = vadd.f32 0.0, %v3904
    %v3906 = vpop.f32.mrb[0].mxu0
    %3907 = vmatprep.mubr.f32.mxu0 0.0
    %3908 = vmatmul.mubr.f32.gmra.mrb[0].mxu0 %v3436
    %v3909 = vpop.f32.mrb[0].mxu0
    %v3910 = vadd.f32 0.0, %v3909
    %v3911 = vpop.f32.mrb[0].mxu0
    %3912 = vmatprep.mubr.f32.mxu0 0.0
    %3913 = vmatmul.mubr.f32.gmra.mrb[0].mxu0 %v3437
    %v3914 = vpop.f32.mrb[0].mxu0
    %v3915 = vadd.f32 0.0, %v3914
    %v3916 = vpop.f32.mrb[0].mxu0
    %3917 = vmatprep.mubr.f32.mxu0 0.0
    %3918 = vmatmul.mubr.f32.gmra.mrb[0].mxu0 %v3438
    %v3919 = vpop.f32.mrb[0].mxu0
    %v3920 = vadd.f32 0.0, %v3919
    %v3921 = vpop.f32.mrb[0].mxu0
    %3922 = vdwg.mxu0
    %v3923 = vadd.f32 %v3762, %v3845
    %v3924 = vadd.f32 %v3763, %v3850
    %v3925 = vadd.f32 %v3764, %v3855
    %v3926 = vadd.f32 %v3765, %v3860
    %v3927 = vadd.f32 %v3766, %v3865
    %v3928 = vadd.f32 %v3767, %v3870
    %v3929 = vadd.f32 %v3768, %v3875
    %v3930 = vadd.f32 %v3769, %v3880
    %v3931 = vadd.f32 %v3770, %v3885
    %v3932 = vadd.f32 %v3771, %v3890
    %v3933 = vadd.f32 %v3772, %v3895
    %v3934 = vadd.f32 %v3773, %v3900
    %v3935 = vadd.f32 %v3774, %v3905
    %v3936 = vadd.f32 %v3775, %v3910
    %v3937 = vadd.f32 %v3776, %v3915
    %v3938 = vadd.f32 %v3777, %v3920
    %v3939 = vtanh.pop %v3923
    %v3940 = vtanh.pop %v3924
    %v3941 = vtanh.pop %v3925
    %v3942 = vtanh.pop %v3926
    %v3943 = vtanh.pop %v3927
    %v3944 = vtanh.pop %v3928
    %v3945 = vtanh.pop %v3929
    %v3946 = vtanh.pop %v3930
    %v3947 = vtanh.pop %v3931
    %v3948 = vtanh.pop %v3932
    %v3949 = vtanh.pop %v3933
    %v3950 = vtanh.pop %v3934
    %v3951 = vtanh.pop %v3935
    %v3952 = vtanh.pop %v3936
    %v3953 = vtanh.pop %v3937
    %v3954 = vtanh.pop %v3938
    %3955 = vmatprep.subr.mxu0 0.0
    %3956 = vmatpush1.msra.mxu0 %v320
    %3957 = vmatprep.subr.mxu0 0.0
    %3958 = vmatpush1.msra.mxu0 %v321
    %3959 = vmatprep.subr.mxu0 0.0
    %3960 = vmatpush1.msra.mxu0 %v322
    %3961 = vmatprep.subr.mxu0 0.0
    %3962 = vmatpush1.msra.mxu0 %v323
    %3963 = vmatprep.subr.mxu0 0.0
    %3964 = vmatpush1.msra.mxu0 %v324
    %3965 = vmatprep.subr.mxu0 0.0
    %3966 = vmatpush1.msra.mxu0 %v325
    %3967 = vmatprep.subr.mxu0 0.0
    %3968 = vmatpush1.msra.mxu0 %v326
    %3969 = vmatprep.subr.mxu0 0.0
    %3970 = vmatpush1.msra.mxu0 %v327
    %3971 = vmatprep.subr.mxu0 0.0
    %3972 = vmatpush1.msra.mxu0 %v328
    %3973 = vmatprep.subr.mxu0 0.0
    %3974 = vmatpush1.msra.mxu0 %v329
    %3975 = vmatprep.subr.mxu0 0.0
    %3976 = vmatpush1.msra.mxu0 %v330
    %3977 = vmatprep.subr.mxu0 0.0
    %3978 = vmatpush1.msra.mxu0 %v331
    %3979 = vmatprep.subr.mxu0 0.0
    %3980 = vmatpush1.msra.mxu0 %v332
    %3981 = vmatprep.subr.mxu0 0.0
    %3982 = vmatpush1.msra.mxu0 %v333
    %3983 = vmatprep.subr.mxu0 0.0
    %3984 = vmatpush1.msra.mxu0 %v334
    %3985 = vmatprep.subr.mxu0 0.0
    %3986 = vmatpush1.msra.mxu0 %v335
    %3987 = vmatprep.subr.mxu0 0.0
    %3988 = vmatpush1.msra.mxu0 0.0
    %3989 = vmatprep.subr.mxu0 0.0
    %3990 = vmatpush1.msra.mxu0 0.0
    %3991 = vmatprep.subr.mxu0 0.0
    %3992 = vmatpush1.msra.mxu0 0.0
    %3993 = vmatprep.subr.mxu0 0.0
    %3994 = vmatpush1.msra.mxu0 0.0
    %3995 = vmatprep.subr.mxu0 0.0
    %3996 = vmatpush1.msra.mxu0 0.0
    %3997 = vmatprep.subr.mxu0 0.0
    %3998 = vmatpush1.msra.mxu0 0.0
    %3999 = vmatprep.subr.mxu0 0.0
    %4000 = vmatpush1.msra.mxu0 0.0
    %4001 = vmatprep.subr.mxu0 0.0
    %4002 = vmatpush1.msra.mxu0 0.0
    %4003 = vmatprep.subr.mxu0 0.0
    %4004 = vmatpush1.msra.mxu0 0.0
    %4005 = vmatprep.subr.mxu0 0.0
    %4006 = vmatpush1.msra.mxu0 0.0
    %4007 = vmatprep.subr.mxu0 0.0
    %4008 = vmatpush1.msra.mxu0 0.0
    %4009 = vmatprep.subr.mxu0 0.0
    %4010 = vmatpush1.msra.mxu0 0.0
    %4011 = vmatprep.subr.mxu0 0.0
    %4012 = vmatpush1.msra.mxu0 0.0
    %4013 = vmatprep.subr.mxu0 0.0
    %4014 = vmatpush1.msra.mxu0 0.0
    %4015 = vmatprep.subr.mxu0 0.0
    %4016 = vmatpush1.msra.mxu0 0.0
    %4017 = vmatprep.subr.mxu0 0.0
    %4018 = vmatpush1.msra.mxu0 0.0
    %4019 = vmatprep.mubr.f32.mxu0 0.0
    %4020 = vmatmul.mubr.f32.gmra.mrb[0].mxu0 %v3745
    %v4021 = vpop.f32.mrb[0].mxu0
    %v4022 = vadd.f32 0.0, %v4021
    %v4023 = vpop.f32.mrb[0].mxu0
    %4024 = vmatprep.mubr.f32.mxu0 0.0
    %4025 = vmatmul.mubr.f32.gmra.mrb[0].mxu0 %v3746
    %v4026 = vpop.f32.mrb[0].mxu0
    %v4027 = vadd.f32 0.0, %v4026
    %v4028 = vpop.f32.mrb[0].mxu0
    %4029 = vmatprep.mubr.f32.mxu0 0.0
    %4030 = vmatmul.mubr.f32.gmra.mrb[0].mxu0 %v3747
    %v4031 = vpop.f32.mrb[0].mxu0
    %v4032 = vadd.f32 0.0, %v4031
    %v4033 = vpop.f32.mrb[0].mxu0
    %4034 = vmatprep.mubr.f32.mxu0 0.0
    %4035 = vmatmul.mubr.f32.gmra.mrb[0].mxu0 %v3748
    %v4036 = vpop.f32.mrb[0].mxu0
    %v4037 = vadd.f32 0.0, %v4036
    %v4038 = vpop.f32.mrb[0].mxu0
    %4039 = vmatprep.mubr.f32.mxu0 0.0
    %4040 = vmatmul.mubr.f32.gmra.mrb[0].mxu0 %v3749
    %v4041 = vpop.f32.mrb[0].mxu0
    %v4042 = vadd.f32 0.0, %v4041
    %v4043 = vpop.f32.mrb[0].mxu0
    %4044 = vmatprep.mubr.f32.mxu0 0.0
    %4045 = vmatmul.mubr.f32.gmra.mrb[0].mxu0 %v3750
    %v4046 = vpop.f32.mrb[0].mxu0
    %v4047 = vadd.f32 0.0, %v4046
    %v4048 = vpop.f32.mrb[0].mxu0
    %4049 = vmatprep.mubr.f32.mxu0 0.0
    %4050 = vmatmul.mubr.f32.gmra.mrb[0].mxu0 %v3751
    %v4051 = vpop.f32.mrb[0].mxu0
    %v4052 = vadd.f32 0.0, %v4051
    %v4053 = vpop.f32.mrb[0].mxu0
    %4054 = vmatprep.mubr.f32.mxu0 0.0
    %4055 = vmatmul.mubr.f32.gmra.mrb[0].mxu0 %v3752
    %v4056 = vpop.f32.mrb[0].mxu0
    %v4057 = vadd.f32 0.0, %v4056
    %v4058 = vpop.f32.mrb[0].mxu0
    %4059 = vmatprep.mubr.f32.mxu0 0.0
    %4060 = vmatmul.mubr.f32.gmra.mrb[0].mxu0 %v3753
    %v4061 = vpop.f32.mrb[0].mxu0
    %v4062 = vadd.f32 0.0, %v4061
    %v4063 = vpop.f32.mrb[0].mxu0
    %4064 = vmatprep.mubr.f32.mxu0 0.0
    %4065 = vmatmul.mubr.f32.gmra.mrb[0].mxu0 %v3754
    %v4066 = vpop.f32.mrb[0].mxu0
    %v4067 = vadd.f32 0.0, %v4066
    %v4068 = vpop.f32.mrb[0].mxu0
    %4069 = vmatprep.mubr.f32.mxu0 0.0
    %4070 = vmatmul.mubr.f32.gmra.mrb[0].mxu0 %v3755
    %v4071 = vpop.f32.mrb[0].mxu0
    %v4072 = vadd.f32 0.0, %v4071
    %v4073 = vpop.f32.mrb[0].mxu0
    %4074 = vmatprep.mubr.f32.mxu0 0.0
    %4075 = vmatmul.mubr.f32.gmra.mrb[0].mxu0 %v3756
    %v4076 = vpop.f32.mrb[0].mxu0
    %v4077 = vadd.f32 0.0, %v4076
    %v4078 = vpop.f32.mrb[0].mxu0
    %4079 = vmatprep.mubr.f32.mxu0 0.0
    %4080 = vmatmul.mubr.f32.gmra.mrb[0].mxu0 %v3757
    %v4081 = vpop.f32.mrb[0].mxu0
    %v4082 = vadd.f32 0.0, %v4081
    %v4083 = vpop.f32.mrb[0].mxu0
    %4084 = vmatprep.mubr.f32.mxu0 0.0
    %4085 = vmatmul.mubr.f32.gmra.mrb[0].mxu0 %v3758
    %v4086 = vpop.f32.mrb[0].mxu0
    %v4087 = vadd.f32 0.0, %v4086
    %v4088 = vpop.f32.mrb[0].mxu0
    %4089 = vmatprep.mubr.f32.mxu0 0.0
    %4090 = vmatmul.mubr.f32.gmra.mrb[0].mxu0 %v3759
    %v4091 = vpop.f32.mrb[0].mxu0
    %v4092 = vadd.f32 0.0, %v4091
    %v4093 = vpop.f32.mrb[0].mxu0
    %4094 = vmatprep.mubr.f32.mxu0 0.0
    %4095 = vmatmul.mubr.f32.gmra.mrb[0].mxu0 %v3760
    %v4096 = vpop.f32.mrb[0].mxu0
    %v4097 = vadd.f32 0.0, %v4096
    %v4098 = vpop.f32.mrb[0].mxu0
    %4099 = vdwg.mxu0
    %4100 = vmatprep.subr.mxu0 0.0
    %4101 = vmatpush1.msra.mxu0 %v304
    %4102 = vmatprep.subr.mxu0 0.0
    %4103 = vmatpush1.msra.mxu0 %v305
    %4104 = vmatprep.subr.mxu0 0.0
    %4105 = vmatpush1.msra.mxu0 %v306
    %4106 = vmatprep.subr.mxu0 0.0
    %4107 = vmatpush1.msra.mxu0 %v307
    %4108 = vmatprep.subr.mxu0 0.0
    %4109 = vmatpush1.msra.mxu0 %v308
    %4110 = vmatprep.subr.mxu0 0.0
    %4111 = vmatpush1.msra.mxu0 %v309
    %4112 = vmatprep.subr.mxu0 0.0
    %4113 = vmatpush1.msra.mxu0 %v310
    %4114 = vmatprep.subr.mxu0 0.0
    %4115 = vmatpush1.msra.mxu0 %v311
    %4116 = vmatprep.subr.mxu0 0.0
    %4117 = vmatpush1.msra.mxu0 %v312
    %4118 = vmatprep.subr.mxu0 0.0
    %4119 = vmatpush1.msra.mxu0 %v313
    %4120 = vmatprep.subr.mxu0 0.0
    %4121 = vmatpush1.msra.mxu0 %v314
    %4122 = vmatprep.subr.mxu0 0.0
    %4123 = vmatpush1.msra.mxu0 %v315
    %4124 = vmatprep.subr.mxu0 0.0
    %4125 = vmatpush1.msra.mxu0 %v316
    %4126 = vmatprep.subr.mxu0 0.0
    %4127 = vmatpush1.msra.mxu0 %v317
    %4128 = vmatprep.subr.mxu0 0.0
    %4129 = vmatpush1.msra.mxu0 %v318
    %4130 = vmatprep.subr.mxu0 0.0
    %4131 = vmatpush1.msra.mxu0 %v319
    %4132 = vmatprep.subr.mxu0 0.0
    %4133 = vmatpush1.msra.mxu0 0.0
    %4134 = vmatprep.subr.mxu0 0.0
    %4135 = vmatpush1.msra.mxu0 0.0
    %4136 = vmatprep.subr.mxu0 0.0
    %4137 = vmatpush1.msra.mxu0 0.0
    %4138 = vmatprep.subr.mxu0 0.0
    %4139 = vmatpush1.msra.mxu0 0.0
    %4140 = vmatprep.subr.mxu0 0.0
    %4141 = vmatpush1.msra.mxu0 0.0
    %4142 = vmatprep.subr.mxu0 0.0
    %4143 = vmatpush1.msra.mxu0 0.0
    %4144 = vmatprep.subr.mxu0 0.0
    %4145 = vmatpush1.msra.mxu0 0.0
    %4146 = vmatprep.subr.mxu0 0.0
    %4147 = vmatpush1.msra.mxu0 0.0
    %4148 = vmatprep.subr.mxu0 0.0
    %4149 = vmatpush1.msra.mxu0 0.0
    %4150 = vmatprep.subr.mxu0 0.0
    %4151 = vmatpush1.msra.mxu0 0.0
    %4152 = vmatprep.subr.mxu0 0.0
    %4153 = vmatpush1.msra.mxu0 0.0
    %4154 = vmatprep.subr.mxu0 0.0
    %4155 = vmatpush1.msra.mxu0 0.0
    %4156 = vmatprep.subr.mxu0 0.0
    %4157 = vmatpush1.msra.mxu0 0.0
    %4158 = vmatprep.subr.mxu0 0.0
    %4159 = vmatpush1.msra.mxu0 0.0
    %4160 = vmatprep.subr.mxu0 0.0
    %4161 = vmatpush1.msra.mxu0 0.0
    %4162 = vmatprep.subr.mxu0 0.0
    %4163 = vmatpush1.msra.mxu0 0.0
    %4164 = vmatprep.mubr.f32.mxu0 0.0
    %4165 = vmatmul.mubr.f32.gmra.mrb[0].mxu0 %v3939
    %v4166 = vpop.f32.mrb[0].mxu0
    %v4167 = vadd.f32 %v4022, %v4166
    %v4168 = vpop.f32.mrb[0].mxu0
    %4169 = vmatprep.mubr.f32.mxu0 0.0
    %4170 = vmatmul.mubr.f32.gmra.mrb[0].mxu0 %v3940
    %v4171 = vpop.f32.mrb[0].mxu0
    %v4172 = vadd.f32 %v4027, %v4171
    %v4173 = vpop.f32.mrb[0].mxu0
    %4174 = vmatprep.mubr.f32.mxu0 0.0
    %4175 = vmatmul.mubr.f32.gmra.mrb[0].mxu0 %v3941
    %v4176 = vpop.f32.mrb[0].mxu0
    %v4177 = vadd.f32 %v4032, %v4176
    %v4178 = vpop.f32.mrb[0].mxu0
    %4179 = vmatprep.mubr.f32.mxu0 0.0
    %4180 = vmatmul.mubr.f32.gmra.mrb[0].mxu0 %v3942
    %v4181 = vpop.f32.mrb[0].mxu0
    %v4182 = vadd.f32 %v4037, %v4181
    %v4183 = vpop.f32.mrb[0].mxu0
    %4184 = vmatprep.mubr.f32.mxu0 0.0
    %4185 = vmatmul.mubr.f32.gmra.mrb[0].mxu0 %v3943
    %v4186 = vpop.f32.mrb[0].mxu0
    %v4187 = vadd.f32 %v4042, %v4186
    %v4188 = vpop.f32.mrb[0].mxu0
    %4189 = vmatprep.mubr.f32.mxu0 0.0
    %4190 = vmatmul.mubr.f32.gmra.mrb[0].mxu0 %v3944
    %v4191 = vpop.f32.mrb[0].mxu0
    %v4192 = vadd.f32 %v4047, %v4191
    %v4193 = vpop.f32.mrb[0].mxu0
    %4194 = vmatprep.mubr.f32.mxu0 0.0
    %4195 = vmatmul.mubr.f32.gmra.mrb[0].mxu0 %v3945
    %v4196 = vpop.f32.mrb[0].mxu0
    %v4197 = vadd.f32 %v4052, %v4196
    %v4198 = vpop.f32.mrb[0].mxu0
    %4199 = vmatprep.mubr.f32.mxu0 0.0
    %4200 = vmatmul.mubr.f32.gmra.mrb[0].mxu0 %v3946
    %v4201 = vpop.f32.mrb[0].mxu0
    %v4202 = vadd.f32 %v4057, %v4201
    %v4203 = vpop.f32.mrb[0].mxu0
    %4204 = vmatprep.mubr.f32.mxu0 0.0
    %4205 = vmatmul.mubr.f32.gmra.mrb[0].mxu0 %v3947
    %v4206 = vpop.f32.mrb[0].mxu0
    %v4207 = vadd.f32 %v4062, %v4206
    %v4208 = vpop.f32.mrb[0].mxu0
    %4209 = vmatprep.mubr.f32.mxu0 0.0
    %4210 = vmatmul.mubr.f32.gmra.mrb[0].mxu0 %v3948
    %v4211 = vpop.f32.mrb[0].mxu0
    %v4212 = vadd.f32 %v4067, %v4211
    %v4213 = vpop.f32.mrb[0].mxu0
    %4214 = vmatprep.mubr.f32.mxu0 0.0
    %4215 = vmatmul.mubr.f32.gmra.mrb[0].mxu0 %v3949
    %v4216 = vpop.f32.mrb[0].mxu0
    %v4217 = vadd.f32 %v4072, %v4216
    %v4218 = vpop.f32.mrb[0].mxu0
    %4219 = vmatprep.mubr.f32.mxu0 0.0
    %4220 = vmatmul.mubr.f32.gmra.mrb[0].mxu0 %v3950
    %v4221 = vpop.f32.mrb[0].mxu0
    %v4222 = vadd.f32 %v4077, %v4221
    %v4223 = vpop.f32.mrb[0].mxu0
    %4224 = vmatprep.mubr.f32.mxu0 0.0
    %4225 = vmatmul.mubr.f32.gmra.mrb[0].mxu0 %v3951
    %v4226 = vpop.f32.mrb[0].mxu0
    %v4227 = vadd.f32 %v4082, %v4226
    %v4228 = vpop.f32.mrb[0].mxu0
    %4229 = vmatprep.mubr.f32.mxu0 0.0
    %4230 = vmatmul.mubr.f32.gmra.mrb[0].mxu0 %v3952
    %v4231 = vpop.f32.mrb[0].mxu0
    %v4232 = vadd.f32 %v4087, %v4231
    %v4233 = vpop.f32.mrb[0].mxu0
    %4234 = vmatprep.mubr.f32.mxu0 0.0
    %4235 = vmatmul.mubr.f32.gmra.mrb[0].mxu0 %v3953
    %v4236 = vpop.f32.mrb[0].mxu0
    %v4237 = vadd.f32 %v4092, %v4236
    %v4238 = vpop.f32.mrb[0].mxu0
    %4239 = vmatprep.mubr.f32.mxu0 0.0
    %4240 = vmatmul.mubr.f32.gmra.mrb[0].mxu0 %v3954
    %v4241 = vpop.f32.mrb[0].mxu0
    %v4242 = vadd.f32 %v4097, %v4241
    %v4243 = vpop.f32.mrb[0].mxu0
    %4244 = vdwg.mxu0
    %v4245 = vadd.f32 %v4167, %v631
    %v4246 = vadd.f32 %v4172, %v631
    %v4247 = vadd.f32 %v4177, %v631
    %v4248 = vadd.f32 %v4182, %v631
    %v4249 = vadd.f32 %v4187, %v631
    %v4250 = vadd.f32 %v4192, %v631
    %v4251 = vadd.f32 %v4197, %v631
    %v4252 = vadd.f32 %v4202, %v631
    %v4253 = vadd.f32 %v4207, %v631
    %v4254 = vadd.f32 %v4212, %v631
    %v4255 = vadd.f32 %v4217, %v631
    %v4256 = vadd.f32 %v4222, %v631
    %v4257 = vadd.f32 %v4227, %v631
    %v4258 = vadd.f32 %v4232, %v631
    %v4259 = vadd.f32 %v4237, %v631
    %v4260 = vadd.f32 %v4242, %v631
    %v4261 = vtanh.pop %v4245
    %v4262 = vtanh.pop %v4246
    %v4263 = vtanh.pop %v4247
    %v4264 = vtanh.pop %v4248
    %v4265 = vtanh.pop %v4249
    %v4266 = vtanh.pop %v4250
    %v4267 = vtanh.pop %v4251
    %v4268 = vtanh.pop %v4252
    %v4269 = vtanh.pop %v4253
    %v4270 = vtanh.pop %v4254
    %v4271 = vtanh.pop %v4255
    %v4272 = vtanh.pop %v4256
    %v4273 = vtanh.pop %v4257
    %v4274 = vtanh.pop %v4258
    %v4275 = vtanh.pop %v4259
    %v4276 = vtanh.pop %v4260
    %v4277 = vld [vmem:[#allocation10] sm:$0xff]
    %v4278 = vld [vmem:[#allocation10 + $0x8] sm:$0xff]
    %v4279 = vld [vmem:[#allocation10 + $0x10] sm:$0xff]
    %v4280 = vld [vmem:[#allocation10 + $0x18] sm:$0xff]
    %v4281 = vld [vmem:[#allocation10 + $0x20] sm:$0xff]
    %v4282 = vld [vmem:[#allocation10 + $0x28] sm:$0xff]
    %v4283 = vld [vmem:[#allocation10 + $0x30] sm:$0xff]
    %v4284 = vld [vmem:[#allocation10 + $0x38] sm:$0xff]
    %v4285 = vld [vmem:[#allocation10 + $0x40] sm:$0xff]
    %v4286 = vld [vmem:[#allocation10 + $0x48] sm:$0xff]
    %v4287 = vld [vmem:[#allocation10 + $0x50] sm:$0xff]
    %v4288 = vld [vmem:[#allocation10 + $0x58] sm:$0xff]
    %v4289 = vld [vmem:[#allocation10 + $0x60] sm:$0xff]
    %v4290 = vld [vmem:[#allocation10 + $0x68] sm:$0xff]
    %v4291 = vld [vmem:[#allocation10 + $0x70] sm:$0xff]
    %v4292 = vld [vmem:[#allocation10 + $0x78] sm:$0xff]
    %v4293 = vld [vmem:[%s6] sm:$0x1]
    %v4295 = vlaneseq
    %v4296 = vshrl.u32 %v4295, 7
    %v4297 = vsub.s32 0, %v4296
    %v4298 = vrot.slane %v4293, %v4297
    %4300 = vmatprep.subr.mxu0 0.0
    %4301 = vmatpush1.msra.mxu0 %v4277
    %4302 = vmatprep.subr.mxu0 0.0
    %4303 = vmatpush1.msra.mxu0 %v4278
    %4304 = vmatprep.subr.mxu0 0.0
    %4305 = vmatpush1.msra.mxu0 %v4279
    %4306 = vmatprep.subr.mxu0 0.0
    %4307 = vmatpush1.msra.mxu0 %v4280
    %4308 = vmatprep.subr.mxu0 0.0
    %4309 = vmatpush1.msra.mxu0 %v4281
    %4310 = vmatprep.subr.mxu0 0.0
    %4311 = vmatpush1.msra.mxu0 %v4282
    %4312 = vmatprep.subr.mxu0 0.0
    %4313 = vmatpush1.msra.mxu0 %v4283
    %4314 = vmatprep.subr.mxu0 0.0
    %4315 = vmatpush1.msra.mxu0 %v4284
    %4316 = vmatprep.subr.mxu0 0.0
    %4317 = vmatpush1.msra.mxu0 %v4285
    %4318 = vmatprep.subr.mxu0 0.0
    %4319 = vmatpush1.msra.mxu0 %v4286
    %4320 = vmatprep.subr.mxu0 0.0
    %4321 = vmatpush1.msra.mxu0 %v4287
    %4322 = vmatprep.subr.mxu0 0.0
    %4323 = vmatpush1.msra.mxu0 %v4288
    %4324 = vmatprep.subr.mxu0 0.0
    %4325 = vmatpush1.msra.mxu0 %v4289
    %4326 = vmatprep.subr.mxu0 0.0
    %4327 = vmatpush1.msra.mxu0 %v4290
    %4328 = vmatprep.subr.mxu0 0.0
    %4329 = vmatpush1.msra.mxu0 %v4291
    %4330 = vmatprep.subr.mxu0 0.0
    %4331 = vmatpush1.msra.mxu0 %v4292
    %4332 = vmatprep.subr.mxu0 0.0
    %4333 = vmatpush1.msra.mxu0 0.0
    %4334 = vmatprep.subr.mxu0 0.0
    %4335 = vmatpush1.msra.mxu0 0.0
    %4336 = vmatprep.subr.mxu0 0.0
    %4337 = vmatpush1.msra.mxu0 0.0
    %4338 = vmatprep.subr.mxu0 0.0
    %4339 = vmatpush1.msra.mxu0 0.0
    %4340 = vmatprep.subr.mxu0 0.0
    %4341 = vmatpush1.msra.mxu0 0.0
    %4342 = vmatprep.subr.mxu0 0.0
    %4343 = vmatpush1.msra.mxu0 0.0
    %4344 = vmatprep.subr.mxu0 0.0
    %4345 = vmatpush1.msra.mxu0 0.0
    %4346 = vmatprep.subr.mxu0 0.0
    %4347 = vmatpush1.msra.mxu0 0.0
    %4348 = vmatprep.subr.mxu0 0.0
    %4349 = vmatpush1.msra.mxu0 0.0
    %4350 = vmatprep.subr.mxu0 0.0
    %4351 = vmatpush1.msra.mxu0 0.0
    %4352 = vmatprep.subr.mxu0 0.0
    %4353 = vmatpush1.msra.mxu0 0.0
    %4354 = vmatprep.subr.mxu0 0.0
    %4355 = vmatpush1.msra.mxu0 0.0
    %4356 = vmatprep.subr.mxu0 0.0
    %4357 = vmatpush1.msra.mxu0 0.0
    %4358 = vmatprep.subr.mxu0 0.0
    %4359 = vmatpush1.msra.mxu0 0.0
    %4360 = vmatprep.subr.mxu0 0.0
    %4361 = vmatpush1.msra.mxu0 0.0
    %4362 = vmatprep.subr.mxu0 0.0
    %4363 = vmatpush1.msra.mxu0 0.0
    %4364 = vmatprep.mubr.f32.mxu0 0.0
    %4365 = vmatmul.mubr.f32.gmra.mrb[0].mxu0 %v4261
    %v4366 = vpop.f32.mrb[0].mxu0
    %v4367 = vadd.f32 %v4298, %v4366
    %v4368 = vpop.f32.mrb[0].mxu0
    %4369 = vmatprep.mubr.f32.mxu0 0.0
    %4370 = vmatmul.mubr.f32.gmra.mrb[0].mxu0 %v4262
    %v4371 = vpop.f32.mrb[0].mxu0
    %v4372 = vadd.f32 %v4298, %v4371
    %v4373 = vpop.f32.mrb[0].mxu0
    %4374 = vmatprep.mubr.f32.mxu0 0.0
    %4375 = vmatmul.mubr.f32.gmra.mrb[0].mxu0 %v4263
    %v4376 = vpop.f32.mrb[0].mxu0
    %v4377 = vadd.f32 %v4298, %v4376
    %v4378 = vpop.f32.mrb[0].mxu0
    %4379 = vmatprep.mubr.f32.mxu0 0.0
    %4380 = vmatmul.mubr.f32.gmra.mrb[0].mxu0 %v4264
    %v4381 = vpop.f32.mrb[0].mxu0
    %v4382 = vadd.f32 %v4298, %v4381
    %v4383 = vpop.f32.mrb[0].mxu0
    %4384 = vmatprep.mubr.f32.mxu0 0.0
    %4385 = vmatmul.mubr.f32.gmra.mrb[0].mxu0 %v4265
    %v4386 = vpop.f32.mrb[0].mxu0
    %v4387 = vadd.f32 %v4298, %v4386
    %v4388 = vpop.f32.mrb[0].mxu0
    %4389 = vmatprep.mubr.f32.mxu0 0.0
    %4390 = vmatmul.mubr.f32.gmra.mrb[0].mxu0 %v4266
    %v4391 = vpop.f32.mrb[0].mxu0
    %v4392 = vadd.f32 %v4298, %v4391
    %v4393 = vpop.f32.mrb[0].mxu0
    %4394 = vmatprep.mubr.f32.mxu0 0.0
    %4395 = vmatmul.mubr.f32.gmra.mrb[0].mxu0 %v4267
    %v4396 = vpop.f32.mrb[0].mxu0
    %v4397 = vadd.f32 %v4298, %v4396
    %v4398 = vpop.f32.mrb[0].mxu0
    %4399 = vmatprep.mubr.f32.mxu0 0.0
    %4400 = vmatmul.mubr.f32.gmra.mrb[0].mxu0 %v4268
    %v4401 = vpop.f32.mrb[0].mxu0
    %v4402 = vadd.f32 %v4298, %v4401
    %v4403 = vpop.f32.mrb[0].mxu0
    %4404 = vmatprep.mubr.f32.mxu0 0.0
    %4405 = vmatmul.mubr.f32.gmra.mrb[0].mxu0 %v4269
    %v4406 = vpop.f32.mrb[0].mxu0
    %v4407 = vadd.f32 %v4298, %v4406
    %v4408 = vpop.f32.mrb[0].mxu0
    %4409 = vmatprep.mubr.f32.mxu0 0.0
    %4410 = vmatmul.mubr.f32.gmra.mrb[0].mxu0 %v4270
    %v4411 = vpop.f32.mrb[0].mxu0
    %v4412 = vadd.f32 %v4298, %v4411
    %v4413 = vpop.f32.mrb[0].mxu0
    %4414 = vmatprep.mubr.f32.mxu0 0.0
    %4415 = vmatmul.mubr.f32.gmra.mrb[0].mxu0 %v4271
    %v4416 = vpop.f32.mrb[0].mxu0
    %v4417 = vadd.f32 %v4298, %v4416
    %v4418 = vpop.f32.mrb[0].mxu0
    %4419 = vmatprep.mubr.f32.mxu0 0.0
    %4420 = vmatmul.mubr.f32.gmra.mrb[0].mxu0 %v4272
    %v4421 = vpop.f32.mrb[0].mxu0
    %v4422 = vadd.f32 %v4298, %v4421
    %v4423 = vpop.f32.mrb[0].mxu0
    %4424 = vmatprep.mubr.f32.mxu0 0.0
    %4425 = vmatmul.mubr.f32.gmra.mrb[0].mxu0 %v4273
    %v4426 = vpop.f32.mrb[0].mxu0
    %v4427 = vadd.f32 %v4298, %v4426
    %v4428 = vpop.f32.mrb[0].mxu0
    %4429 = vmatprep.mubr.f32.mxu0 0.0
    %4430 = vmatmul.mubr.f32.gmra.mrb[0].mxu0 %v4274
    %v4431 = vpop.f32.mrb[0].mxu0
    %v4432 = vadd.f32 %v4298, %v4431
    %v4433 = vpop.f32.mrb[0].mxu0
    %4434 = vmatprep.mubr.f32.mxu0 0.0
    %4435 = vmatmul.mubr.f32.gmra.mrb[0].mxu0 %v4275
    %v4436 = vpop.f32.mrb[0].mxu0
    %v4437 = vadd.f32 %v4298, %v4436
    %v4438 = vpop.f32.mrb[0].mxu0
    %4439 = vmatprep.mubr.f32.mxu0 0.0
    %4440 = vmatmul.mubr.f32.gmra.mrb[0].mxu0 %v4276
    %v4441 = vpop.f32.mrb[0].mxu0
    %v4442 = vadd.f32 %v4298, %v4441
    %v4443 = vpop.f32.mrb[0].mxu0
    %4444 = vdwg.mxu0
    %4445 = vst [vmem:[#allocation11] sm:$0xff] %v4367
    %4446 = vst [vmem:[#allocation11 + $0x8] sm:$0xff] %v4372
    %4447 = vst [vmem:[#allocation11 + $0x10] sm:$0xff] %v4377
    %4448 = vst [vmem:[#allocation11 + $0x18] sm:$0xff] %v4382
    %4449 = vst [vmem:[#allocation11 + $0x20] sm:$0xff] %v4387
    %4450 = vst [vmem:[#allocation11 + $0x28] sm:$0xff] %v4392
    %4451 = vst [vmem:[#allocation11 + $0x30] sm:$0xff] %v4397
    %4452 = vst [vmem:[#allocation11 + $0x38] sm:$0xff] %v4402
    %4453 = vst [vmem:[#allocation11 + $0x40] sm:$0xff] %v4407
    %4454 = vst [vmem:[#allocation11 + $0x48] sm:$0xff] %v4412
    %4455 = vst [vmem:[#allocation11 + $0x50] sm:$0xff] %v4417
    %4456 = vst [vmem:[#allocation11 + $0x58] sm:$0xff] %v4422
    %4457 = vst [vmem:[#allocation11 + $0x60] sm:$0xff] %v4427
    %4458 = vst [vmem:[#allocation11 + $0x68] sm:$0xff] %v4432
    %4459 = vst [vmem:[#allocation11 + $0x70] sm:$0xff] %v4437
    %4460 = vst [vmem:[#allocation11 + $0x78] sm:$0xff] %v4442
    // Predicated region
    $region50: #{tpu_custom_call.1} parent=1 // pred_check
      _
    $region51: #{tpu_custom_call.1} parent=1 // pred_check_branch
      %4462 = sbr.rel (0) target = $region53
    $region52: #{tpu_custom_call.1} parent=1 // pred_region
      %s4464 = ssub.s32 2048, 2048
      %4465 = vsyncadd [#allocation4], %s4464
      %s4466 = sshll.u32 [#allocation11], 4
      %s4467 = int_to_ptr.vmem [resolvable:$true] %s4466
      %4472 = dma.vmem_to_hbm [thread:$0]  %s4467, 2048, %s7, [#allocation4], 128, 128, 8
    $region53: #{tpu_custom_call.1} parent=1 // pred_fallthru
      _
    // Predicated region
    $region54: #{tpu_custom_call.1} parent=1 // pred_check
      _
    $region55: #{tpu_custom_call.1} parent=1 // pred_check_branch
      %4474 = sbr.rel (0) target = $region57
    $region56: #{tpu_custom_call.1} parent=1 // pred_region
      %4475 = dma.done [#allocation4], 2048
    $region57: #{tpu_custom_call.1} parent=1 // pred_fallthru
      _
    %4476 = vsyncpa [#allocation3], 1
    %4477 = vsyncpa [#allocation6], 1
    %4478 = vsyncpa [#allocation9], 1
    %4479 = vsyncpa [#allocation4], 1

</llo_original>
